<compile_context>
chip_gen: v6e
topology: v6e:2x2x1
jax: 0.10.0
libtpu: 0.0.40
codegen_flags: <defaults>
</compile_context>

<pallas_src>
import functools
import math

import numpy as np

import jax
import jax.numpy as jnp
from jax.experimental import pallas as pl
from jax.experimental.pallas import tpu as pltpu

# ---------------- small synthetic config (ViT-B/16 structure, tiny sizes) ----
BATCH = 2
IN_CH = 3
IMG = 32
PATCH = 16
N_PATCH = (IMG // PATCH) ** 2          # 4 patches
SEQ = N_PATCH + 1                      # 5 real tokens (class token + patches)
SEQP = 8                               # tokens per image padded to a sublane tile
HIDDEN = 32
HEADS = 4
HEAD_DIM = HIDDEN // HEADS             # 8
MLP_DIM = 64
LAYERS = 2
NUM_CLASSES = 8
OUT_PAD = 128                          # lane-dense classifier / blob width
KDIM = IN_CH * PATCH * PATCH           # 768 (im2col contraction dim)
LN_EPS_ENC = 1e-6                      # torchvision ViT encoder LayerNorm eps
LN_EPS_HEAD = 1e-5                     # nn.LayerNorm default eps (custom head)
DTYPE = jnp.float32
MXU_DTYPE = jnp.bfloat16               # operand dtype for matmuls (f32 acc)

# ---------------- bf16 weight-blob row layout (width = OUT_PAD lanes) --------
W_CONV = 0                                   # conv_w: KDIM rows x HIDDEN
W_L0 = KDIM                                  # first encoder layer base
W_QKV = 0                                    # qkv_w : HIDDEN rows x 3*HIDDEN
W_MLP1 = HIDDEN                              # mlp1_w: HIDDEN rows x MLP_DIM
W_MLP2 = 2 * HIDDEN                          # mlp2_w: MLP_DIM rows x HIDDEN
W_OUT = 2 * HIDDEN + MLP_DIM                 # out_w : HIDDEN rows x HIDDEN
WPL = 2 * HIDDEN + MLP_DIM + HIDDEN          # 160 rows per layer
W_HEAD = KDIM + LAYERS * WPL                 # head_w: HIDDEN rows x OUT_PAD
WBLOB_ROWS = W_HEAD + HIDDEN                 # 1120 (multiple of 16)

# ---------------- f32 param-blob row layout (width = OUT_PAD lanes) ----------
PPL = 8
P_LN1G, P_LN1B, P_QKVB, P_OUTB, P_LN2G, P_LN2B, P_M1B, P_M2B = range(PPL)
P_FIN = LAYERS * PPL
P_LNFG, P_LNFB, P_HLNG, P_HLNB, P_HEADB = (P_FIN + k for k in range(5))
P_ADDMAT = ((P_FIN + 5 + 7) // 8) * 8        # 8-aligned start of addmat rows


# ------------------------------ in-kernel helpers ----------------------------
def _mm(a, b):
    """2-D matmul with f32 accumulation on the MXU."""
    return jax.lax.dot_general(a, b, (((1,), (0,)), ((), ())),
                               preferred_element_type=jnp.float32)


def _mm_nt(a, b):
    """a @ b.T with f32 accumulation (contraction on the last dim of both)."""
    return jax.lax.dot_general(a, b, (((1,), (1,)), ((), ())),
                               preferred_element_type=jnp.float32)


def _layernorm(x, g, b, eps):
    xf = x.astype(jnp.float32)
    mu = jnp.mean(xf, axis=-1, keepdims=True)
    xc = xf - mu
    var = jnp.mean(xc * xc, axis=-1, keepdims=True)
    return xc * jax.lax.rsqrt(var + eps) * g + b


def _gelu_tanh(x):
    # tanh-form GELU: transcendental lands on the EUP slot (nearly free).
    c = math.sqrt(2.0 / math.pi)
    return 0.5 * x * (1.0 + jnp.tanh(c * (x + 0.044715 * (x * x * x))))


# ------------------------------ fused ViT kernel -----------------------------
def _vit_kernel(n_img, patches_ref, w_ref, p_ref, mask_ref, out_ref):
    ntok = n_img * SEQP                       # token rows processed this step
    scale = 1.0 / math.sqrt(HEAD_DIM)

    # ---- patch embedding -------------------------------------------------
    # Token rows per image: [cls (zero patch row), N_PATCH patches, pad rows].
    # class_token / pos_emb / conv_bias are folded into the addmat rows.
    p2d = patches_ref[0]                                       # (ntok, KDIM) bf16
    conv_w = w_ref[W_CONV:W_CONV + KDIM, 0:HIDDEN]             # bf16
    addmat = p_ref[P_ADDMAT:P_ADDMAT + ntok, 0:HIDDEN]         # f32
    x = _mm(p2d, conv_w) + addmat                              # (ntok, HIDDEN) f32

    mask = mask_ref[...]                                       # (nstk, nstk) additive

    for l in range(LAYERS):
        wl = W_L0 + l * WPL
        pb = l * PPL
        ln1_g = p_ref[pb + P_LN1G: pb + P_LN1G + 1, 0:HIDDEN]
        ln1_b = p_ref[pb + P_LN1B: pb + P_LN1B + 1, 0:HIDDEN]
        qkv_b = p_ref[pb + P_QKVB: pb + P_QKVB + 1, 0:3 * HIDDEN]
        out_b = p_ref[pb + P_OUTB: pb + P_OUTB + 1, 0:HIDDEN]
        ln2_g = p_ref[pb + P_LN2G: pb + P_LN2G + 1, 0:HIDDEN]
        ln2_b = p_ref[pb + P_LN2B: pb + P_LN2B + 1, 0:HIDDEN]
        m1_b = p_ref[pb + P_M1B: pb + P_M1B + 1, 0:MLP_DIM]
        m2_b = p_ref[pb + P_M2B: pb + P_M2B + 1, 0:HIDDEN]

        # ---- self-attention (pre-LN, head-stacked scores / PV) ----------
        h1 = _layernorm(x, ln1_g, ln1_b, LN_EPS_ENC)
        qkv = _mm(h1.astype(MXU_DTYPE),
                  w_ref[wl + W_QKV: wl + W_QKV + HIDDEN, 0:3 * HIDDEN]) + qkv_b

        # Stack per-head lane slices along sublanes (f32, 8-row aligned
        # pieces) -> one scores matmul + one softmax + one PV matmul.
        q_stk = jnp.concatenate(
            [qkv[:, h * HEAD_DIM:(h + 1) * HEAD_DIM] for h in range(HEADS)], axis=0)
        k_stk = jnp.concatenate(
            [qkv[:, HIDDEN + h * HEAD_DIM: HIDDEN + (h + 1) * HEAD_DIM]
             for h in range(HEADS)], axis=0)
        v_stk = jnp.concatenate(
            [qkv[:, 2 * HIDDEN + h * HEAD_DIM: 2 * HIDDEN + (h + 1) * HEAD_DIM]
             for h in range(HEADS)], axis=0)                   # (HEADS*ntok, HEAD_DIM)

        s = _mm_nt(q_stk.astype(MXU_DTYPE), k_stk.astype(MXU_DTYPE)) * scale + mask
        s = s - jnp.max(s, axis=-1, keepdims=True)
        e = jnp.exp(s)
        pattn = e * pl.reciprocal(jnp.sum(e, axis=-1, keepdims=True), approx=True)
        o_stk = _mm(pattn.astype(MXU_DTYPE), v_stk.astype(MXU_DTYPE))  # (HEADS*ntok, HD)

        # per-head output-projection accumulation (no head re-concat needed)
        acc = None
        for h in range(HEADS):
            o_h = o_stk[h * ntok:(h + 1) * ntok, :]
            w_h = w_ref[wl + W_OUT + h * HEAD_DIM:
                        wl + W_OUT + (h + 1) * HEAD_DIM, 0:HIDDEN]
            c = _mm(o_h.astype(MXU_DTYPE), w_h)
            acc = c if acc is None else acc + c
        x = x + acc + out_b                                    # residual + bias

        # ---- MLP block (pre-LN, GELU, residual) -------------------------
        h2 = _layernorm(x, ln2_g, ln2_b, LN_EPS_ENC)
        h2 = _mm(h2.astype(MXU_DTYPE),
                 w_ref[wl + W_MLP1: wl + W_MLP1 + HIDDEN, 0:MLP_DIM]) + m1_b
        h2 = _gelu_tanh(h2)
        h2 = _mm(h2.astype(MXU_DTYPE),
                 w_ref[wl + W_MLP2: wl + W_MLP2 + MLP_DIM, 0:HIDDEN]) + m2_b
        x = x + h2

    # ---- final encoder LN (cls rows only) + custom head (LN + Linear) ----
    lnf_g = p_ref[P_LNFG:P_LNFG + 1, 0:HIDDEN]
    lnf_b = p_ref[P_LNFB:P_LNFB + 1, 0:HIDDEN]
    hln_g = p_ref[P_HLNG:P_HLNG + 1, 0:HIDDEN]
    hln_b = p_ref[P_HLNB:P_HLNB + 1, 0:HIDDEN]
    head_b = p_ref[P_HEADB:P_HEADB + 1, 0:OUT_PAD]
    head_w = w_ref[W_HEAD:W_HEAD + HIDDEN, 0:OUT_PAD]
    for i in range(n_img):
        cls = x[i * SEQP:i * SEQP + 1, :]                      # (1, HIDDEN)
        cls = _layernorm(cls, lnf_g, lnf_b, LN_EPS_ENC)
        cls = _layernorm(cls, hln_g, hln_b, LN_EPS_HEAD)
        logits = _mm(cls.astype(MXU_DTYPE), head_w) + head_b   # (1, OUT_PAD)
        out_ref[0, i:i + 1, :] = logits.astype(out_ref.dtype)


# ------------------------------- parameters ----------------------------------
def init_params(key):
    keys = iter(jax.random.split(key, 64))

    def nrm(shape, scale=0.02):
        return (scale * jax.random.normal(next(keys), shape, dtype=jnp.float32)).astype(DTYPE)

    params = {
        # conv_proj (Conv2d 3->HIDDEN, kernel=stride=PATCH) as im2col matmul weight
        "conv_w": nrm((KDIM, HIDDEN)),
        "conv_b": nrm((HIDDEN,)),
        "class_token": nrm((1, 1, HIDDEN)),
        "pos_emb": nrm((1, SEQ, HIDDEN)),
        "lnf_g": jnp.ones((HIDDEN,), DTYPE),
        "lnf_b": jnp.zeros((HIDDEN,), DTYPE),
        # custom head: LayerNorm + Linear(HIDDEN, NUM_CLASSES)
        "hln_g": jnp.ones((HIDDEN,), DTYPE),
        "hln_b": jnp.zeros((HIDDEN,), DTYPE),
        "head_w": nrm((HIDDEN, NUM_CLASSES)),
        "head_b": jnp.zeros((NUM_CLASSES,), DTYPE),
        "layers": [],
    }
    for _ in range(LAYERS):
        params["layers"].append({
            "ln1_g": jnp.ones((HIDDEN,), DTYPE), "ln1_b": jnp.zeros((HIDDEN,), DTYPE),
            "qkv_w": nrm((HIDDEN, 3 * HIDDEN)), "qkv_b": nrm((3 * HIDDEN,)),
            "out_w": nrm((HIDDEN, HIDDEN)), "out_b": nrm((HIDDEN,)),
            "ln2_g": jnp.ones((HIDDEN,), DTYPE), "ln2_b": jnp.zeros((HIDDEN,), DTYPE),
            "mlp1_w": nrm((HIDDEN, MLP_DIM)), "mlp1_b": nrm((MLP_DIM,)),
            "mlp2_w": nrm((MLP_DIM, HIDDEN)), "mlp2_b": nrm((HIDDEN,)),
        })
    return params


# ------------------------------ wrapper helpers -------------------------------
def _images_per_grid_step(batch):
    """One image per grid step only on multi-TensorCore chips (v7x); on
    single-TC v5e/v6e the whole batch is sublane-stacked into one step."""
    try:
        kind = jax.devices()[0].device_kind.lower()
    except Exception:
        kind = ""
    if "v7" in kind and batch > 1:
        return 1
    return batch


def _pack_weight_blob(params):
    """bf16 blob holding all matmul weights (128-lane wide, 8-aligned rows)."""
    wb = jnp.zeros((WBLOB_ROWS, OUT_PAD), MXU_DTYPE)
    wb = wb.at[W_CONV:W_CONV + KDIM, :HIDDEN].set(params["conv_w"].astype(MXU_DTYPE))
    for l, lp in enumerate(params["layers"]):
        base = W_L0 + l * WPL
        wb = wb.at[base + W_QKV:base + W_QKV + HIDDEN, :3 * HIDDEN].set(
            lp["qkv_w"].astype(MXU_DTYPE))
        wb = wb.at[base + W_MLP1:base + W_MLP1 + HIDDEN, :MLP_DIM].set(
            lp["mlp1_w"].astype(MXU_DTYPE))
        wb = wb.at[base + W_MLP2:base + W_MLP2 + MLP_DIM, :HIDDEN].set(
            lp["mlp2_w"].astype(MXU_DTYPE))
        wb = wb.at[base + W_OUT:base + W_OUT + HIDDEN, :HIDDEN].set(
            lp["out_w"].astype(MXU_DTYPE))
    wb = wb.at[W_HEAD:W_HEAD + HIDDEN, :NUM_CLASSES].set(
        params["head_w"].astype(MXU_DTYPE))                 # lane-padded to 128
    return wb


def _pack_param_blob(params, n_img):
    """f32 blob: LN gammas/betas, biases, head bias, folded add-matrix."""
    rows = ((P_ADDMAT + n_img * SEQP + 7) // 8) * 8
    blob = jnp.zeros((rows, OUT_PAD), DTYPE)

    def row(b, r, vec):
        v = vec.reshape(1, -1).astype(DTYPE)
        return b.at[r:r + 1, :v.shape[1]].set(v)

    for l, lp in enumerate(params["layers"]):
        base = l * PPL
        blob = row(blob, base + P_LN1G, lp["ln1_g"])
        blob = row(blob, base + P_LN1B, lp["ln1_b"])
        blob = row(blob, base + P_QKVB, lp["qkv_b"])
        blob = row(blob, base + P_OUTB, lp["out_b"])
        blob = row(blob, base + P_LN2G, lp["ln2_g"])
        blob = row(blob, base + P_LN2B, lp["ln2_b"])
        blob = row(blob, base + P_M1B, lp["mlp1_b"])
        blob = row(blob, base + P_M2B, lp["mlp2_b"])
    blob = row(blob, P_LNFG, params["lnf_g"])
    blob = row(blob, P_LNFB, params["lnf_b"])
    blob = row(blob, P_HLNG, params["hln_g"])
    blob = row(blob, P_HLNB, params["hln_b"])
    blob = row(blob, P_HEADB, params["head_b"])              # lane-padded to 128

    # fold class token + positional embedding + conv bias into one add-matrix
    pos = params["pos_emb"][0]                               # (SEQ, HIDDEN)
    add_mat = jnp.concatenate(
        [params["class_token"].reshape(1, HIDDEN) + pos[0:1, :],
         pos[1:, :] + params["conv_b"].reshape(1, HIDDEN)], axis=0)
    add_block = jnp.zeros((SEQP, HIDDEN), DTYPE).at[:SEQ, :].set(add_mat)
    blob = blob.at[P_ADDMAT:P_ADDMAT + n_img * SEQP, :HIDDEN].set(
        jnp.tile(add_block, (n_img, 1)))
    return blob


def _attn_mask(n_img):
    """Additive mask for the head/batch-stacked scores: attend only within the
    same (image, head) block and only to real (non-padding) key tokens."""
    ntok = n_img * SEQP
    r = np.arange(HEADS * ntok)
    head = r // ntok
    img = (r % ntok) // SEQP
    tok = r % SEQP
    same = (head[:, None] == head[None, :]) & (img[:, None] == img[None, :])
    valid = same & (tok[None, :] < SEQ)
    return jnp.asarray(np.where(valid, 0.0, -1e30), dtype=DTYPE)


# -------------------------------- forward ------------------------------------
def vit_forward(x, params):
    """x: (B, C, H, W) NCHW float32 -> logits (B, NUM_CLASSES)."""
    b, c, hh, ww = x.shape
    hn, wn = hh // PATCH, ww // PATCH
    n_img = _images_per_grid_step(b)
    steps = b // n_img

    # im2col patches (stride=kernel Conv2d), placed at token rows 1..N_PATCH of
    # a SEQP-padded per-image block (row 0 = class-token slot, rows SEQ.. = pad,
    # both zero).  Cast to bf16 in the wrapper to halve the per-step DMA.
    patches = x.reshape(b, c, hn, PATCH, wn, PATCH)
    patches = patches.transpose(0, 2, 4, 1, 3, 5).reshape(b, hn * wn, c * PATCH * PATCH)
    ptok = jnp.zeros((b, SEQP, KDIM), MXU_DTYPE).at[:, 1:1 + N_PATCH, :].set(
        patches.astype(MXU_DTYPE))
    ptok = ptok.reshape(steps, n_img * SEQP, KDIM)

    wblob = _pack_weight_blob(params)
    pblob = _pack_param_blob(params, n_img)
    mask = _attn_mask(n_img)
    nstk = HEADS * n_img * SEQP

    kernel = functools.partial(_vit_kernel, n_img)
    out = pl.pallas_call(
        kernel,
        out_shape=jax.ShapeDtypeStruct((steps, n_img, OUT_PAD), DTYPE),
        grid=(steps,),
        in_specs=[
            pl.BlockSpec((1, n_img * SEQP, KDIM), lambda i: (i, 0, 0)),
            pl.BlockSpec((WBLOB_ROWS, OUT_PAD), lambda i: (0, 0)),
            pl.BlockSpec(pblob.shape, lambda i: (0, 0)),
            pl.BlockSpec((nstk, nstk), lambda i: (0, 0)),
        ],
        out_specs=pl.BlockSpec((1, n_img, OUT_PAD), lambda i: (i, 0, 0)),
        compiler_params=pltpu.CompilerParams(
            dimension_semantics=("parallel",)),   # v7x: one image per TensorCore
    )(ptok, wblob, pblob, mask)

    return out.reshape(b, OUT_PAD)[:, :NUM_CLASSES]


# ---------------------------------- main --------------------------------------
if __name__ == "__main__":
    key = jax.random.PRNGKey(0)
    pkey, xkey = jax.random.split(key)
    params = init_params(pkey)
    x = jax.random.normal(xkey, (BATCH, IN_CH, IMG, IMG), dtype=DTYPE)

    logits = jax.jit(vit_forward)(x, params)
    logits = jax.block_until_ready(logits)
    assert logits.shape == (BATCH, NUM_CLASSES)
    assert bool(jnp.all(jnp.isfinite(logits)))
    print("KERNEL_OK")
</pallas_src>

<mosaic_0001>
module attributes {stable_mosaic.version = 11 : i64} {
  func.func @_vit_kernel(%arg0: i32, %arg1: memref<1x16x768xbf16, #tpu.memory_space<vmem>>, %arg2: memref<1120x128xbf16, #tpu.memory_space<vmem>>, %arg3: memref<40x128xf32, #tpu.memory_space<vmem>>, %arg4: memref<64x64xf32, #tpu.memory_space<vmem>>, %arg5: memref<1x2x128xf32, #tpu.memory_space<vmem>>) attributes {dimension_semantics = [#tpu.dimension_semantics<parallel>], iteration_bounds = array<i64: 1>, scalar_prefetch = 0 : i64, scratch_operands = 0 : i64, tpu.core_type = #tpu.core_type<tc>, window_params = [{transform_indices = @transform_0, window_bounds = array<i64: 1, 16, 768>}, {pipeline_mode = #tpu.pipeline_mode<synchronous>, transform_indices = @transform_1, window_bounds = array<i64: 1120, 128>}, {pipeline_mode = #tpu.pipeline_mode<synchronous>, transform_indices = @transform_2, window_bounds = array<i64: 40, 128>}, {pipeline_mode = #tpu.pipeline_mode<synchronous>, transform_indices = @transform_3, window_bounds = array<i64: 64, 64>}, {transform_indices = @transform_4, window_bounds = array<i64: 1, 2, 128>}]} {
    %c0 = arith.constant 0 : index
    %c0_0 = arith.constant 0 : index
    %c0_1 = arith.constant 0 : index
    %0 = vector.load %arg1[%c0, %c0_0, %c0_1] : memref<1x16x768xbf16, #tpu.memory_space<vmem>>, vector<1x16x768xbf16>
    %1 = vector.shape_cast %0 : vector<1x16x768xbf16> to vector<16x768xbf16>
    %c0_2 = arith.constant 0 : index
    %c0_3 = arith.constant 0 : index
    %2 = vector.load %arg2[%c0_2, %c0_3] : memref<1120x128xbf16, #tpu.memory_space<vmem>>, vector<768x32xbf16>
    %c24 = arith.constant 24 : index
    %c0_4 = arith.constant 0 : index
    %3 = vector.load %arg3[%c24, %c0_4] : memref<40x128xf32, #tpu.memory_space<vmem>>, vector<16x32xf32>
    %cst = arith.constant dense<0.000000e+00> : vector<16x32xf32>
    %4 = tpu.matmul %1, %2, %cst {dimension_numbers = #tpu.dot_dimension_numbers<[1], [0], [0], [1], [0, 0, 1, 1], [], []>} : vector<16x768xbf16>, vector<768x32xbf16>, vector<16x32xf32> -> vector<16x32xf32>
    %5 = arith.addf %4, %3 : vector<16x32xf32>
    %c0_5 = arith.constant 0 : index
    %c0_6 = arith.constant 0 : index
    %6 = vector.load %arg4[%c0_5, %c0_6] : memref<64x64xf32, #tpu.memory_space<vmem>>, vector<64x64xf32>
    %c0_7 = arith.constant 0 : index
    %c0_8 = arith.constant 0 : index
    %7 = vector.load %arg3[%c0_7, %c0_8] : memref<40x128xf32, #tpu.memory_space<vmem>>, vector<1x32xf32>
    %c1 = arith.constant 1 : index
    %c0_9 = arith.constant 0 : index
    %8 = vector.load %arg3[%c1, %c0_9] : memref<40x128xf32, #tpu.memory_space<vmem>>, vector<1x32xf32>
    %c2 = arith.constant 2 : index
    %c0_10 = arith.constant 0 : index
    %9 = vector.load %arg3[%c2, %c0_10] : memref<40x128xf32, #tpu.memory_space<vmem>>, vector<1x96xf32>
    %c3 = arith.constant 3 : index
    %c0_11 = arith.constant 0 : index
    %10 = vector.load %arg3[%c3, %c0_11] : memref<40x128xf32, #tpu.memory_space<vmem>>, vector<1x32xf32>
    %c4 = arith.constant 4 : index
    %c0_12 = arith.constant 0 : index
    %11 = vector.load %arg3[%c4, %c0_12] : memref<40x128xf32, #tpu.memory_space<vmem>>, vector<1x32xf32>
    %c5 = arith.constant 5 : index
    %c0_13 = arith.constant 0 : index
    %12 = vector.load %arg3[%c5, %c0_13] : memref<40x128xf32, #tpu.memory_space<vmem>>, vector<1x32xf32>
    %c6 = arith.constant 6 : index
    %c0_14 = arith.constant 0 : index
    %13 = vector.load %arg3[%c6, %c0_14] : memref<40x128xf32, #tpu.memory_space<vmem>>, vector<1x64xf32>
    %c7 = arith.constant 7 : index
    %c0_15 = arith.constant 0 : index
    %14 = vector.load %arg3[%c7, %c0_15] : memref<40x128xf32, #tpu.memory_space<vmem>>, vector<1x32xf32>
    %cst_16 = arith.constant dense<0.000000e+00> : vector<16xf32>
    %15 = vector.multi_reduction <add>, %5, %cst_16 [1] : vector<16x32xf32> to vector<16xf32>
    %16 = vector.shape_cast %15 : vector<16xf32> to vector<16x1xf32>
    %cst_17 = arith.constant 3.200000e+01 : f32
    %17 = vector.broadcast %cst_17 : f32 to vector<16x1xf32>
    %18 = arith.divf %16, %17 : vector<16x1xf32>
    %19 = vector.broadcast %18 : vector<16x1xf32> to vector<16x32xf32>
    %20 = arith.subf %5, %19 : vector<16x32xf32>
    %21 = arith.mulf %20, %20 : vector<16x32xf32>
    %cst_18 = arith.constant dense<0.000000e+00> : vector<16xf32>
    %22 = vector.multi_reduction <add>, %21, %cst_18 [1] : vector<16x32xf32> to vector<16xf32>
    %23 = vector.shape_cast %22 : vector<16xf32> to vector<16x1xf32>
    %cst_19 = arith.constant 3.200000e+01 : f32
    %24 = vector.broadcast %cst_19 : f32 to vector<16x1xf32>
    %25 = arith.divf %23, %24 : vector<16x1xf32>
    %cst_20 = arith.constant 9.99999997E-7 : f32
    %26 = vector.broadcast %cst_20 : f32 to vector<16x1xf32>
    %27 = arith.addf %25, %26 : vector<16x1xf32>
    %28 = math.rsqrt %27 : vector<16x1xf32>
    %29 = vector.broadcast %28 : vector<16x1xf32> to vector<16x32xf32>
    %30 = arith.mulf %20, %29 : vector<16x32xf32>
    %31 = vector.broadcast %7 : vector<1x32xf32> to vector<16x32xf32>
    %32 = arith.mulf %30, %31 : vector<16x32xf32>
    %33 = vector.broadcast %8 : vector<1x32xf32> to vector<16x32xf32>
    %34 = arith.addf %32, %33 : vector<16x32xf32>
    %35 = arith.truncf %34 : vector<16x32xf32> to vector<16x32xbf16>
    %c768 = arith.constant 768 : index
    %c0_21 = arith.constant 0 : index
    %36 = vector.load %arg2[%c768, %c0_21] : memref<1120x128xbf16, #tpu.memory_space<vmem>>, vector<32x96xbf16>
    %cst_22 = arith.constant dense<0.000000e+00> : vector<16x96xf32>
    %37 = tpu.matmul %35, %36, %cst_22 {dimension_numbers = #tpu.dot_dimension_numbers<[1], [0], [0], [1], [0, 0, 1, 1], [], []>} : vector<16x32xbf16>, vector<32x96xbf16>, vector<16x96xf32> -> vector<16x96xf32>
    %38 = vector.broadcast %9 : vector<1x96xf32> to vector<16x96xf32>
    %39 = arith.addf %37, %38 : vector<16x96xf32>
    %40 = vector.extract_strided_slice %39 {offsets = [0, 0], sizes = [16, 8], strides = [1, 1]} : vector<16x96xf32> to vector<16x8xf32>
    %41 = vector.extract_strided_slice %39 {offsets = [0, 8], sizes = [16, 8], strides = [1, 1]} : vector<16x96xf32> to vector<16x8xf32>
    %42 = vector.extract_strided_slice %39 {offsets = [0, 16], sizes = [16, 8], strides = [1, 1]} : vector<16x96xf32> to vector<16x8xf32>
    %43 = vector.extract_strided_slice %39 {offsets = [0, 24], sizes = [16, 8], strides = [1, 1]} : vector<16x96xf32> to vector<16x8xf32>
    %44 = tpu.concatenate %40, %41, %42, %43 in 0 : vector<16x8xf32>, vector<16x8xf32>, vector<16x8xf32>, vector<16x8xf32> -> vector<64x8xf32>
    %45 = vector.extract_strided_slice %39 {offsets = [0, 32], sizes = [16, 8], strides = [1, 1]} : vector<16x96xf32> to vector<16x8xf32>
    %46 = vector.extract_strided_slice %39 {offsets = [0, 40], sizes = [16, 8], strides = [1, 1]} : vector<16x96xf32> to vector<16x8xf32>
    %47 = vector.extract_strided_slice %39 {offsets = [0, 48], sizes = [16, 8], strides = [1, 1]} : vector<16x96xf32> to vector<16x8xf32>
    %48 = vector.extract_strided_slice %39 {offsets = [0, 56], sizes = [16, 8], strides = [1, 1]} : vector<16x96xf32> to vector<16x8xf32>
    %49 = tpu.concatenate %45, %46, %47, %48 in 0 : vector<16x8xf32>, vector<16x8xf32>, vector<16x8xf32>, vector<16x8xf32> -> vector<64x8xf32>
    %50 = vector.extract_strided_slice %39 {offsets = [0, 64], sizes = [16, 8], strides = [1, 1]} : vector<16x96xf32> to vector<16x8xf32>
    %51 = vector.extract_strided_slice %39 {offsets = [0, 72], sizes = [16, 8], strides = [1, 1]} : vector<16x96xf32> to vector<16x8xf32>
    %52 = vector.extract_strided_slice %39 {offsets = [0, 80], sizes = [16, 8], strides = [1, 1]} : vector<16x96xf32> to vector<16x8xf32>
    %53 = vector.extract_strided_slice %39 {offsets = [0, 88], sizes = [16, 8], strides = [1, 1]} : vector<16x96xf32> to vector<16x8xf32>
    %54 = tpu.concatenate %50, %51, %52, %53 in 0 : vector<16x8xf32>, vector<16x8xf32>, vector<16x8xf32>, vector<16x8xf32> -> vector<64x8xf32>
    %55 = arith.truncf %44 : vector<64x8xf32> to vector<64x8xbf16>
    %56 = arith.truncf %49 : vector<64x8xf32> to vector<64x8xbf16>
    %cst_23 = arith.constant dense<0.000000e+00> : vector<64x64xf32>
    %57 = tpu.matmul %55, %56, %cst_23 {dimension_numbers = #tpu.dot_dimension_numbers<[1], [1], [0], [0], [0, 0, 1, 0], [], []>} : vector<64x8xbf16>, vector<64x8xbf16>, vector<64x64xf32> -> vector<64x64xf32>
    %cst_24 = arith.constant 0.353553385 : f32
    %58 = vector.broadcast %cst_24 : f32 to vector<64x64xf32>
    %59 = arith.mulf %57, %58 : vector<64x64xf32>
    %60 = arith.addf %59, %6 : vector<64x64xf32>
    %cst_25 = arith.constant dense<0xFF800000> : vector<64xf32>
    %61 = vector.multi_reduction <maximumf>, %60, %cst_25 [1] : vector<64x64xf32> to vector<64xf32>
    %62 = vector.shape_cast %61 : vector<64xf32> to vector<64x1xf32>
    %63 = vector.broadcast %62 : vector<64x1xf32> to vector<64x64xf32>
    %64 = arith.subf %60, %63 : vector<64x64xf32>
    %65 = math.exp %64 : vector<64x64xf32>
    %cst_26 = arith.constant dense<0.000000e+00> : vector<64xf32>
    %66 = vector.multi_reduction <add>, %65, %cst_26 [1] : vector<64x64xf32> to vector<64xf32>
    %67 = vector.shape_cast %66 : vector<64xf32> to vector<64x1xf32>
    %68 = tpu.reciprocal %67 {approx = true} : vector<64x1xf32> -> vector<64x1xf32>
    %69 = vector.broadcast %68 : vector<64x1xf32> to vector<64x64xf32>
    %70 = arith.mulf %65, %69 : vector<64x64xf32>
    %71 = arith.truncf %70 : vector<64x64xf32> to vector<64x64xbf16>
    %72 = arith.truncf %54 : vector<64x8xf32> to vector<64x8xbf16>
    %cst_27 = arith.constant dense<0.000000e+00> : vector<64x8xf32>
    %73 = tpu.matmul %71, %72, %cst_27 {dimension_numbers = #tpu.dot_dimension_numbers<[1], [0], [0], [1], [0, 0, 1, 1], [], []>} : vector<64x64xbf16>, vector<64x8xbf16>, vector<64x8xf32> -> vector<64x8xf32>
    %74 = vector.extract_strided_slice %73 {offsets = [0, 0], sizes = [16, 8], strides = [1, 1]} : vector<64x8xf32> to vector<16x8xf32>
    %c896 = arith.constant 896 : index
    %c0_28 = arith.constant 0 : index
    %75 = vector.load %arg2[%c896, %c0_28] : memref<1120x128xbf16, #tpu.memory_space<vmem>>, vector<8x32xbf16>
    %76 = arith.truncf %74 : vector<16x8xf32> to vector<16x8xbf16>
    %cst_29 = arith.constant dense<0.000000e+00> : vector<16x32xf32>
    %77 = tpu.matmul %76, %75, %cst_29 {dimension_numbers = #tpu.dot_dimension_numbers<[1], [0], [0], [1], [0, 0, 1, 1], [], []>} : vector<16x8xbf16>, vector<8x32xbf16>, vector<16x32xf32> -> vector<16x32xf32>
    %78 = vector.extract_strided_slice %73 {offsets = [16, 0], sizes = [16, 8], strides = [1, 1]} : vector<64x8xf32> to vector<16x8xf32>
    %c904 = arith.constant 904 : index
    %c0_30 = arith.constant 0 : index
    %79 = vector.load %arg2[%c904, %c0_30] : memref<1120x128xbf16, #tpu.memory_space<vmem>>, vector<8x32xbf16>
    %80 = arith.truncf %78 : vector<16x8xf32> to vector<16x8xbf16>
    %cst_31 = arith.constant dense<0.000000e+00> : vector<16x32xf32>
    %81 = tpu.matmul %80, %79, %cst_31 {dimension_numbers = #tpu.dot_dimension_numbers<[1], [0], [0], [1], [0, 0, 1, 1], [], []>} : vector<16x8xbf16>, vector<8x32xbf16>, vector<16x32xf32> -> vector<16x32xf32>
    %82 = arith.addf %77, %81 : vector<16x32xf32>
    %83 = vector.extract_strided_slice %73 {offsets = [32, 0], sizes = [16, 8], strides = [1, 1]} : vector<64x8xf32> to vector<16x8xf32>
    %c912 = arith.constant 912 : index
    %c0_32 = arith.constant 0 : index
    %84 = vector.load %arg2[%c912, %c0_32] : memref<1120x128xbf16, #tpu.memory_space<vmem>>, vector<8x32xbf16>
    %85 = arith.truncf %83 : vector<16x8xf32> to vector<16x8xbf16>
    %cst_33 = arith.constant dense<0.000000e+00> : vector<16x32xf32>
    %86 = tpu.matmul %85, %84, %cst_33 {dimension_numbers = #tpu.dot_dimension_numbers<[1], [0], [0], [1], [0, 0, 1, 1], [], []>} : vector<16x8xbf16>, vector<8x32xbf16>, vector<16x32xf32> -> vector<16x32xf32>
    %87 = arith.addf %82, %86 : vector<16x32xf32>
    %88 = vector.extract_strided_slice %73 {offsets = [48, 0], sizes = [16, 8], strides = [1, 1]} : vector<64x8xf32> to vector<16x8xf32>
    %c920 = arith.constant 920 : index
    %c0_34 = arith.constant 0 : index
    %89 = vector.load %arg2[%c920, %c0_34] : memref<1120x128xbf16, #tpu.memory_space<vmem>>, vector<8x32xbf16>
    %90 = arith.truncf %88 : vector<16x8xf32> to vector<16x8xbf16>
    %cst_35 = arith.constant dense<0.000000e+00> : vector<16x32xf32>
    %91 = tpu.matmul %90, %89, %cst_35 {dimension_numbers = #tpu.dot_dimension_numbers<[1], [0], [0], [1], [0, 0, 1, 1], [], []>} : vector<16x8xbf16>, vector<8x32xbf16>, vector<16x32xf32> -> vector<16x32xf32>
    %92 = arith.addf %87, %91 : vector<16x32xf32>
    %93 = arith.addf %5, %92 : vector<16x32xf32>
    %94 = vector.broadcast %10 : vector<1x32xf32> to vector<16x32xf32>
    %95 = arith.addf %93, %94 : vector<16x32xf32>
    %cst_36 = arith.constant dense<0.000000e+00> : vector<16xf32>
    %96 = vector.multi_reduction <add>, %95, %cst_36 [1] : vector<16x32xf32> to vector<16xf32>
    %97 = vector.shape_cast %96 : vector<16xf32> to vector<16x1xf32>
    %cst_37 = arith.constant 3.200000e+01 : f32
    %98 = vector.broadcast %cst_37 : f32 to vector<16x1xf32>
    %99 = arith.divf %97, %98 : vector<16x1xf32>
    %100 = vector.broadcast %99 : vector<16x1xf32> to vector<16x32xf32>
    %101 = arith.subf %95, %100 : vector<16x32xf32>
    %102 = arith.mulf %101, %101 : vector<16x32xf32>
    %cst_38 = arith.constant dense<0.000000e+00> : vector<16xf32>
    %103 = vector.multi_reduction <add>, %102, %cst_38 [1] : vector<16x32xf32> to vector<16xf32>
    %104 = vector.shape_cast %103 : vector<16xf32> to vector<16x1xf32>
    %cst_39 = arith.constant 3.200000e+01 : f32
    %105 = vector.broadcast %cst_39 : f32 to vector<16x1xf32>
    %106 = arith.divf %104, %105 : vector<16x1xf32>
    %cst_40 = arith.constant 9.99999997E-7 : f32
    %107 = vector.broadcast %cst_40 : f32 to vector<16x1xf32>
    %108 = arith.addf %106, %107 : vector<16x1xf32>
    %109 = math.rsqrt %108 : vector<16x1xf32>
    %110 = vector.broadcast %109 : vector<16x1xf32> to vector<16x32xf32>
    %111 = arith.mulf %101, %110 : vector<16x32xf32>
    %112 = vector.broadcast %11 : vector<1x32xf32> to vector<16x32xf32>
    %113 = arith.mulf %111, %112 : vector<16x32xf32>
    %114 = vector.broadcast %12 : vector<1x32xf32> to vector<16x32xf32>
    %115 = arith.addf %113, %114 : vector<16x32xf32>
    %116 = arith.truncf %115 : vector<16x32xf32> to vector<16x32xbf16>
    %c800 = arith.constant 800 : index
    %c0_41 = arith.constant 0 : index
    %117 = vector.load %arg2[%c800, %c0_41] : memref<1120x128xbf16, #tpu.memory_space<vmem>>, vector<32x64xbf16>
    %cst_42 = arith.constant dense<0.000000e+00> : vector<16x64xf32>
    %118 = tpu.matmul %116, %117, %cst_42 {dimension_numbers = #tpu.dot_dimension_numbers<[1], [0], [0], [1], [0, 0, 1, 1], [], []>} : vector<16x32xbf16>, vector<32x64xbf16>, vector<16x64xf32> -> vector<16x64xf32>
    %119 = vector.broadcast %13 : vector<1x64xf32> to vector<16x64xf32>
    %120 = arith.addf %118, %119 : vector<16x64xf32>
    %cst_43 = arith.constant 5.000000e-01 : f32
    %121 = vector.broadcast %cst_43 : f32 to vector<16x64xf32>
    %122 = arith.mulf %121, %120 : vector<16x64xf32>
    %123 = arith.mulf %120, %120 : vector<16x64xf32>
    %124 = arith.mulf %123, %120 : vector<16x64xf32>
    %cst_44 = arith.constant 4.471500e-02 : f32
    %125 = vector.broadcast %cst_44 : f32 to vector<16x64xf32>
    %126 = arith.mulf %125, %124 : vector<16x64xf32>
    %127 = arith.addf %120, %126 : vector<16x64xf32>
    %cst_45 = arith.constant 0.797884583 : f32
    %128 = vector.broadcast %cst_45 : f32 to vector<16x64xf32>
    %129 = arith.mulf %128, %127 : vector<16x64xf32>
    %130 = math.tanh %129 : vector<16x64xf32>
    %cst_46 = arith.constant 1.000000e+00 : f32
    %131 = vector.broadcast %cst_46 : f32 to vector<16x64xf32>
    %132 = arith.addf %131, %130 : vector<16x64xf32>
    %133 = arith.mulf %122, %132 : vector<16x64xf32>
    %134 = arith.truncf %133 : vector<16x64xf32> to vector<16x64xbf16>
    %c832 = arith.constant 832 : index
    %c0_47 = arith.constant 0 : index
    %135 = vector.load %arg2[%c832, %c0_47] : memref<1120x128xbf16, #tpu.memory_space<vmem>>, vector<64x32xbf16>
    %cst_48 = arith.constant dense<0.000000e+00> : vector<16x32xf32>
    %136 = tpu.matmul %134, %135, %cst_48 {dimension_numbers = #tpu.dot_dimension_numbers<[1], [0], [0], [1], [0, 0, 1, 1], [], []>} : vector<16x64xbf16>, vector<64x32xbf16>, vector<16x32xf32> -> vector<16x32xf32>
    %137 = vector.broadcast %14 : vector<1x32xf32> to vector<16x32xf32>
    %138 = arith.addf %136, %137 : vector<16x32xf32>
    %139 = arith.addf %95, %138 : vector<16x32xf32>
    %c8 = arith.constant 8 : index
    %c0_49 = arith.constant 0 : index
    %140 = vector.load %arg3[%c8, %c0_49] : memref<40x128xf32, #tpu.memory_space<vmem>>, vector<1x32xf32>
    %c9 = arith.constant 9 : index
    %c0_50 = arith.constant 0 : index
    %141 = vector.load %arg3[%c9, %c0_50] : memref<40x128xf32, #tpu.memory_space<vmem>>, vector<1x32xf32>
    %c10 = arith.constant 10 : index
    %c0_51 = arith.constant 0 : index
    %142 = vector.load %arg3[%c10, %c0_51] : memref<40x128xf32, #tpu.memory_space<vmem>>, vector<1x96xf32>
    %c11 = arith.constant 11 : index
    %c0_52 = arith.constant 0 : index
    %143 = vector.load %arg3[%c11, %c0_52] : memref<40x128xf32, #tpu.memory_space<vmem>>, vector<1x32xf32>
    %c12 = arith.constant 12 : index
    %c0_53 = arith.constant 0 : index
    %144 = vector.load %arg3[%c12, %c0_53] : memref<40x128xf32, #tpu.memory_space<vmem>>, vector<1x32xf32>
    %c13 = arith.constant 13 : index
    %c0_54 = arith.constant 0 : index
    %145 = vector.load %arg3[%c13, %c0_54] : memref<40x128xf32, #tpu.memory_space<vmem>>, vector<1x32xf32>
    %c14 = arith.constant 14 : index
    %c0_55 = arith.constant 0 : index
    %146 = vector.load %arg3[%c14, %c0_55] : memref<40x128xf32, #tpu.memory_space<vmem>>, vector<1x64xf32>
    %c15 = arith.constant 15 : index
    %c0_56 = arith.constant 0 : index
    %147 = vector.load %arg3[%c15, %c0_56] : memref<40x128xf32, #tpu.memory_space<vmem>>, vector<1x32xf32>
    %cst_57 = arith.constant dense<0.000000e+00> : vector<16xf32>
    %148 = vector.multi_reduction <add>, %139, %cst_57 [1] : vector<16x32xf32> to vector<16xf32>
    %149 = vector.shape_cast %148 : vector<16xf32> to vector<16x1xf32>
    %cst_58 = arith.constant 3.200000e+01 : f32
    %150 = vector.broadcast %cst_58 : f32 to vector<16x1xf32>
    %151 = arith.divf %149, %150 : vector<16x1xf32>
    %152 = vector.broadcast %151 : vector<16x1xf32> to vector<16x32xf32>
    %153 = arith.subf %139, %152 : vector<16x32xf32>
    %154 = arith.mulf %153, %153 : vector<16x32xf32>
    %cst_59 = arith.constant dense<0.000000e+00> : vector<16xf32>
    %155 = vector.multi_reduction <add>, %154, %cst_59 [1] : vector<16x32xf32> to vector<16xf32>
    %156 = vector.shape_cast %155 : vector<16xf32> to vector<16x1xf32>
    %cst_60 = arith.constant 3.200000e+01 : f32
    %157 = vector.broadcast %cst_60 : f32 to vector<16x1xf32>
    %158 = arith.divf %156, %157 : vector<16x1xf32>
    %cst_61 = arith.constant 9.99999997E-7 : f32
    %159 = vector.broadcast %cst_61 : f32 to vector<16x1xf32>
    %160 = arith.addf %158, %159 : vector<16x1xf32>
    %161 = math.rsqrt %160 : vector<16x1xf32>
    %162 = vector.broadcast %161 : vector<16x1xf32> to vector<16x32xf32>
    %163 = arith.mulf %153, %162 : vector<16x32xf32>
    %164 = vector.broadcast %140 : vector<1x32xf32> to vector<16x32xf32>
    %165 = arith.mulf %163, %164 : vector<16x32xf32>
    %166 = vector.broadcast %141 : vector<1x32xf32> to vector<16x32xf32>
    %167 = arith.addf %165, %166 : vector<16x32xf32>
    %168 = arith.truncf %167 : vector<16x32xf32> to vector<16x32xbf16>
    %c928 = arith.constant 928 : index
    %c0_62 = arith.constant 0 : index
    %169 = vector.load %arg2[%c928, %c0_62] : memref<1120x128xbf16, #tpu.memory_space<vmem>>, vector<32x96xbf16>
    %cst_63 = arith.constant dense<0.000000e+00> : vector<16x96xf32>
    %170 = tpu.matmul %168, %169, %cst_63 {dimension_numbers = #tpu.dot_dimension_numbers<[1], [0], [0], [1], [0, 0, 1, 1], [], []>} : vector<16x32xbf16>, vector<32x96xbf16>, vector<16x96xf32> -> vector<16x96xf32>
    %171 = vector.broadcast %142 : vector<1x96xf32> to vector<16x96xf32>
    %172 = arith.addf %170, %171 : vector<16x96xf32>
    %173 = vector.extract_strided_slice %172 {offsets = [0, 0], sizes = [16, 8], strides = [1, 1]} : vector<16x96xf32> to vector<16x8xf32>
    %174 = vector.extract_strided_slice %172 {offsets = [0, 8], sizes = [16, 8], strides = [1, 1]} : vector<16x96xf32> to vector<16x8xf32>
    %175 = vector.extract_strided_slice %172 {offsets = [0, 16], sizes = [16, 8], strides = [1, 1]} : vector<16x96xf32> to vector<16x8xf32>
    %176 = vector.extract_strided_slice %172 {offsets = [0, 24], sizes = [16, 8], strides = [1, 1]} : vector<16x96xf32> to vector<16x8xf32>
    %177 = tpu.concatenate %173, %174, %175, %176 in 0 : vector<16x8xf32>, vector<16x8xf32>, vector<16x8xf32>, vector<16x8xf32> -> vector<64x8xf32>
    %178 = vector.extract_strided_slice %172 {offsets = [0, 32], sizes = [16, 8], strides = [1, 1]} : vector<16x96xf32> to vector<16x8xf32>
    %179 = vector.extract_strided_slice %172 {offsets = [0, 40], sizes = [16, 8], strides = [1, 1]} : vector<16x96xf32> to vector<16x8xf32>
    %180 = vector.extract_strided_slice %172 {offsets = [0, 48], sizes = [16, 8], strides = [1, 1]} : vector<16x96xf32> to vector<16x8xf32>
    %181 = vector.extract_strided_slice %172 {offsets = [0, 56], sizes = [16, 8], strides = [1, 1]} : vector<16x96xf32> to vector<16x8xf32>
    %182 = tpu.concatenate %178, %179, %180, %181 in 0 : vector<16x8xf32>, vector<16x8xf32>, vector<16x8xf32>, vector<16x8xf32> -> vector<64x8xf32>
    %183 = vector.extract_strided_slice %172 {offsets = [0, 64], sizes = [16, 8], strides = [1, 1]} : vector<16x96xf32> to vector<16x8xf32>
    %184 = vector.extract_strided_slice %172 {offsets = [0, 72], sizes = [16, 8], strides = [1, 1]} : vector<16x96xf32> to vector<16x8xf32>
    %185 = vector.extract_strided_slice %172 {offsets = [0, 80], sizes = [16, 8], strides = [1, 1]} : vector<16x96xf32> to vector<16x8xf32>
    %186 = vector.extract_strided_slice %172 {offsets = [0, 88], sizes = [16, 8], strides = [1, 1]} : vector<16x96xf32> to vector<16x8xf32>
    %187 = tpu.concatenate %183, %184, %185, %186 in 0 : vector<16x8xf32>, vector<16x8xf32>, vector<16x8xf32>, vector<16x8xf32> -> vector<64x8xf32>
    %188 = arith.truncf %177 : vector<64x8xf32> to vector<64x8xbf16>
    %189 = arith.truncf %182 : vector<64x8xf32> to vector<64x8xbf16>
    %cst_64 = arith.constant dense<0.000000e+00> : vector<64x64xf32>
    %190 = tpu.matmul %188, %189, %cst_64 {dimension_numbers = #tpu.dot_dimension_numbers<[1], [1], [0], [0], [0, 0, 1, 0], [], []>} : vector<64x8xbf16>, vector<64x8xbf16>, vector<64x64xf32> -> vector<64x64xf32>
    %cst_65 = arith.constant 0.353553385 : f32
    %191 = vector.broadcast %cst_65 : f32 to vector<64x64xf32>
    %192 = arith.mulf %190, %191 : vector<64x64xf32>
    %193 = arith.addf %192, %6 : vector<64x64xf32>
    %cst_66 = arith.constant dense<0xFF800000> : vector<64xf32>
    %194 = vector.multi_reduction <maximumf>, %193, %cst_66 [1] : vector<64x64xf32> to vector<64xf32>
    %195 = vector.shape_cast %194 : vector<64xf32> to vector<64x1xf32>
    %196 = vector.broadcast %195 : vector<64x1xf32> to vector<64x64xf32>
    %197 = arith.subf %193, %196 : vector<64x64xf32>
    %198 = math.exp %197 : vector<64x64xf32>
    %cst_67 = arith.constant dense<0.000000e+00> : vector<64xf32>
    %199 = vector.multi_reduction <add>, %198, %cst_67 [1] : vector<64x64xf32> to vector<64xf32>
    %200 = vector.shape_cast %199 : vector<64xf32> to vector<64x1xf32>
    %201 = tpu.reciprocal %200 {approx = true} : vector<64x1xf32> -> vector<64x1xf32>
    %202 = vector.broadcast %201 : vector<64x1xf32> to vector<64x64xf32>
    %203 = arith.mulf %198, %202 : vector<64x64xf32>
    %204 = arith.truncf %203 : vector<64x64xf32> to vector<64x64xbf16>
    %205 = arith.truncf %187 : vector<64x8xf32> to vector<64x8xbf16>
    %cst_68 = arith.constant dense<0.000000e+00> : vector<64x8xf32>
    %206 = tpu.matmul %204, %205, %cst_68 {dimension_numbers = #tpu.dot_dimension_numbers<[1], [0], [0], [1], [0, 0, 1, 1], [], []>} : vector<64x64xbf16>, vector<64x8xbf16>, vector<64x8xf32> -> vector<64x8xf32>
    %207 = vector.extract_strided_slice %206 {offsets = [0, 0], sizes = [16, 8], strides = [1, 1]} : vector<64x8xf32> to vector<16x8xf32>
    %c1056 = arith.constant 1056 : index
    %c0_69 = arith.constant 0 : index
    %208 = vector.load %arg2[%c1056, %c0_69] : memref<1120x128xbf16, #tpu.memory_space<vmem>>, vector<8x32xbf16>
    %209 = arith.truncf %207 : vector<16x8xf32> to vector<16x8xbf16>
    %cst_70 = arith.constant dense<0.000000e+00> : vector<16x32xf32>
    %210 = tpu.matmul %209, %208, %cst_70 {dimension_numbers = #tpu.dot_dimension_numbers<[1], [0], [0], [1], [0, 0, 1, 1], [], []>} : vector<16x8xbf16>, vector<8x32xbf16>, vector<16x32xf32> -> vector<16x32xf32>
    %211 = vector.extract_strided_slice %206 {offsets = [16, 0], sizes = [16, 8], strides = [1, 1]} : vector<64x8xf32> to vector<16x8xf32>
    %c1064 = arith.constant 1064 : index
    %c0_71 = arith.constant 0 : index
    %212 = vector.load %arg2[%c1064, %c0_71] : memref<1120x128xbf16, #tpu.memory_space<vmem>>, vector<8x32xbf16>
    %213 = arith.truncf %211 : vector<16x8xf32> to vector<16x8xbf16>
    %cst_72 = arith.constant dense<0.000000e+00> : vector<16x32xf32>
    %214 = tpu.matmul %213, %212, %cst_72 {dimension_numbers = #tpu.dot_dimension_numbers<[1], [0], [0], [1], [0, 0, 1, 1], [], []>} : vector<16x8xbf16>, vector<8x32xbf16>, vector<16x32xf32> -> vector<16x32xf32>
    %215 = arith.addf %210, %214 : vector<16x32xf32>
    %216 = vector.extract_strided_slice %206 {offsets = [32, 0], sizes = [16, 8], strides = [1, 1]} : vector<64x8xf32> to vector<16x8xf32>
    %c1072 = arith.constant 1072 : index
    %c0_73 = arith.constant 0 : index
    %217 = vector.load %arg2[%c1072, %c0_73] : memref<1120x128xbf16, #tpu.memory_space<vmem>>, vector<8x32xbf16>
    %218 = arith.truncf %216 : vector<16x8xf32> to vector<16x8xbf16>
    %cst_74 = arith.constant dense<0.000000e+00> : vector<16x32xf32>
    %219 = tpu.matmul %218, %217, %cst_74 {dimension_numbers = #tpu.dot_dimension_numbers<[1], [0], [0], [1], [0, 0, 1, 1], [], []>} : vector<16x8xbf16>, vector<8x32xbf16>, vector<16x32xf32> -> vector<16x32xf32>
    %220 = arith.addf %215, %219 : vector<16x32xf32>
    %221 = vector.extract_strided_slice %206 {offsets = [48, 0], sizes = [16, 8], strides = [1, 1]} : vector<64x8xf32> to vector<16x8xf32>
    %c1080 = arith.constant 1080 : index
    %c0_75 = arith.constant 0 : index
    %222 = vector.load %arg2[%c1080, %c0_75] : memref<1120x128xbf16, #tpu.memory_space<vmem>>, vector<8x32xbf16>
    %223 = arith.truncf %221 : vector<16x8xf32> to vector<16x8xbf16>
    %cst_76 = arith.constant dense<0.000000e+00> : vector<16x32xf32>
    %224 = tpu.matmul %223, %222, %cst_76 {dimension_numbers = #tpu.dot_dimension_numbers<[1], [0], [0], [1], [0, 0, 1, 1], [], []>} : vector<16x8xbf16>, vector<8x32xbf16>, vector<16x32xf32> -> vector<16x32xf32>
    %225 = arith.addf %220, %224 : vector<16x32xf32>
    %226 = arith.addf %139, %225 : vector<16x32xf32>
    %227 = vector.broadcast %143 : vector<1x32xf32> to vector<16x32xf32>
    %228 = arith.addf %226, %227 : vector<16x32xf32>
    %cst_77 = arith.constant dense<0.000000e+00> : vector<16xf32>
    %229 = vector.multi_reduction <add>, %228, %cst_77 [1] : vector<16x32xf32> to vector<16xf32>
    %230 = vector.shape_cast %229 : vector<16xf32> to vector<16x1xf32>
    %cst_78 = arith.constant 3.200000e+01 : f32
    %231 = vector.broadcast %cst_78 : f32 to vector<16x1xf32>
    %232 = arith.divf %230, %231 : vector<16x1xf32>
    %233 = vector.broadcast %232 : vector<16x1xf32> to vector<16x32xf32>
    %234 = arith.subf %228, %233 : vector<16x32xf32>
    %235 = arith.mulf %234, %234 : vector<16x32xf32>
    %cst_79 = arith.constant dense<0.000000e+00> : vector<16xf32>
    %236 = vector.multi_reduction <add>, %235, %cst_79 [1] : vector<16x32xf32> to vector<16xf32>
    %237 = vector.shape_cast %236 : vector<16xf32> to vector<16x1xf32>
    %cst_80 = arith.constant 3.200000e+01 : f32
    %238 = vector.broadcast %cst_80 : f32 to vector<16x1xf32>
    %239 = arith.divf %237, %238 : vector<16x1xf32>
    %cst_81 = arith.constant 9.99999997E-7 : f32
    %240 = vector.broadcast %cst_81 : f32 to vector<16x1xf32>
    %241 = arith.addf %239, %240 : vector<16x1xf32>
    %242 = math.rsqrt %241 : vector<16x1xf32>
    %243 = vector.broadcast %242 : vector<16x1xf32> to vector<16x32xf32>
    %244 = arith.mulf %234, %243 : vector<16x32xf32>
    %245 = vector.broadcast %144 : vector<1x32xf32> to vector<16x32xf32>
    %246 = arith.mulf %244, %245 : vector<16x32xf32>
    %247 = vector.broadcast %145 : vector<1x32xf32> to vector<16x32xf32>
    %248 = arith.addf %246, %247 : vector<16x32xf32>
    %249 = arith.truncf %248 : vector<16x32xf32> to vector<16x32xbf16>
    %c960 = arith.constant 960 : index
    %c0_82 = arith.constant 0 : index
    %250 = vector.load %arg2[%c960, %c0_82] : memref<1120x128xbf16, #tpu.memory_space<vmem>>, vector<32x64xbf16>
    %cst_83 = arith.constant dense<0.000000e+00> : vector<16x64xf32>
    %251 = tpu.matmul %249, %250, %cst_83 {dimension_numbers = #tpu.dot_dimension_numbers<[1], [0], [0], [1], [0, 0, 1, 1], [], []>} : vector<16x32xbf16>, vector<32x64xbf16>, vector<16x64xf32> -> vector<16x64xf32>
    %252 = vector.broadcast %146 : vector<1x64xf32> to vector<16x64xf32>
    %253 = arith.addf %251, %252 : vector<16x64xf32>
    %cst_84 = arith.constant 5.000000e-01 : f32
    %254 = vector.broadcast %cst_84 : f32 to vector<16x64xf32>
    %255 = arith.mulf %254, %253 : vector<16x64xf32>
    %256 = arith.mulf %253, %253 : vector<16x64xf32>
    %257 = arith.mulf %256, %253 : vector<16x64xf32>
    %cst_85 = arith.constant 4.471500e-02 : f32
    %258 = vector.broadcast %cst_85 : f32 to vector<16x64xf32>
    %259 = arith.mulf %258, %257 : vector<16x64xf32>
    %260 = arith.addf %253, %259 : vector<16x64xf32>
    %cst_86 = arith.constant 0.797884583 : f32
    %261 = vector.broadcast %cst_86 : f32 to vector<16x64xf32>
    %262 = arith.mulf %261, %260 : vector<16x64xf32>
    %263 = math.tanh %262 : vector<16x64xf32>
    %cst_87 = arith.constant 1.000000e+00 : f32
    %264 = vector.broadcast %cst_87 : f32 to vector<16x64xf32>
    %265 = arith.addf %264, %263 : vector<16x64xf32>
    %266 = arith.mulf %255, %265 : vector<16x64xf32>
    %267 = arith.truncf %266 : vector<16x64xf32> to vector<16x64xbf16>
    %c992 = arith.constant 992 : index
    %c0_88 = arith.constant 0 : index
    %268 = vector.load %arg2[%c992, %c0_88] : memref<1120x128xbf16, #tpu.memory_space<vmem>>, vector<64x32xbf16>
    %cst_89 = arith.constant dense<0.000000e+00> : vector<16x32xf32>
    %269 = tpu.matmul %267, %268, %cst_89 {dimension_numbers = #tpu.dot_dimension_numbers<[1], [0], [0], [1], [0, 0, 1, 1], [], []>} : vector<16x64xbf16>, vector<64x32xbf16>, vector<16x32xf32> -> vector<16x32xf32>
    %270 = vector.broadcast %147 : vector<1x32xf32> to vector<16x32xf32>
    %271 = arith.addf %269, %270 : vector<16x32xf32>
    %272 = arith.addf %228, %271 : vector<16x32xf32>
    %c16 = arith.constant 16 : index
    %c0_90 = arith.constant 0 : index
    %273 = vector.load %arg3[%c16, %c0_90] : memref<40x128xf32, #tpu.memory_space<vmem>>, vector<1x32xf32>
    %c17 = arith.constant 17 : index
    %c0_91 = arith.constant 0 : index
    %274 = vector.load %arg3[%c17, %c0_91] : memref<40x128xf32, #tpu.memory_space<vmem>>, vector<1x32xf32>
    %c18 = arith.constant 18 : index
    %c0_92 = arith.constant 0 : index
    %275 = vector.load %arg3[%c18, %c0_92] : memref<40x128xf32, #tpu.memory_space<vmem>>, vector<1x32xf32>
    %c19 = arith.constant 19 : index
    %c0_93 = arith.constant 0 : index
    %276 = vector.load %arg3[%c19, %c0_93] : memref<40x128xf32, #tpu.memory_space<vmem>>, vector<1x32xf32>
    %c20 = arith.constant 20 : index
    %c0_94 = arith.constant 0 : index
    %277 = vector.load %arg3[%c20, %c0_94] : memref<40x128xf32, #tpu.memory_space<vmem>>, vector<1x128xf32>
    %c1088 = arith.constant 1088 : index
    %c0_95 = arith.constant 0 : index
    %278 = vector.load %arg2[%c1088, %c0_95] : memref<1120x128xbf16, #tpu.memory_space<vmem>>, vector<32x128xbf16>
    %279 = vector.extract_strided_slice %272 {offsets = [0, 0], sizes = [1, 32], strides = [1, 1]} : vector<16x32xf32> to vector<1x32xf32>
    %cst_96 = arith.constant dense<0.000000e+00> : vector<1xf32>
    %280 = vector.multi_reduction <add>, %279, %cst_96 [1] : vector<1x32xf32> to vector<1xf32>
    %281 = vector.shape_cast %280 : vector<1xf32> to vector<1x1xf32>
    %cst_97 = arith.constant 3.200000e+01 : f32
    %282 = vector.broadcast %cst_97 : f32 to vector<1x1xf32>
    %283 = arith.divf %281, %282 : vector<1x1xf32>
    %284 = vector.broadcast %283 : vector<1x1xf32> to vector<1x32xf32>
    %285 = arith.subf %279, %284 : vector<1x32xf32>
    %286 = arith.mulf %285, %285 : vector<1x32xf32>
    %cst_98 = arith.constant dense<0.000000e+00> : vector<1xf32>
    %287 = vector.multi_reduction <add>, %286, %cst_98 [1] : vector<1x32xf32> to vector<1xf32>
    %288 = vector.shape_cast %287 : vector<1xf32> to vector<1x1xf32>
    %cst_99 = arith.constant 3.200000e+01 : f32
    %289 = vector.broadcast %cst_99 : f32 to vector<1x1xf32>
    %290 = arith.divf %288, %289 : vector<1x1xf32>
    %cst_100 = arith.constant 9.99999997E-7 : f32
    %291 = vector.broadcast %cst_100 : f32 to vector<1x1xf32>
    %292 = arith.addf %290, %291 : vector<1x1xf32>
    %293 = math.rsqrt %292 : vector<1x1xf32>
    %294 = vector.broadcast %293 : vector<1x1xf32> to vector<1x32xf32>
    %295 = arith.mulf %285, %294 : vector<1x32xf32>
    %296 = arith.mulf %295, %273 : vector<1x32xf32>
    %297 = arith.addf %296, %274 : vector<1x32xf32>
    %cst_101 = arith.constant dense<0.000000e+00> : vector<1xf32>
    %298 = vector.multi_reduction <add>, %297, %cst_101 [1] : vector<1x32xf32> to vector<1xf32>
    %299 = vector.shape_cast %298 : vector<1xf32> to vector<1x1xf32>
    %cst_102 = arith.constant 3.200000e+01 : f32
    %300 = vector.broadcast %cst_102 : f32 to vector<1x1xf32>
    %301 = arith.divf %299, %300 : vector<1x1xf32>
    %302 = vector.broadcast %301 : vector<1x1xf32> to vector<1x32xf32>
    %303 = arith.subf %297, %302 : vector<1x32xf32>
    %304 = arith.mulf %303, %303 : vector<1x32xf32>
    %cst_103 = arith.constant dense<0.000000e+00> : vector<1xf32>
    %305 = vector.multi_reduction <add>, %304, %cst_103 [1] : vector<1x32xf32> to vector<1xf32>
    %306 = vector.shape_cast %305 : vector<1xf32> to vector<1x1xf32>
    %cst_104 = arith.constant 3.200000e+01 : f32
    %307 = vector.broadcast %cst_104 : f32 to vector<1x1xf32>
    %308 = arith.divf %306, %307 : vector<1x1xf32>
    %cst_105 = arith.constant 9.99999974E-6 : f32
    %309 = vector.broadcast %cst_105 : f32 to vector<1x1xf32>
    %310 = arith.addf %308, %309 : vector<1x1xf32>
    %311 = math.rsqrt %310 : vector<1x1xf32>
    %312 = vector.broadcast %311 : vector<1x1xf32> to vector<1x32xf32>
    %313 = arith.mulf %303, %312 : vector<1x32xf32>
    %314 = arith.mulf %313, %275 : vector<1x32xf32>
    %315 = arith.addf %314, %276 : vector<1x32xf32>
    %316 = arith.truncf %315 : vector<1x32xf32> to vector<1x32xbf16>
    %cst_106 = arith.constant dense<0.000000e+00> : vector<1x128xf32>
    %317 = tpu.matmul %316, %278, %cst_106 {dimension_numbers = #tpu.dot_dimension_numbers<[1], [0], [0], [1], [0, 0, 1, 1], [], []>} : vector<1x32xbf16>, vector<32x128xbf16>, vector<1x128xf32> -> vector<1x128xf32>
    %318 = arith.addf %317, %277 : vector<1x128xf32>
    %c0_107 = arith.constant 0 : index
    %c0_108 = arith.constant 0 : index
    %c0_109 = arith.constant 0 : index
    %319 = vector.load %arg5[%c0_107, %c0_108, %c0_109] : memref<1x2x128xf32, #tpu.memory_space<vmem>>, vector<1x1x128xf32>
    %320 = vector.shape_cast %319 : vector<1x1x128xf32> to vector<1x128xf32>
    %321 = vector.shape_cast %318 : vector<1x128xf32> to vector<1x1x128xf32>
    tpu.vector_store %arg5[%c0_107, %c0_108, %c0_109], %321 {strides = array<i32>} : memref<1x2x128xf32, #tpu.memory_space<vmem>>, vector<1x1x128xf32>,
    %322 = vector.extract_strided_slice %272 {offsets = [8, 0], sizes = [1, 32], strides = [1, 1]} : vector<16x32xf32> to vector<1x32xf32>
    %cst_110 = arith.constant dense<0.000000e+00> : vector<1xf32>
    %323 = vector.multi_reduction <add>, %322, %cst_110 [1] : vector<1x32xf32> to vector<1xf32>
    %324 = vector.shape_cast %323 : vector<1xf32> to vector<1x1xf32>
    %cst_111 = arith.constant 3.200000e+01 : f32
    %325 = vector.broadcast %cst_111 : f32 to vector<1x1xf32>
    %326 = arith.divf %324, %325 : vector<1x1xf32>
    %327 = vector.broadcast %326 : vector<1x1xf32> to vector<1x32xf32>
    %328 = arith.subf %322, %327 : vector<1x32xf32>
    %329 = arith.mulf %328, %328 : vector<1x32xf32>
    %cst_112 = arith.constant dense<0.000000e+00> : vector<1xf32>
    %330 = vector.multi_reduction <add>, %329, %cst_112 [1] : vector<1x32xf32> to vector<1xf32>
    %331 = vector.shape_cast %330 : vector<1xf32> to vector<1x1xf32>
    %cst_113 = arith.constant 3.200000e+01 : f32
    %332 = vector.broadcast %cst_113 : f32 to vector<1x1xf32>
    %333 = arith.divf %331, %332 : vector<1x1xf32>
    %cst_114 = arith.constant 9.99999997E-7 : f32
    %334 = vector.broadcast %cst_114 : f32 to vector<1x1xf32>
    %335 = arith.addf %333, %334 : vector<1x1xf32>
    %336 = math.rsqrt %335 : vector<1x1xf32>
    %337 = vector.broadcast %336 : vector<1x1xf32> to vector<1x32xf32>
    %338 = arith.mulf %328, %337 : vector<1x32xf32>
    %339 = arith.mulf %338, %273 : vector<1x32xf32>
    %340 = arith.addf %339, %274 : vector<1x32xf32>
    %cst_115 = arith.constant dense<0.000000e+00> : vector<1xf32>
    %341 = vector.multi_reduction <add>, %340, %cst_115 [1] : vector<1x32xf32> to vector<1xf32>
    %342 = vector.shape_cast %341 : vector<1xf32> to vector<1x1xf32>
    %cst_116 = arith.constant 3.200000e+01 : f32
    %343 = vector.broadcast %cst_116 : f32 to vector<1x1xf32>
    %344 = arith.divf %342, %343 : vector<1x1xf32>
    %345 = vector.broadcast %344 : vector<1x1xf32> to vector<1x32xf32>
    %346 = arith.subf %340, %345 : vector<1x32xf32>
    %347 = arith.mulf %346, %346 : vector<1x32xf32>
    %cst_117 = arith.constant dense<0.000000e+00> : vector<1xf32>
    %348 = vector.multi_reduction <add>, %347, %cst_117 [1] : vector<1x32xf32> to vector<1xf32>
    %349 = vector.shape_cast %348 : vector<1xf32> to vector<1x1xf32>
    %cst_118 = arith.constant 3.200000e+01 : f32
    %350 = vector.broadcast %cst_118 : f32 to vector<1x1xf32>
    %351 = arith.divf %349, %350 : vector<1x1xf32>
    %cst_119 = arith.constant 9.99999974E-6 : f32
    %352 = vector.broadcast %cst_119 : f32 to vector<1x1xf32>
    %353 = arith.addf %351, %352 : vector<1x1xf32>
    %354 = math.rsqrt %353 : vector<1x1xf32>
    %355 = vector.broadcast %354 : vector<1x1xf32> to vector<1x32xf32>
    %356 = arith.mulf %346, %355 : vector<1x32xf32>
    %357 = arith.mulf %356, %275 : vector<1x32xf32>
    %358 = arith.addf %357, %276 : vector<1x32xf32>
    %359 = arith.truncf %358 : vector<1x32xf32> to vector<1x32xbf16>
    %cst_120 = arith.constant dense<0.000000e+00> : vector<1x128xf32>
    %360 = tpu.matmul %359, %278, %cst_120 {dimension_numbers = #tpu.dot_dimension_numbers<[1], [0], [0], [1], [0, 0, 1, 1], [], []>} : vector<1x32xbf16>, vector<32x128xbf16>, vector<1x128xf32> -> vector<1x128xf32>
    %361 = arith.addf %360, %277 : vector<1x128xf32>
    %c0_121 = arith.constant 0 : index
    %c1_122 = arith.constant 1 : index
    %c0_123 = arith.constant 0 : index
    %362 = vector.load %arg5[%c0_121, %c1_122, %c0_123] : memref<1x2x128xf32, #tpu.memory_space<vmem>>, vector<1x1x128xf32>
    %363 = vector.shape_cast %362 : vector<1x1x128xf32> to vector<1x128xf32>
    %364 = vector.shape_cast %361 : vector<1x128xf32> to vector<1x1x128xf32>
    tpu.vector_store %arg5[%c0_121, %c1_122, %c0_123], %364 {strides = array<i32>} : memref<1x2x128xf32, #tpu.memory_space<vmem>>, vector<1x1x128xf32>,
    return
  }
  func.func @transform_0(%arg0: i32) -> (i32, i32, i32) {
    %c0_i32 = arith.constant 0 : i32
    %c0_i32_0 = arith.constant 0 : i32
    %c0_i32_1 = arith.constant 0 : i32
    return %arg0, %c0_i32, %c0_i32_0 : i32, i32, i32
  }
  func.func @transform_1(%arg0: i32) -> (i32, i32) {
    %c0_i32 = arith.constant 0 : i32
    %c0_i32_0 = arith.constant 0 : i32
    %c0_i32_1 = arith.constant 0 : i32
    return %c0_i32, %c0_i32_0 : i32, i32
  }
  func.func @transform_2(%arg0: i32) -> (i32, i32) {
    %c0_i32 = arith.constant 0 : i32
    %c0_i32_0 = arith.constant 0 : i32
    %c0_i32_1 = arith.constant 0 : i32
    return %c0_i32, %c0_i32_0 : i32, i32
  }
  func.func @transform_3(%arg0: i32) -> (i32, i32) {
    %c0_i32 = arith.constant 0 : i32
    %c0_i32_0 = arith.constant 0 : i32
    %c0_i32_1 = arith.constant 0 : i32
    return %c0_i32, %c0_i32_0 : i32, i32
  }
  func.func @transform_4(%arg0: i32) -> (i32, i32, i32) {
    %c0_i32 = arith.constant 0 : i32
    %c0_i32_0 = arith.constant 0 : i32
    %c0_i32_1 = arith.constant 0 : i32
    return %arg0, %c0_i32, %c0_i32_0 : i32, i32, i32
  }
}

</mosaic_0001>

<llo_original>
// kernel: vit_forward.1
$region0: #{vit_forward.1}
  #allocation0 [shape = 'u32[]', space=smem, size = 0x4, offset = 0x4, fixed_abs, tag = 'smem constant byte address 0x4 - core index']
  #allocation1 [shape = 'u32[144,128]{1,0:T(1,128)}', space=vmem, size = 0x12000, scoped, tag = 'internal scratch']
  %s0 = inlined_call_operand.vmem [shape: bf16[1,16,768], index: 0, kind: input, shape index: {}]
  %s1 = inlined_call_operand.vmem [shape: bf16[1120,128], index: 1, kind: input, shape index: {}]
  %s2 = inlined_call_operand.vmem [shape: f32[40,128], index: 2, kind: input, shape index: {}]
  %s3 = inlined_call_operand.vmem [shape: f32[64,64], index: 3, kind: input, shape index: {}]
  %s4 = inlined_call_operand.hbm [shape: f32[1,2,128], index: 4, kind: output, shape index: {}]
  %s5 = sld [smem:[#allocation0]]
  $region26: #{vit_forward.1} parent=0
    _
  %s7 = ssub.s32 1, %s5
  %s8 = scalar_select 0, %s7, %s5
  $region1: #{vit_forward.1} parent=0
    #allocation2 [shape = 'u8[1024]{0}', space=vmem, size = 0x400, scoped, tag = 'output window, operand 0, single buffered']
    #allocation3 [shape = 's32[1]{0}', space=sflag, size = 0x4, scoped, tag = 'scoped memory for vit_forward.1']
    %9 = vsyncpa [#allocation3], 0
    // Predicated region
    $region2: #{vit_forward.1} parent=1 // pred_check
      _
    $region3: #{vit_forward.1} parent=1 // pred_check_branch
      %11 = sbr.rel (0) target = $region5
    $region4: #{vit_forward.1} parent=1 // pred_region
      _
    $region5: #{vit_forward.1} parent=1 // pred_fallthru
      _
    // Predicated region
    $region6: #{vit_forward.1} parent=1 // pred_check
      _
    $region7: #{vit_forward.1} parent=1 // pred_check_branch
      %13 = sbr.rel (0) target = $region9
    $region8: #{vit_forward.1} parent=1 // pred_region
      _
    $region9: #{vit_forward.1} parent=1 // pred_fallthru
      _
    // Predicated region
    $region10: #{vit_forward.1} parent=1 // pred_check
      _
    $region11: #{vit_forward.1} parent=1 // pred_check_branch
      %15 = sbr.rel (0) target = $region13
    $region12: #{vit_forward.1} parent=1 // pred_region
      _
    $region13: #{vit_forward.1} parent=1 // pred_fallthru
      _
    // Predicated region
    $region14: #{vit_forward.1} parent=1 // pred_check
      _
    $region15: #{vit_forward.1} parent=1 // pred_check_branch
      %17 = sbr.rel (0) target = $region17
    $region16: #{vit_forward.1} parent=1 // pred_region
      _
    $region17: #{vit_forward.1} parent=1 // pred_fallthru
      _
    %v19 = vld [vmem:[%s0] sm:$0xff]
    %v20 = vld [vmem:[%s0 + $0x8] sm:$0xff]
    %v21 = vld [vmem:[%s0 + $0x10] sm:$0xff]
    %v22 = vld [vmem:[%s0 + $0x18] sm:$0xff]
    %v23 = vld [vmem:[%s0 + $0x20] sm:$0xff]
    %v24 = vld [vmem:[%s0 + $0x28] sm:$0xff]
    %v25 = vld [vmem:[%s1] sm:$0xf]
    %v26 = vld [vmem:[%s1 + $0x4] sm:$0xf]
    %v27 = vld [vmem:[%s1 + $0x8] sm:$0xf]
    %v28 = vld [vmem:[%s1 + $0xc] sm:$0xf]
    %v29 = vld [vmem:[%s1 + $0x10] sm:$0xf]
    %v30 = vld [vmem:[%s1 + $0x14] sm:$0xf]
    %v31 = vld [vmem:[%s1 + $0x18] sm:$0xf]
    %v32 = vld [vmem:[%s1 + $0x1c] sm:$0xf]
    %v33 = vld [vmem:[%s1 + $0x20] sm:$0xf]
    %v34 = vld [vmem:[%s1 + $0x24] sm:$0xf]
    %v35 = vld [vmem:[%s1 + $0x28] sm:$0xf]
    %v36 = vld [vmem:[%s1 + $0x2c] sm:$0xf]
    %v37 = vld [vmem:[%s1 + $0x30] sm:$0xf]
    %v38 = vld [vmem:[%s1 + $0x34] sm:$0xf]
    %v39 = vld [vmem:[%s1 + $0x38] sm:$0xf]
    %v40 = vld [vmem:[%s1 + $0x3c] sm:$0xf]
    %v41 = vld [vmem:[%s1 + $0x40] sm:$0xf]
    %v42 = vld [vmem:[%s1 + $0x44] sm:$0xf]
    %v43 = vld [vmem:[%s1 + $0x48] sm:$0xf]
    %v44 = vld [vmem:[%s1 + $0x4c] sm:$0xf]
    %v45 = vld [vmem:[%s1 + $0x50] sm:$0xf]
    %v46 = vld [vmem:[%s1 + $0x54] sm:$0xf]
    %v47 = vld [vmem:[%s1 + $0x58] sm:$0xf]
    %v48 = vld [vmem:[%s1 + $0x5c] sm:$0xf]
    %v49 = vld [vmem:[%s1 + $0x60] sm:$0xf]
    %v50 = vld [vmem:[%s1 + $0x64] sm:$0xf]
    %v51 = vld [vmem:[%s1 + $0x68] sm:$0xf]
    %v52 = vld [vmem:[%s1 + $0x6c] sm:$0xf]
    %v53 = vld [vmem:[%s1 + $0x70] sm:$0xf]
    %v54 = vld [vmem:[%s1 + $0x74] sm:$0xf]
    %v55 = vld [vmem:[%s1 + $0x78] sm:$0xf]
    %v56 = vld [vmem:[%s1 + $0x7c] sm:$0xf]
    %v57 = vld [vmem:[%s1 + $0x80] sm:$0xf]
    %v58 = vld [vmem:[%s1 + $0x84] sm:$0xf]
    %v59 = vld [vmem:[%s1 + $0x88] sm:$0xf]
    %v60 = vld [vmem:[%s1 + $0x8c] sm:$0xf]
    %v61 = vld [vmem:[%s1 + $0x90] sm:$0xf]
    %v62 = vld [vmem:[%s1 + $0x94] sm:$0xf]
    %v63 = vld [vmem:[%s1 + $0x98] sm:$0xf]
    %v64 = vld [vmem:[%s1 + $0x9c] sm:$0xf]
    %v65 = vld [vmem:[%s1 + $0xa0] sm:$0xf]
    %v66 = vld [vmem:[%s1 + $0xa4] sm:$0xf]
    %v67 = vld [vmem:[%s1 + $0xa8] sm:$0xf]
    %v68 = vld [vmem:[%s1 + $0xac] sm:$0xf]
    %v69 = vld [vmem:[%s1 + $0xb0] sm:$0xf]
    %v70 = vld [vmem:[%s1 + $0xb4] sm:$0xf]
    %v71 = vld [vmem:[%s1 + $0xb8] sm:$0xf]
    %v72 = vld [vmem:[%s1 + $0xbc] sm:$0xf]
    %v73 = vld [vmem:[%s1 + $0xc0] sm:$0xf]
    %v74 = vld [vmem:[%s1 + $0xc4] sm:$0xf]
    %v75 = vld [vmem:[%s1 + $0xc8] sm:$0xf]
    %v76 = vld [vmem:[%s1 + $0xcc] sm:$0xf]
    %v77 = vld [vmem:[%s1 + $0xd0] sm:$0xf]
    %v78 = vld [vmem:[%s1 + $0xd4] sm:$0xf]
    %v79 = vld [vmem:[%s1 + $0xd8] sm:$0xf]
    %v80 = vld [vmem:[%s1 + $0xdc] sm:$0xf]
    %v81 = vld [vmem:[%s1 + $0xe0] sm:$0xf]
    %v82 = vld [vmem:[%s1 + $0xe4] sm:$0xf]
    %v83 = vld [vmem:[%s1 + $0xe8] sm:$0xf]
    %v84 = vld [vmem:[%s1 + $0xec] sm:$0xf]
    %v85 = vld [vmem:[%s1 + $0xf0] sm:$0xf]
    %v86 = vld [vmem:[%s1 + $0xf4] sm:$0xf]
    %v87 = vld [vmem:[%s1 + $0xf8] sm:$0xf]
    %v88 = vld [vmem:[%s1 + $0xfc] sm:$0xf]
    %v89 = vld [vmem:[%s1 + $0x100] sm:$0xf]
    %v90 = vld [vmem:[%s1 + $0x104] sm:$0xf]
    %v91 = vld [vmem:[%s1 + $0x108] sm:$0xf]
    %v92 = vld [vmem:[%s1 + $0x10c] sm:$0xf]
    %v93 = vld [vmem:[%s1 + $0x110] sm:$0xf]
    %v94 = vld [vmem:[%s1 + $0x114] sm:$0xf]
    %v95 = vld [vmem:[%s1 + $0x118] sm:$0xf]
    %v96 = vld [vmem:[%s1 + $0x11c] sm:$0xf]
    %v97 = vld [vmem:[%s1 + $0x120] sm:$0xf]
    %v98 = vld [vmem:[%s1 + $0x124] sm:$0xf]
    %v99 = vld [vmem:[%s1 + $0x128] sm:$0xf]
    %v100 = vld [vmem:[%s1 + $0x12c] sm:$0xf]
    %v101 = vld [vmem:[%s1 + $0x130] sm:$0xf]
    %v102 = vld [vmem:[%s1 + $0x134] sm:$0xf]
    %v103 = vld [vmem:[%s1 + $0x138] sm:$0xf]
    %v104 = vld [vmem:[%s1 + $0x13c] sm:$0xf]
    %v105 = vld [vmem:[%s1 + $0x140] sm:$0xf]
    %v106 = vld [vmem:[%s1 + $0x144] sm:$0xf]
    %v107 = vld [vmem:[%s1 + $0x148] sm:$0xf]
    %v108 = vld [vmem:[%s1 + $0x14c] sm:$0xf]
    %v109 = vld [vmem:[%s1 + $0x150] sm:$0xf]
    %v110 = vld [vmem:[%s1 + $0x154] sm:$0xf]
    %v111 = vld [vmem:[%s1 + $0x158] sm:$0xf]
    %v112 = vld [vmem:[%s1 + $0x15c] sm:$0xf]
    %v113 = vld [vmem:[%s1 + $0x160] sm:$0xf]
    %v114 = vld [vmem:[%s1 + $0x164] sm:$0xf]
    %v115 = vld [vmem:[%s1 + $0x168] sm:$0xf]
    %v116 = vld [vmem:[%s1 + $0x16c] sm:$0xf]
    %v117 = vld [vmem:[%s1 + $0x170] sm:$0xf]
    %v118 = vld [vmem:[%s1 + $0x174] sm:$0xf]
    %v119 = vld [vmem:[%s1 + $0x178] sm:$0xf]
    %v120 = vld [vmem:[%s1 + $0x17c] sm:$0xf]
    %v121 = vld [vmem:[%s2 + $0x18] sm:$0xff]
    %v122 = vld [vmem:[%s2 + $0x20] sm:$0xff]
    %v129 = vunpack.c.l.b16 %v19
    %v130 = vunpack.c.h.b16 %v19
    %v131 = vunpack.c.l.b16 %v20
    %v132 = vunpack.c.h.b16 %v20
    %v133 = vunpack.c.l.b16 %v21
    %v134 = vunpack.c.h.b16 %v21
    %v135 = vunpack.c.l.b16 %v22
    %v136 = vunpack.c.h.b16 %v22
    %v137 = vunpack.c.l.b16 %v23
    %v138 = vunpack.c.h.b16 %v23
    %v139 = vunpack.c.l.b16 %v24
    %v140 = vunpack.c.h.b16 %v24
    %v141 = vpack.c.b16 %v135, %v129
    %v142 = vpack.c.b16 %v136, %v130
    %v143 = vpack.c.b16 %v137, %v131
    %v144 = vpack.c.b16 %v138, %v132
    %v145 = vpack.c.b16 %v139, %v133
    %v146 = vpack.c.b16 %v140, %v134
    %v249 = vunpack.c.l.b16 %v25
    %v250 = vunpack.c.l.b16 %v26
    %v251 = vunpack.c.l.b16 %v27
    %v252 = vunpack.c.l.b16 %v28
    %v253 = vunpack.c.l.b16 %v29
    %v254 = vunpack.c.l.b16 %v30
    %v255 = vunpack.c.l.b16 %v31
    %v256 = vunpack.c.l.b16 %v32
    %v257 = vunpack.c.l.b16 %v33
    %v258 = vunpack.c.l.b16 %v34
    %v259 = vunpack.c.l.b16 %v35
    %v260 = vunpack.c.l.b16 %v36
    %v261 = vunpack.c.l.b16 %v37
    %v262 = vunpack.c.l.b16 %v38
    %v263 = vunpack.c.l.b16 %v39
    %v264 = vunpack.c.l.b16 %v40
    %v265 = vunpack.c.l.b16 %v41
    %v266 = vunpack.c.l.b16 %v42
    %v267 = vunpack.c.l.b16 %v43
    %v268 = vunpack.c.l.b16 %v44
    %v269 = vunpack.c.l.b16 %v45
    %v270 = vunpack.c.l.b16 %v46
    %v271 = vunpack.c.l.b16 %v47
    %v272 = vunpack.c.l.b16 %v48
    %v273 = vunpack.c.l.b16 %v49
    %v274 = vunpack.c.l.b16 %v50
    %v275 = vunpack.c.l.b16 %v51
    %v276 = vunpack.c.l.b16 %v52
    %v277 = vunpack.c.l.b16 %v53
    %v278 = vunpack.c.l.b16 %v54
    %v279 = vunpack.c.l.b16 %v55
    %v280 = vunpack.c.l.b16 %v56
    %v281 = vunpack.c.l.b16 %v57
    %v282 = vunpack.c.l.b16 %v58
    %v283 = vunpack.c.l.b16 %v59
    %v284 = vunpack.c.l.b16 %v60
    %v285 = vunpack.c.l.b16 %v61
    %v286 = vunpack.c.l.b16 %v62
    %v287 = vunpack.c.l.b16 %v63
    %v288 = vunpack.c.l.b16 %v64
    %v289 = vunpack.c.l.b16 %v65
    %v290 = vunpack.c.l.b16 %v66
    %v291 = vunpack.c.l.b16 %v67
    %v292 = vunpack.c.l.b16 %v68
    %v293 = vunpack.c.l.b16 %v69
    %v294 = vunpack.c.l.b16 %v70
    %v295 = vunpack.c.l.b16 %v71
    %v296 = vunpack.c.l.b16 %v72
    %v297 = vunpack.c.l.b16 %v73
    %v298 = vunpack.c.l.b16 %v74
    %v299 = vunpack.c.l.b16 %v75
    %v300 = vunpack.c.l.b16 %v76
    %v301 = vunpack.c.l.b16 %v77
    %v302 = vunpack.c.l.b16 %v78
    %v303 = vunpack.c.l.b16 %v79
    %v304 = vunpack.c.l.b16 %v80
    %v305 = vunpack.c.l.b16 %v81
    %v306 = vunpack.c.l.b16 %v82
    %v307 = vunpack.c.l.b16 %v83
    %v308 = vunpack.c.l.b16 %v84
    %v309 = vunpack.c.l.b16 %v85
    %v310 = vunpack.c.l.b16 %v86
    %v311 = vunpack.c.l.b16 %v87
    %v312 = vunpack.c.l.b16 %v88
    %v313 = vunpack.c.l.b16 %v89
    %v314 = vunpack.c.l.b16 %v90
    %v315 = vunpack.c.l.b16 %v91
    %v316 = vunpack.c.l.b16 %v92
    %v317 = vunpack.c.l.b16 %v93
    %v318 = vunpack.c.l.b16 %v94
    %v319 = vunpack.c.l.b16 %v95
    %v320 = vunpack.c.l.b16 %v96
    %v321 = vunpack.c.l.b16 %v97
    %v322 = vunpack.c.l.b16 %v98
    %v323 = vunpack.c.l.b16 %v99
    %v324 = vunpack.c.l.b16 %v100
    %v325 = vunpack.c.l.b16 %v101
    %v326 = vunpack.c.l.b16 %v102
    %v327 = vunpack.c.l.b16 %v103
    %v328 = vunpack.c.l.b16 %v104
    %v329 = vunpack.c.l.b16 %v105
    %v330 = vunpack.c.l.b16 %v106
    %v331 = vunpack.c.l.b16 %v107
    %v332 = vunpack.c.l.b16 %v108
    %v333 = vunpack.c.l.b16 %v109
    %v334 = vunpack.c.l.b16 %v110
    %v335 = vunpack.c.l.b16 %v111
    %v336 = vunpack.c.l.b16 %v112
    %v337 = vunpack.c.l.b16 %v113
    %v338 = vunpack.c.l.b16 %v114
    %v339 = vunpack.c.l.b16 %v115
    %v340 = vunpack.c.l.b16 %v116
    %v341 = vunpack.c.l.b16 %v117
    %v342 = vunpack.c.l.b16 %v118
    %v343 = vunpack.c.l.b16 %v119
    %v344 = vunpack.c.l.b16 %v120
    %v345 = vpack.c.b16 %v250, %v249
    %v346 = vpack.c.b16 %v252, %v251
    %v347 = vpack.c.b16 %v254, %v253
    %v348 = vpack.c.b16 %v256, %v255
    %v349 = vpack.c.b16 %v258, %v257
    %v350 = vpack.c.b16 %v260, %v259
    %v351 = vpack.c.b16 %v262, %v261
    %v352 = vpack.c.b16 %v264, %v263
    %v353 = vpack.c.b16 %v266, %v265
    %v354 = vpack.c.b16 %v268, %v267
    %v355 = vpack.c.b16 %v270, %v269
    %v356 = vpack.c.b16 %v272, %v271
    %v357 = vpack.c.b16 %v274, %v273
    %v358 = vpack.c.b16 %v276, %v275
    %v359 = vpack.c.b16 %v278, %v277
    %v360 = vpack.c.b16 %v280, %v279
    %v361 = vpack.c.b16 %v282, %v281
    %v362 = vpack.c.b16 %v284, %v283
    %v363 = vpack.c.b16 %v286, %v285
    %v364 = vpack.c.b16 %v288, %v287
    %v365 = vpack.c.b16 %v290, %v289
    %v366 = vpack.c.b16 %v292, %v291
    %v367 = vpack.c.b16 %v294, %v293
    %v368 = vpack.c.b16 %v296, %v295
    %v369 = vpack.c.b16 %v298, %v297
    %v370 = vpack.c.b16 %v300, %v299
    %v371 = vpack.c.b16 %v302, %v301
    %v372 = vpack.c.b16 %v304, %v303
    %v373 = vpack.c.b16 %v306, %v305
    %v374 = vpack.c.b16 %v308, %v307
    %v375 = vpack.c.b16 %v310, %v309
    %v376 = vpack.c.b16 %v312, %v311
    %v377 = vpack.c.b16 %v314, %v313
    %v378 = vpack.c.b16 %v316, %v315
    %v379 = vpack.c.b16 %v318, %v317
    %v380 = vpack.c.b16 %v320, %v319
    %v381 = vpack.c.b16 %v322, %v321
    %v382 = vpack.c.b16 %v324, %v323
    %v383 = vpack.c.b16 %v326, %v325
    %v384 = vpack.c.b16 %v328, %v327
    %v385 = vpack.c.b16 %v330, %v329
    %v386 = vpack.c.b16 %v332, %v331
    %v387 = vpack.c.b16 %v334, %v333
    %v388 = vpack.c.b16 %v336, %v335
    %v389 = vpack.c.b16 %v338, %v337
    %v390 = vpack.c.b16 %v340, %v339
    %v391 = vpack.c.b16 %v342, %v341
    %v392 = vpack.c.b16 %v344, %v343
    %441 = vmatprep.subr.bf16.mxu0 0
    %442 = vmatpush1.bf16.msra.mxu0 %v352
    %443 = vmatprep.subr.bf16.mxu0 0
    %444 = vmatpush1.bf16.msra.mxu0 %v351
    %445 = vmatprep.subr.bf16.mxu0 0
    %446 = vmatpush1.bf16.msra.mxu0 %v350
    %447 = vmatprep.subr.bf16.mxu0 0
    %448 = vmatpush1.bf16.msra.mxu0 %v349
    %449 = vmatprep.subr.bf16.mxu0 0
    %450 = vmatpush1.bf16.msra.mxu0 %v348
    %451 = vmatprep.subr.bf16.mxu0 0
    %452 = vmatpush1.bf16.msra.mxu0 %v347
    %453 = vmatprep.subr.bf16.mxu0 0
    %454 = vmatpush1.bf16.msra.mxu0 %v346
    %455 = vmatprep.subr.bf16.mxu0 0
    %456 = vmatpush1.bf16.msra.mxu0 %v345
    %457 = vmatprep.subr.bf16.mxu0 0
    %458 = vmatpush2.bf16.msra.mxu0 %v360
    %459 = vmatprep.subr.bf16.mxu0 0
    %460 = vmatpush2.bf16.msra.mxu0 %v359
    %461 = vmatprep.subr.bf16.mxu0 0
    %462 = vmatpush2.bf16.msra.mxu0 %v358
    %463 = vmatprep.subr.bf16.mxu0 0
    %464 = vmatpush2.bf16.msra.mxu0 %v357
    %465 = vmatprep.subr.bf16.mxu0 0
    %466 = vmatpush2.bf16.msra.mxu0 %v356
    %467 = vmatprep.subr.bf16.mxu0 0
    %468 = vmatpush2.bf16.msra.mxu0 %v355
    %469 = vmatprep.subr.bf16.mxu0 0
    %470 = vmatpush2.bf16.msra.mxu0 %v354
    %471 = vmatprep.subr.bf16.mxu0 0
    %472 = vmatpush2.bf16.msra.mxu0 %v353
    %473 = vmatprep.mubr.bf16.mxu0 %v142
    %474 = vmatmul.mubr.bf16.gmra.mxu0 %v141
    %v475 = vpop.f32.mrf.mxu0
    %v476 = vadd.f32 %v121, %v475
    %v477 = vpop.f32.mrf.mxu0
    %v478 = vpop.f32.mrf.mxu0
    %v479 = vadd.f32 %v122, %v478
    %v480 = vpop.f32.mrf.mxu0
    %481 = vdwg.mxu0
    %482 = vmatprep.subr.bf16.mxu0 0
    %483 = vmatpush1.bf16.msra.mxu0 %v368
    %484 = vmatprep.subr.bf16.mxu0 0
    %485 = vmatpush1.bf16.msra.mxu0 %v367
    %486 = vmatprep.subr.bf16.mxu0 0
    %487 = vmatpush1.bf16.msra.mxu0 %v366
    %488 = vmatprep.subr.bf16.mxu0 0
    %489 = vmatpush1.bf16.msra.mxu0 %v365
    %490 = vmatprep.subr.bf16.mxu0 0
    %491 = vmatpush1.bf16.msra.mxu0 %v364
    %492 = vmatprep.subr.bf16.mxu0 0
    %493 = vmatpush1.bf16.msra.mxu0 %v363
    %494 = vmatprep.subr.bf16.mxu0 0
    %495 = vmatpush1.bf16.msra.mxu0 %v362
    %496 = vmatprep.subr.bf16.mxu0 0
    %497 = vmatpush1.bf16.msra.mxu0 %v361
    %498 = vmatprep.subr.bf16.mxu0 0
    %499 = vmatpush2.bf16.msra.mxu0 %v376
    %500 = vmatprep.subr.bf16.mxu0 0
    %501 = vmatpush2.bf16.msra.mxu0 %v375
    %502 = vmatprep.subr.bf16.mxu0 0
    %503 = vmatpush2.bf16.msra.mxu0 %v374
    %504 = vmatprep.subr.bf16.mxu0 0
    %505 = vmatpush2.bf16.msra.mxu0 %v373
    %506 = vmatprep.subr.bf16.mxu0 0
    %507 = vmatpush2.bf16.msra.mxu0 %v372
    %508 = vmatprep.subr.bf16.mxu0 0
    %509 = vmatpush2.bf16.msra.mxu0 %v371
    %510 = vmatprep.subr.bf16.mxu0 0
    %511 = vmatpush2.bf16.msra.mxu0 %v370
    %512 = vmatprep.subr.bf16.mxu0 0
    %513 = vmatpush2.bf16.msra.mxu0 %v369
    %514 = vmatprep.mubr.bf16.mxu0 %v144
    %515 = vmatmul.mubr.bf16.gmra.mxu0 %v143
    %v516 = vpop.f32.mrf.mxu0
    %v517 = vadd.f32 %v476, %v516
    %v518 = vpop.f32.mrf.mxu0
    %v519 = vpop.f32.mrf.mxu0
    %v520 = vadd.f32 %v479, %v519
    %v521 = vpop.f32.mrf.mxu0
    %522 = vdwg.mxu0
    %523 = vmatprep.subr.bf16.mxu0 0
    %524 = vmatpush1.bf16.msra.mxu0 %v384
    %525 = vmatprep.subr.bf16.mxu0 0
    %526 = vmatpush1.bf16.msra.mxu0 %v383
    %527 = vmatprep.subr.bf16.mxu0 0
    %528 = vmatpush1.bf16.msra.mxu0 %v382
    %529 = vmatprep.subr.bf16.mxu0 0
    %530 = vmatpush1.bf16.msra.mxu0 %v381
    %531 = vmatprep.subr.bf16.mxu0 0
    %532 = vmatpush1.bf16.msra.mxu0 %v380
    %533 = vmatprep.subr.bf16.mxu0 0
    %534 = vmatpush1.bf16.msra.mxu0 %v379
    %535 = vmatprep.subr.bf16.mxu0 0
    %536 = vmatpush1.bf16.msra.mxu0 %v378
    %537 = vmatprep.subr.bf16.mxu0 0
    %538 = vmatpush1.bf16.msra.mxu0 %v377
    %539 = vmatprep.subr.bf16.mxu0 0
    %540 = vmatpush2.bf16.msra.mxu0 %v392
    %541 = vmatprep.subr.bf16.mxu0 0
    %542 = vmatpush2.bf16.msra.mxu0 %v391
    %543 = vmatprep.subr.bf16.mxu0 0
    %544 = vmatpush2.bf16.msra.mxu0 %v390
    %545 = vmatprep.subr.bf16.mxu0 0
    %546 = vmatpush2.bf16.msra.mxu0 %v389
    %547 = vmatprep.subr.bf16.mxu0 0
    %548 = vmatpush2.bf16.msra.mxu0 %v388
    %549 = vmatprep.subr.bf16.mxu0 0
    %550 = vmatpush2.bf16.msra.mxu0 %v387
    %551 = vmatprep.subr.bf16.mxu0 0
    %552 = vmatpush2.bf16.msra.mxu0 %v386
    %553 = vmatprep.subr.bf16.mxu0 0
    %554 = vmatpush2.bf16.msra.mxu0 %v385
    %555 = vmatprep.mubr.bf16.mxu0 %v146
    %556 = vmatmul.mubr.bf16.gmra.mxu0 %v145
    %v557 = vpop.f32.mrf.mxu0
    %v558 = vadd.f32 %v517, %v557
    %v559 = vpop.f32.mrf.mxu0
    %v560 = vpop.f32.mrf.mxu0
    %v561 = vadd.f32 %v520, %v560
    %v562 = vpop.f32.mrf.mxu0
    %563 = vdwg.mxu0
    %v564 = vld [vmem:[%s3] sm:$0xff]
    %v565 = vld [vmem:[%s3 + $0x8] sm:$0xff]
    %v566 = vld [vmem:[%s3 + $0x10] sm:$0xff]
    %v567 = vld [vmem:[%s3 + $0x18] sm:$0xff]
    %v568 = vld [vmem:[%s3 + $0x20] sm:$0xff]
    %v569 = vld [vmem:[%s3 + $0x28] sm:$0xff]
    %v570 = vld [vmem:[%s3 + $0x30] sm:$0xff]
    %v571 = vld [vmem:[%s3 + $0x38] sm:$0xff]
    %v572 = vld [vmem:[%s2] sm:$0x1]
    %v573 = vld [vmem:[%s2 + $0x1] sm:$0x1]
    %v574 = vld [vmem:[%s2 + $0x2] sm:$0x1]
    %v575 = vld [vmem:[%s2 + $0x3] sm:$0x1]
    %v576 = vld [vmem:[%s2 + $0x4] sm:$0x1]
    %v577 = vld [vmem:[%s2 + $0x5] sm:$0x1]
    %v578 = vld [vmem:[%s2 + $0x6] sm:$0x1]
    %v579 = vld [vmem:[%s2 + $0x7] sm:$0x1]
    %vm580 = vcmask 261120
    %v581 = vsel %vm580, %v558, 0.0
    %582 = vadd.xlane.f32.xlu0 %v581
    %v583 = vpop.xlane.xlu0 %582
    %v584 = vsel %vm580, %v561, 0.0
    %585 = vadd.xlane.f32.xlu0 %v584
    %v586 = vpop.xlane.xlu0 %585
    %v587 = vrcp.pop 32.0
    %v588 = vmul.f32 %v583, %v587
    %v589 = vmul.f32 %v586, %v587
    %v590 = vsub.f32 %v558, %v588
    %v591 = vsub.f32 %v561, %v589
    %v592 = vmul.f32 %v590, %v590
    %v593 = vmul.f32 %v591, %v591
    %v594 = vsel %vm580, %v592, 0.0
    %595 = vadd.xlane.f32.xlu0 %v594
    %v596 = vpop.xlane.xlu0 %595
    %v597 = vsel %vm580, %v593, 0.0
    %598 = vadd.xlane.f32.xlu0 %v597
    %v599 = vpop.xlane.xlu0 %598
    %v600 = vmul.f32 %v596, %v587
    %v601 = vmul.f32 %v599, %v587
    %v602 = vadd.f32 %v600, 1e-06
    %v603 = vadd.f32 %v601, 1e-06
    %v604 = vrsqrt.pop %v602
    %v605 = vrsqrt.pop %v603
    %v606 = vmul.f32 %v590, %v604
    %v607 = vmul.f32 %v591, %v605
    %v608 = vlaneseq
    %v609 = vshrl.u32 %v608, 7
    %v610 = vsub.s32 0, %v609
    %v611 = vrot.slane %v572, %v610
    %v612 = vmul.f32 %v606, %v611
    %v613 = vmul.f32 %v607, %v611
    %v614 = vlaneseq
    %v615 = vshrl.u32 %v614, 7
    %v616 = vsub.s32 0, %v615
    %v617 = vrot.slane %v573, %v616
    %v618 = vadd.f32 %v612, %v617
    %v619 = vadd.f32 %v613, %v617
    %v620 = vpack.c.bf16 %v619, %v618
    %v621 = vld [vmem:[%s1 + $0x180] sm:$0xf]
    %v622 = vld [vmem:[%s1 + $0x184] sm:$0xf]
    %v623 = vld [vmem:[%s1 + $0x188] sm:$0xf]
    %v624 = vld [vmem:[%s1 + $0x18c] sm:$0xf]
    %v625 = vlaneseq
    %v626 = vshrl.u32 %v625, 7
    %v627 = vsub.s32 0, %v626
    %v628 = vrot.slane %v574, %v627
    %v633 = vunpack.c.l.b16 %v621
    %v634 = vunpack.c.l.b16 %v622
    %v635 = vunpack.c.l.b16 %v623
    %v636 = vunpack.c.l.b16 %v624
    %v637 = vpack.c.b16 %v634, %v633
    %v638 = vpack.c.b16 %v636, %v635
    %v642 = vsel %vm580, %v620, 0
    %644 = vmatprep.subr.bf16.mxu0 0
    %645 = vmatpush1.bf16.msra.mxu0 0
    %646 = vmatprep.subr.bf16.mxu0 0
    %647 = vmatpush1.bf16.msra.mxu0 0
    %648 = vmatprep.subr.bf16.mxu0 0
    %649 = vmatpush1.bf16.msra.mxu0 0
    %650 = vmatprep.subr.bf16.mxu0 0
    %651 = vmatpush1.bf16.msra.mxu0 0
    %652 = vmatprep.subr.bf16.mxu0 0
    %653 = vmatpush1.bf16.msra.mxu0 0
    %654 = vmatprep.subr.bf16.mxu0 0
    %655 = vmatpush1.bf16.msra.mxu0 0
    %656 = vmatprep.subr.bf16.mxu0 0
    %657 = vmatpush1.bf16.msra.mxu0 %v638
    %658 = vmatprep.subr.bf16.mxu0 0
    %659 = vmatpush1.bf16.msra.mxu0 %v637
    %660 = vmatprep.subr.bf16.mxu0 0
    %661 = vmatpush2.bf16.msra.mxu0 0
    %662 = vmatprep.subr.bf16.mxu0 0
    %663 = vmatpush2.bf16.msra.mxu0 0
    %664 = vmatprep.subr.bf16.mxu0 0
    %665 = vmatpush2.bf16.msra.mxu0 0
    %666 = vmatprep.subr.bf16.mxu0 0
    %667 = vmatpush2.bf16.msra.mxu0 0
    %668 = vmatprep.subr.bf16.mxu0 0
    %669 = vmatpush2.bf16.msra.mxu0 0
    %670 = vmatprep.subr.bf16.mxu0 0
    %671 = vmatpush2.bf16.msra.mxu0 0
    %672 = vmatprep.subr.bf16.mxu0 0
    %673 = vmatpush2.bf16.msra.mxu0 0
    %674 = vmatprep.subr.bf16.mxu0 0
    %675 = vmatpush2.bf16.msra.mxu0 0
    %676 = vmatprep.mubr.bf16.mxu0 0
    %677 = vmatmul.mubr.bf16.gmra.mxu0 %v642
    %v678 = vpop.f32.mrf.mxu0
    %v679 = vadd.f32 %v628, %v678
    %v680 = vpop.f32.mrf.mxu0
    %v681 = vpop.f32.mrf.mxu0
    %v682 = vadd.f32 %v628, %v681
    %v683 = vpop.f32.mrf.mxu0
    %684 = vdwg.mxu0
    %687 = vrot.lane.b32.xlu0 %v679, 120
    %v688 = vpop.permute.xlu0 %687
    %689 = vrot.lane.b32.xlu0 %v682, 120
    %v690 = vpop.permute.xlu0 %689
    %693 = vrot.lane.b32.xlu0 %v679, 112
    %v694 = vpop.permute.xlu0 %693
    %695 = vrot.lane.b32.xlu0 %v682, 112
    %v696 = vpop.permute.xlu0 %695
    %699 = vrot.lane.b32.xlu0 %v679, 104
    %v700 = vpop.permute.xlu0 %699
    %701 = vrot.lane.b32.xlu0 %v682, 104
    %v702 = vpop.permute.xlu0 %701
    %v705 = vpack.c.bf16 %v682, %v679
    %v706 = vpack.c.bf16 %v690, %v688
    %v707 = vpack.c.bf16 %v696, %v694
    %v708 = vpack.c.bf16 %v702, %v700
    %713 = vrot.lane.b32.xlu0 %v705, 96
    %v714 = vpop.permute.xlu0 %713
    %715 = vrot.lane.b32.xlu0 %v706, 96
    %v716 = vpop.permute.xlu0 %715
    %717 = vrot.lane.b32.xlu0 %v707, 96
    %v718 = vpop.permute.xlu0 %717
    %719 = vrot.lane.b32.xlu0 %v708, 96
    %v720 = vpop.permute.xlu0 %719
    %vm721 = vcmask 64512
    %v723 = vsel %vm721, %v705, 0
    %v726 = vsel %vm721, %v706, 0
    %v729 = vsel %vm721, %v707, 0
    %v732 = vsel %vm721, %v708, 0
    %v735 = vsel %vm721, %v714, 0
    %v738 = vsel %vm721, %v716, 0
    %v741 = vsel %vm721, %v718, 0
    %v744 = vsel %vm721, %v720, 0
    %746 = vmatprep.subr.bf16.mxu0 0
    %747 = vmatpush1.bf16.xpose.msra.mxu0 0
    %748 = vmatprep.subr.bf16.mxu0 0
    %749 = vmatpush1.bf16.xpose.msra.mxu0 0
    %750 = vmatprep.subr.bf16.mxu0 0
    %751 = vmatpush1.bf16.xpose.msra.mxu0 0
    %752 = vmatprep.subr.bf16.mxu0 0
    %753 = vmatpush1.bf16.xpose.msra.mxu0 0
    %754 = vmatprep.subr.bf16.mxu0 0
    %755 = vmatpush1.bf16.xpose.msra.mxu0 %v744
    %756 = vmatprep.subr.bf16.mxu0 0
    %757 = vmatpush1.bf16.xpose.msra.mxu0 %v741
    %758 = vmatprep.subr.bf16.mxu0 0
    %759 = vmatpush1.bf16.xpose.msra.mxu0 %v738
    %760 = vmatprep.subr.bf16.mxu0 0
    %761 = vmatpush1.bf16.xpose.msra.mxu0 %v735
    %762 = vmatprep.subr.bf16.mxu0 0
    %763 = vmatpush2.bf16.xpose.msra.mxu0 0
    %764 = vmatprep.subr.bf16.mxu0 0
    %765 = vmatpush2.bf16.xpose.msra.mxu0 0
    %766 = vmatprep.subr.bf16.mxu0 0
    %767 = vmatpush2.bf16.xpose.msra.mxu0 0
    %768 = vmatprep.subr.bf16.mxu0 0
    %769 = vmatpush2.bf16.xpose.msra.mxu0 0
    %770 = vmatprep.subr.bf16.mxu0 0
    %771 = vmatpush2.bf16.xpose.msra.mxu0 0
    %772 = vmatprep.subr.bf16.mxu0 0
    %773 = vmatpush2.bf16.xpose.msra.mxu0 0
    %774 = vmatprep.subr.bf16.mxu0 0
    %775 = vmatpush2.bf16.xpose.msra.mxu0 0
    %776 = vmatprep.subr.bf16.mxu0 0
    %777 = vmatpush2.bf16.xpose.msra.mxu0 0
    %778 = vmatprep.mubr.bf16.mxu0 0
    %779 = vmatmul.mubr.bf16.gmra.mxu0 %v723
    %v780 = vpop.f32.mrf.mxu0
    %v781 = vadd.f32 0.0, %v780
    %v782 = vpop.f32.mrf.mxu0
    %v783 = vpop.f32.mrf.mxu0
    %v784 = vadd.f32 0.0, %v783
    %v785 = vpop.f32.mrf.mxu0
    %786 = vmatprep.mubr.bf16.mxu0 0
    %787 = vmatmul.mubr.bf16.gmra.mxu0 %v726
    %v788 = vpop.f32.mrf.mxu0
    %v789 = vadd.f32 0.0, %v788
    %v790 = vpop.f32.mrf.mxu0
    %v791 = vpop.f32.mrf.mxu0
    %v792 = vadd.f32 0.0, %v791
    %v793 = vpop.f32.mrf.mxu0
    %794 = vmatprep.mubr.bf16.mxu0 0
    %795 = vmatmul.mubr.bf16.gmra.mxu0 %v729
    %v796 = vpop.f32.mrf.mxu0
    %v797 = vadd.f32 0.0, %v796
    %v798 = vpop.f32.mrf.mxu0
    %v799 = vpop.f32.mrf.mxu0
    %v800 = vadd.f32 0.0, %v799
    %v801 = vpop.f32.mrf.mxu0
    %802 = vmatprep.mubr.bf16.mxu0 0
    %803 = vmatmul.mubr.bf16.gmra.mxu0 %v732
    %v804 = vpop.f32.mrf.mxu0
    %v805 = vadd.f32 0.0, %v804
    %v806 = vpop.f32.mrf.mxu0
    %v807 = vpop.f32.mrf.mxu0
    %v808 = vadd.f32 0.0, %v807
    %v809 = vpop.f32.mrf.mxu0
    %810 = vdwg.mxu0
    %v811 = vmul.f32 %v781, 0.35355338
    %v812 = vmul.f32 %v784, 0.35355338
    %v813 = vmul.f32 %v789, 0.35355338
    %v814 = vmul.f32 %v792, 0.35355338
    %v815 = vmul.f32 %v797, 0.35355338
    %v816 = vmul.f32 %v800, 0.35355338
    %v817 = vmul.f32 %v805, 0.35355338
    %v818 = vmul.f32 %v808, 0.35355338
    %v819 = vadd.f32 %v811, %v564
    %v820 = vadd.f32 %v812, %v565
    %v821 = vadd.f32 %v813, %v566
    %v822 = vadd.f32 %v814, %v567
    %v823 = vadd.f32 %v815, %v568
    %v824 = vadd.f32 %v816, %v569
    %v825 = vadd.f32 %v817, %v570
    %v826 = vadd.f32 %v818, %v571
    %vm827 = vcmask 523264
    %v828 = vsel %vm827, %v819, -inf
    %829 = vmax.xlane.f32.xlu0 %v828
    %v830 = vpop.xlane.xlu0 %829
    %v831 = vsel %vm827, %v820, -inf
    %832 = vmax.xlane.f32.xlu0 %v831
    %v833 = vpop.xlane.xlu0 %832
    %v834 = vsel %vm827, %v821, -inf
    %835 = vmax.xlane.f32.xlu0 %v834
    %v836 = vpop.xlane.xlu0 %835
    %v837 = vsel %vm827, %v822, -inf
    %838 = vmax.xlane.f32.xlu0 %v837
    %v839 = vpop.xlane.xlu0 %838
    %v840 = vsel %vm827, %v823, -inf
    %841 = vmax.xlane.f32.xlu0 %v840
    %v842 = vpop.xlane.xlu0 %841
    %v843 = vsel %vm827, %v824, -inf
    %844 = vmax.xlane.f32.xlu0 %v843
    %v845 = vpop.xlane.xlu0 %844
    %v846 = vsel %vm827, %v825, -inf
    %847 = vmax.xlane.f32.xlu0 %v846
    %v848 = vpop.xlane.xlu0 %847
    %v849 = vsel %vm827, %v826, -inf
    %850 = vmax.xlane.f32.xlu0 %v849
    %v851 = vpop.xlane.xlu0 %850
    %v852 = vsub.f32 %v819, %v830
    %v853 = vsub.f32 %v820, %v833
    %v854 = vsub.f32 %v821, %v836
    %v855 = vsub.f32 %v822, %v839
    %v856 = vsub.f32 %v823, %v842
    %v857 = vsub.f32 %v824, %v845
    %v858 = vsub.f32 %v825, %v848
    %v859 = vsub.f32 %v826, %v851
    %v860 = vmul.f32 %v852, 1.442695
    %v861 = vpow.pop %v860
    %v862 = vmul.f32 %v853, 1.442695
    %v863 = vpow.pop %v862
    %v864 = vmul.f32 %v854, 1.442695
    %v865 = vpow.pop %v864
    %v866 = vmul.f32 %v855, 1.442695
    %v867 = vpow.pop %v866
    %v868 = vmul.f32 %v856, 1.442695
    %v869 = vpow.pop %v868
    %v870 = vmul.f32 %v857, 1.442695
    %v871 = vpow.pop %v870
    %v872 = vmul.f32 %v858, 1.442695
    %v873 = vpow.pop %v872
    %v874 = vmul.f32 %v859, 1.442695
    %v875 = vpow.pop %v874
    %v876 = vsel %vm827, %v861, 0.0
    %877 = vadd.xlane.f32.xlu0 %v876
    %v878 = vpop.xlane.xlu0 %877
    %v879 = vsel %vm827, %v863, 0.0
    %880 = vadd.xlane.f32.xlu0 %v879
    %v881 = vpop.xlane.xlu0 %880
    %v882 = vsel %vm827, %v865, 0.0
    %883 = vadd.xlane.f32.xlu0 %v882
    %v884 = vpop.xlane.xlu0 %883
    %v885 = vsel %vm827, %v867, 0.0
    %886 = vadd.xlane.f32.xlu0 %v885
    %v887 = vpop.xlane.xlu0 %886
    %v888 = vsel %vm827, %v869, 0.0
    %889 = vadd.xlane.f32.xlu0 %v888
    %v890 = vpop.xlane.xlu0 %889
    %v891 = vsel %vm827, %v871, 0.0
    %892 = vadd.xlane.f32.xlu0 %v891
    %v893 = vpop.xlane.xlu0 %892
    %v894 = vsel %vm827, %v873, 0.0
    %895 = vadd.xlane.f32.xlu0 %v894
    %v896 = vpop.xlane.xlu0 %895
    %v897 = vsel %vm827, %v875, 0.0
    %898 = vadd.xlane.f32.xlu0 %v897
    %v899 = vpop.xlane.xlu0 %898
    %v900 = vrcp.pop %v878
    %v901 = vrcp.pop %v881
    %v902 = vrcp.pop %v884
    %v903 = vrcp.pop %v887
    %v904 = vrcp.pop %v890
    %v905 = vrcp.pop %v893
    %v906 = vrcp.pop %v896
    %v907 = vrcp.pop %v899
    %v908 = vmul.f32 %v861, %v900
    %v909 = vmul.f32 %v863, %v901
    %v910 = vmul.f32 %v865, %v902
    %v911 = vmul.f32 %v867, %v903
    %v912 = vmul.f32 %v869, %v904
    %v913 = vmul.f32 %v871, %v905
    %v914 = vmul.f32 %v873, %v906
    %v915 = vmul.f32 %v875, %v907
    %v916 = vpack.c.bf16 %v909, %v908
    %v917 = vpack.c.bf16 %v911, %v910
    %v918 = vpack.c.bf16 %v913, %v912
    %v919 = vpack.c.bf16 %v915, %v914
    %920 = vrot.lane.b32.xlu0 %v705, 64
    %v921 = vpop.permute.xlu0 %920
    %922 = vrot.lane.b32.xlu0 %v706, 64
    %v923 = vpop.permute.xlu0 %922
    %924 = vrot.lane.b32.xlu0 %v707, 64
    %v925 = vpop.permute.xlu0 %924
    %926 = vrot.lane.b32.xlu0 %v708, 64
    %v927 = vpop.permute.xlu0 %926
    %v933 = vsel %vm827, %v916, 0
    %v936 = vsel %vm827, %v917, 0
    %v939 = vsel %vm827, %v918, 0
    %v942 = vsel %vm827, %v919, 0
    %944 = vmatprep.subr.bf16.mxu0 0
    %945 = vmatpush1.bf16.msra.mxu0 0
    %946 = vmatprep.subr.bf16.mxu0 0
    %947 = vmatpush1.bf16.msra.mxu0 0
    %948 = vmatprep.subr.bf16.mxu0 0
    %949 = vmatpush1.bf16.msra.mxu0 0
    %950 = vmatprep.subr.bf16.mxu0 0
    %951 = vmatpush1.bf16.msra.mxu0 0
    %952 = vmatprep.subr.bf16.mxu0 0
    %953 = vmatpush1.bf16.msra.mxu0 %v927
    %954 = vmatprep.subr.bf16.mxu0 0
    %955 = vmatpush1.bf16.msra.mxu0 %v925
    %956 = vmatprep.subr.bf16.mxu0 0
    %957 = vmatpush1.bf16.msra.mxu0 %v923
    %958 = vmatprep.subr.bf16.mxu0 0
    %959 = vmatpush1.bf16.msra.mxu0 %v921
    %960 = vmatprep.subr.bf16.mxu0 0
    %961 = vmatpush2.bf16.msra.mxu0 0
    %962 = vmatprep.subr.bf16.mxu0 0
    %963 = vmatpush2.bf16.msra.mxu0 0
    %964 = vmatprep.subr.bf16.mxu0 0
    %965 = vmatpush2.bf16.msra.mxu0 0
    %966 = vmatprep.subr.bf16.mxu0 0
    %967 = vmatpush2.bf16.msra.mxu0 0
    %968 = vmatprep.subr.bf16.mxu0 0
    %969 = vmatpush2.bf16.msra.mxu0 0
    %970 = vmatprep.subr.bf16.mxu0 0
    %971 = vmatpush2.bf16.msra.mxu0 0
    %972 = vmatprep.subr.bf16.mxu0 0
    %973 = vmatpush2.bf16.msra.mxu0 0
    %974 = vmatprep.subr.bf16.mxu0 0
    %975 = vmatpush2.bf16.msra.mxu0 0
    %976 = vmatprep.mubr.bf16.mxu0 0
    %977 = vmatmul.mubr.bf16.gmra.mxu0 %v933
    %v978 = vpop.f32.mrf.mxu0
    %v979 = vadd.f32 0.0, %v978
    %v980 = vpop.f32.mrf.mxu0
    %v981 = vpop.f32.mrf.mxu0
    %v982 = vadd.f32 0.0, %v981
    %v983 = vpop.f32.mrf.mxu0
    %984 = vmatprep.mubr.bf16.mxu0 0
    %985 = vmatmul.mubr.bf16.gmra.mxu0 %v936
    %v986 = vpop.f32.mrf.mxu0
    %v987 = vadd.f32 0.0, %v986
    %v988 = vpop.f32.mrf.mxu0
    %v989 = vpop.f32.mrf.mxu0
    %v990 = vadd.f32 0.0, %v989
    %v991 = vpop.f32.mrf.mxu0
    %992 = vmatprep.mubr.bf16.mxu0 0
    %993 = vmatmul.mubr.bf16.gmra.mxu0 %v939
    %v994 = vpop.f32.mrf.mxu0
    %v995 = vadd.f32 0.0, %v994
    %v996 = vpop.f32.mrf.mxu0
    %v997 = vpop.f32.mrf.mxu0
    %v998 = vadd.f32 0.0, %v997
    %v999 = vpop.f32.mrf.mxu0
    %1000 = vmatprep.mubr.bf16.mxu0 0
    %1001 = vmatmul.mubr.bf16.gmra.mxu0 %v942
    %v1002 = vpop.f32.mrf.mxu0
    %v1003 = vadd.f32 0.0, %v1002
    %v1004 = vpop.f32.mrf.mxu0
    %v1005 = vpop.f32.mrf.mxu0
    %v1006 = vadd.f32 0.0, %v1005
    %v1007 = vpop.f32.mrf.mxu0
    %1008 = vdwg.mxu0
    %v1009 = vld [vmem:[%s1 + $0x1c0] sm:$0xf]
    %v1010 = vpack.c.bf16 %v982, %v979
    %v1011 = vld [vmem:[%s1 + $0x1c4] sm:$0xf]
    %v1012 = vpack.c.bf16 %v990, %v987
    %v1014 = vsel %vm721, %v1012, 0
    %vm1016 = vcmask 1043456
    %v1018 = vsel %vm1016, %v1011, 0
    %1020 = vmatprep.subr.bf16.mxu0 0
    %1021 = vmatpush1.bf16.msra.mxu0 0
    %1022 = vmatprep.subr.bf16.mxu0 0
    %1023 = vmatpush1.bf16.msra.mxu0 0
    %1024 = vmatprep.subr.bf16.mxu0 0
    %1025 = vmatpush1.bf16.msra.mxu0 0
    %1026 = vmatprep.subr.bf16.mxu0 0
    %1027 = vmatpush1.bf16.msra.mxu0 0
    %1028 = vmatprep.subr.bf16.mxu0 0
    %1029 = vmatpush1.bf16.msra.mxu0 0
    %1030 = vmatprep.subr.bf16.mxu0 0
    %1031 = vmatpush1.bf16.msra.mxu0 0
    %1032 = vmatprep.subr.bf16.mxu0 0
    %1033 = vmatpush1.bf16.msra.mxu0 0
    %1034 = vmatprep.subr.bf16.mxu0 0
    %1035 = vmatpush1.bf16.msra.mxu0 %v1018
    %1036 = vmatprep.subr.bf16.mxu0 0
    %1037 = vmatpush2.bf16.msra.mxu0 0
    %1038 = vmatprep.subr.bf16.mxu0 0
    %1039 = vmatpush2.bf16.msra.mxu0 0
    %1040 = vmatprep.subr.bf16.mxu0 0
    %1041 = vmatpush2.bf16.msra.mxu0 0
    %1042 = vmatprep.subr.bf16.mxu0 0
    %1043 = vmatpush2.bf16.msra.mxu0 0
    %1044 = vmatprep.subr.bf16.mxu0 0
    %1045 = vmatpush2.bf16.msra.mxu0 0
    %1046 = vmatprep.subr.bf16.mxu0 0
    %1047 = vmatpush2.bf16.msra.mxu0 0
    %1048 = vmatprep.subr.bf16.mxu0 0
    %1049 = vmatpush2.bf16.msra.mxu0 0
    %1050 = vmatprep.subr.bf16.mxu0 0
    %1051 = vmatpush2.bf16.msra.mxu0 0
    %1052 = vmatprep.mubr.bf16.mxu0 0
    %1053 = vmatmul.mubr.bf16.gmra.mxu0 %v1014
    %v1054 = vpop.f32.mrf.mxu0
    %v1055 = vadd.f32 0.0, %v1054
    %v1056 = vpop.f32.mrf.mxu0
    %v1057 = vpop.f32.mrf.mxu0
    %v1058 = vadd.f32 0.0, %v1057
    %v1059 = vpop.f32.mrf.mxu0
    %1060 = vdwg.mxu0
    %v1062 = vsel %vm721, %v1010, 0
    %v1065 = vsel %vm1016, %v1009, 0
    %1067 = vmatprep.subr.bf16.mxu0 0
    %1068 = vmatpush1.bf16.msra.mxu0 0
    %1069 = vmatprep.subr.bf16.mxu0 0
    %1070 = vmatpush1.bf16.msra.mxu0 0
    %1071 = vmatprep.subr.bf16.mxu0 0
    %1072 = vmatpush1.bf16.msra.mxu0 0
    %1073 = vmatprep.subr.bf16.mxu0 0
    %1074 = vmatpush1.bf16.msra.mxu0 0
    %1075 = vmatprep.subr.bf16.mxu0 0
    %1076 = vmatpush1.bf16.msra.mxu0 0
    %1077 = vmatprep.subr.bf16.mxu0 0
    %1078 = vmatpush1.bf16.msra.mxu0 0
    %1079 = vmatprep.subr.bf16.mxu0 0
    %1080 = vmatpush1.bf16.msra.mxu0 0
    %1081 = vmatprep.subr.bf16.mxu0 0
    %1082 = vmatpush1.bf16.msra.mxu0 %v1065
    %1083 = vmatprep.subr.bf16.mxu0 0
    %1084 = vmatpush2.bf16.msra.mxu0 0
    %1085 = vmatprep.subr.bf16.mxu0 0
    %1086 = vmatpush2.bf16.msra.mxu0 0
    %1087 = vmatprep.subr.bf16.mxu0 0
    %1088 = vmatpush2.bf16.msra.mxu0 0
    %1089 = vmatprep.subr.bf16.mxu0 0
    %1090 = vmatpush2.bf16.msra.mxu0 0
    %1091 = vmatprep.subr.bf16.mxu0 0
    %1092 = vmatpush2.bf16.msra.mxu0 0
    %1093 = vmatprep.subr.bf16.mxu0 0
    %1094 = vmatpush2.bf16.msra.mxu0 0
    %1095 = vmatprep.subr.bf16.mxu0 0
    %1096 = vmatpush2.bf16.msra.mxu0 0
    %1097 = vmatprep.subr.bf16.mxu0 0
    %1098 = vmatpush2.bf16.msra.mxu0 0
    %1099 = vmatprep.mubr.bf16.mxu0 0
    %1100 = vmatmul.mubr.bf16.gmra.mxu0 %v1062
    %v1101 = vpop.f32.mrf.mxu0
    %v1102 = vadd.f32 %v1055, %v1101
    %v1103 = vpop.f32.mrf.mxu0
    %v1104 = vpop.f32.mrf.mxu0
    %v1105 = vadd.f32 %v1058, %v1104
    %v1106 = vpop.f32.mrf.mxu0
    %1107 = vdwg.mxu0
    %v1108 = vld [vmem:[%s1 + $0x1c8] sm:$0xf]
    %v1109 = vpack.c.bf16 %v998, %v995
    %v1111 = vsel %vm721, %v1109, 0
    %v1114 = vsel %vm1016, %v1108, 0
    %1116 = vmatprep.subr.bf16.mxu0 0
    %1117 = vmatpush1.bf16.msra.mxu0 0
    %1118 = vmatprep.subr.bf16.mxu0 0
    %1119 = vmatpush1.bf16.msra.mxu0 0
    %1120 = vmatprep.subr.bf16.mxu0 0
    %1121 = vmatpush1.bf16.msra.mxu0 0
    %1122 = vmatprep.subr.bf16.mxu0 0
    %1123 = vmatpush1.bf16.msra.mxu0 0
    %1124 = vmatprep.subr.bf16.mxu0 0
    %1125 = vmatpush1.bf16.msra.mxu0 0
    %1126 = vmatprep.subr.bf16.mxu0 0
    %1127 = vmatpush1.bf16.msra.mxu0 0
    %1128 = vmatprep.subr.bf16.mxu0 0
    %1129 = vmatpush1.bf16.msra.mxu0 0
    %1130 = vmatprep.subr.bf16.mxu0 0
    %1131 = vmatpush1.bf16.msra.mxu0 %v1114
    %1132 = vmatprep.subr.bf16.mxu0 0
    %1133 = vmatpush2.bf16.msra.mxu0 0
    %1134 = vmatprep.subr.bf16.mxu0 0
    %1135 = vmatpush2.bf16.msra.mxu0 0
    %1136 = vmatprep.subr.bf16.mxu0 0
    %1137 = vmatpush2.bf16.msra.mxu0 0
    %1138 = vmatprep.subr.bf16.mxu0 0
    %1139 = vmatpush2.bf16.msra.mxu0 0
    %1140 = vmatprep.subr.bf16.mxu0 0
    %1141 = vmatpush2.bf16.msra.mxu0 0
    %1142 = vmatprep.subr.bf16.mxu0 0
    %1143 = vmatpush2.bf16.msra.mxu0 0
    %1144 = vmatprep.subr.bf16.mxu0 0
    %1145 = vmatpush2.bf16.msra.mxu0 0
    %1146 = vmatprep.subr.bf16.mxu0 0
    %1147 = vmatpush2.bf16.msra.mxu0 0
    %1148 = vmatprep.mubr.bf16.mxu0 0
    %1149 = vmatmul.mubr.bf16.gmra.mxu0 %v1111
    %v1150 = vpop.f32.mrf.mxu0
    %v1151 = vadd.f32 0.0, %v1150
    %v1152 = vpop.f32.mrf.mxu0
    %v1153 = vpop.f32.mrf.mxu0
    %v1154 = vadd.f32 0.0, %v1153
    %v1155 = vpop.f32.mrf.mxu0
    %1156 = vdwg.mxu0
    %v1157 = vadd.f32 %v1102, %v1151
    %v1158 = vadd.f32 %v1105, %v1154
    %v1159 = vld [vmem:[%s1 + $0x1cc] sm:$0xf]
    %v1160 = vpack.c.bf16 %v1006, %v1003
    %v1162 = vsel %vm721, %v1160, 0
    %v1165 = vsel %vm1016, %v1159, 0
    %1167 = vmatprep.subr.bf16.mxu0 0
    %1168 = vmatpush1.bf16.msra.mxu0 0
    %1169 = vmatprep.subr.bf16.mxu0 0
    %1170 = vmatpush1.bf16.msra.mxu0 0
    %1171 = vmatprep.subr.bf16.mxu0 0
    %1172 = vmatpush1.bf16.msra.mxu0 0
    %1173 = vmatprep.subr.bf16.mxu0 0
    %1174 = vmatpush1.bf16.msra.mxu0 0
    %1175 = vmatprep.subr.bf16.mxu0 0
    %1176 = vmatpush1.bf16.msra.mxu0 0
    %1177 = vmatprep.subr.bf16.mxu0 0
    %1178 = vmatpush1.bf16.msra.mxu0 0
    %1179 = vmatprep.subr.bf16.mxu0 0
    %1180 = vmatpush1.bf16.msra.mxu0 0
    %1181 = vmatprep.subr.bf16.mxu0 0
    %1182 = vmatpush1.bf16.msra.mxu0 %v1165
    %1183 = vmatprep.subr.bf16.mxu0 0
    %1184 = vmatpush2.bf16.msra.mxu0 0
    %1185 = vmatprep.subr.bf16.mxu0 0
    %1186 = vmatpush2.bf16.msra.mxu0 0
    %1187 = vmatprep.subr.bf16.mxu0 0
    %1188 = vmatpush2.bf16.msra.mxu0 0
    %1189 = vmatprep.subr.bf16.mxu0 0
    %1190 = vmatpush2.bf16.msra.mxu0 0
    %1191 = vmatprep.subr.bf16.mxu0 0
    %1192 = vmatpush2.bf16.msra.mxu0 0
    %1193 = vmatprep.subr.bf16.mxu0 0
    %1194 = vmatpush2.bf16.msra.mxu0 0
    %1195 = vmatprep.subr.bf16.mxu0 0
    %1196 = vmatpush2.bf16.msra.mxu0 0
    %1197 = vmatprep.subr.bf16.mxu0 0
    %1198 = vmatpush2.bf16.msra.mxu0 0
    %1199 = vmatprep.mubr.bf16.mxu0 0
    %1200 = vmatmul.mubr.bf16.gmra.mxu0 %v1162
    %v1201 = vpop.f32.mrf.mxu0
    %v1202 = vadd.f32 0.0, %v1201
    %v1203 = vpop.f32.mrf.mxu0
    %v1204 = vpop.f32.mrf.mxu0
    %v1205 = vadd.f32 0.0, %v1204
    %v1206 = vpop.f32.mrf.mxu0
    %1207 = vdwg.mxu0
    %v1208 = vadd.f32 %v1157, %v1202
    %v1209 = vadd.f32 %v1158, %v1205
    %v1210 = vadd.f32 %v558, %v1208
    %v1211 = vadd.f32 %v561, %v1209
    %v1212 = vlaneseq
    %v1213 = vshrl.u32 %v1212, 7
    %v1214 = vsub.s32 0, %v1213
    %v1215 = vrot.slane %v575, %v1214
    %v1216 = vadd.f32 %v1210, %v1215
    %v1217 = vadd.f32 %v1211, %v1215
    %v1218 = vsel %vm580, %v1216, 0.0
    %1219 = vadd.xlane.f32.xlu0 %v1218
    %v1220 = vpop.xlane.xlu0 %1219
    %v1221 = vsel %vm580, %v1217, 0.0
    %1222 = vadd.xlane.f32.xlu0 %v1221
    %v1223 = vpop.xlane.xlu0 %1222
    %v1224 = vmul.f32 %v1220, %v587
    %v1225 = vmul.f32 %v1223, %v587
    %v1226 = vsub.f32 %v1216, %v1224
    %v1227 = vsub.f32 %v1217, %v1225
    %v1228 = vmul.f32 %v1226, %v1226
    %v1229 = vmul.f32 %v1227, %v1227
    %v1230 = vsel %vm580, %v1228, 0.0
    %1231 = vadd.xlane.f32.xlu0 %v1230
    %v1232 = vpop.xlane.xlu0 %1231
    %v1233 = vsel %vm580, %v1229, 0.0
    %1234 = vadd.xlane.f32.xlu0 %v1233
    %v1235 = vpop.xlane.xlu0 %1234
    %v1236 = vmul.f32 %v1232, %v587
    %v1237 = vmul.f32 %v1235, %v587
    %v1238 = vadd.f32 %v1236, 1e-06
    %v1239 = vadd.f32 %v1237, 1e-06
    %v1240 = vrsqrt.pop %v1238
    %v1241 = vrsqrt.pop %v1239
    %v1242 = vmul.f32 %v1226, %v1240
    %v1243 = vmul.f32 %v1227, %v1241
    %v1244 = vlaneseq
    %v1245 = vshrl.u32 %v1244, 7
    %v1246 = vsub.s32 0, %v1245
    %v1247 = vrot.slane %v576, %v1246
    %v1248 = vmul.f32 %v1242, %v1247
    %v1249 = vmul.f32 %v1243, %v1247
    %v1250 = vlaneseq
    %v1251 = vshrl.u32 %v1250, 7
    %v1252 = vsub.s32 0, %v1251
    %v1253 = vrot.slane %v577, %v1252
    %v1254 = vadd.f32 %v1248, %v1253
    %v1255 = vadd.f32 %v1249, %v1253
    %v1256 = vpack.c.bf16 %v1255, %v1254
    %v1257 = vld [vmem:[%s1 + $0x190] sm:$0xf]
    %v1258 = vld [vmem:[%s1 + $0x194] sm:$0xf]
    %v1259 = vld [vmem:[%s1 + $0x198] sm:$0xf]
    %v1260 = vld [vmem:[%s1 + $0x19c] sm:$0xf]
    %v1261 = vlaneseq
    %v1262 = vshrl.u32 %v1261, 7
    %v1263 = vsub.s32 0, %v1262
    %v1264 = vrot.slane %v578, %v1263
    %v1269 = vunpack.c.l.b16 %v1257
    %v1270 = vunpack.c.l.b16 %v1258
    %v1271 = vunpack.c.l.b16 %v1259
    %v1272 = vunpack.c.l.b16 %v1260
    %v1273 = vpack.c.b16 %v1270, %v1269
    %v1274 = vpack.c.b16 %v1272, %v1271
    %v1278 = vsel %vm580, %v1256, 0
    %1280 = vmatprep.subr.bf16.mxu0 0
    %1281 = vmatpush1.bf16.msra.mxu0 0
    %1282 = vmatprep.subr.bf16.mxu0 0
    %1283 = vmatpush1.bf16.msra.mxu0 0
    %1284 = vmatprep.subr.bf16.mxu0 0
    %1285 = vmatpush1.bf16.msra.mxu0 0
    %1286 = vmatprep.subr.bf16.mxu0 0
    %1287 = vmatpush1.bf16.msra.mxu0 0
    %1288 = vmatprep.subr.bf16.mxu0 0
    %1289 = vmatpush1.bf16.msra.mxu0 0
    %1290 = vmatprep.subr.bf16.mxu0 0
    %1291 = vmatpush1.bf16.msra.mxu0 0
    %1292 = vmatprep.subr.bf16.mxu0 0
    %1293 = vmatpush1.bf16.msra.mxu0 %v1274
    %1294 = vmatprep.subr.bf16.mxu0 0
    %1295 = vmatpush1.bf16.msra.mxu0 %v1273
    %1296 = vmatprep.subr.bf16.mxu0 0
    %1297 = vmatpush2.bf16.msra.mxu0 0
    %1298 = vmatprep.subr.bf16.mxu0 0
    %1299 = vmatpush2.bf16.msra.mxu0 0
    %1300 = vmatprep.subr.bf16.mxu0 0
    %1301 = vmatpush2.bf16.msra.mxu0 0
    %1302 = vmatprep.subr.bf16.mxu0 0
    %1303 = vmatpush2.bf16.msra.mxu0 0
    %1304 = vmatprep.subr.bf16.mxu0 0
    %1305 = vmatpush2.bf16.msra.mxu0 0
    %1306 = vmatprep.subr.bf16.mxu0 0
    %1307 = vmatpush2.bf16.msra.mxu0 0
    %1308 = vmatprep.subr.bf16.mxu0 0
    %1309 = vmatpush2.bf16.msra.mxu0 0
    %1310 = vmatprep.subr.bf16.mxu0 0
    %1311 = vmatpush2.bf16.msra.mxu0 0
    %1312 = vmatprep.mubr.bf16.mxu0 0
    %1313 = vmatmul.mubr.bf16.gmra.mxu0 %v1278
    %v1314 = vpop.f32.mrf.mxu0
    %v1315 = vadd.f32 %v1264, %v1314
    %v1316 = vpop.f32.mrf.mxu0
    %v1317 = vpop.f32.mrf.mxu0
    %v1318 = vadd.f32 %v1264, %v1317
    %v1319 = vpop.f32.mrf.mxu0
    %1320 = vdwg.mxu0
    %v1321 = vmul.f32 %v1315, 0.5
    %v1322 = vmul.f32 %v1318, 0.5
    %v1323 = vmul.f32 %v1315, %v1315
    %v1324 = vmul.f32 %v1318, %v1318
    %v1325 = vmul.f32 %v1323, %v1315
    %v1326 = vmul.f32 %v1324, %v1318
    %v1327 = vmul.f32 %v1325, 0.044715
    %v1328 = vmul.f32 %v1326, 0.044715
    %v1329 = vadd.f32 %v1315, %v1327
    %v1330 = vadd.f32 %v1318, %v1328
    %v1331 = vmul.f32 %v1329, 0.7978846
    %v1332 = vmul.f32 %v1330, 0.7978846
    %v1333 = vtanh.pop %v1331
    %v1334 = vtanh.pop %v1332
    %v1335 = vadd.f32 %v1333, 1.0
    %v1336 = vadd.f32 %v1334, 1.0
    %v1337 = vmul.f32 %v1321, %v1335
    %v1338 = vmul.f32 %v1322, %v1336
    %v1339 = vpack.c.bf16 %v1338, %v1337
    %v1340 = vld [vmem:[%s1 + $0x1a0] sm:$0xf]
    %v1341 = vld [vmem:[%s1 + $0x1a4] sm:$0xf]
    %v1342 = vld [vmem:[%s1 + $0x1a8] sm:$0xf]
    %v1343 = vld [vmem:[%s1 + $0x1ac] sm:$0xf]
    %v1344 = vld [vmem:[%s1 + $0x1b0] sm:$0xf]
    %v1345 = vld [vmem:[%s1 + $0x1b4] sm:$0xf]
    %v1346 = vld [vmem:[%s1 + $0x1b8] sm:$0xf]
    %v1347 = vld [vmem:[%s1 + $0x1bc] sm:$0xf]
    %v1348 = vlaneseq
    %v1349 = vshrl.u32 %v1348, 7
    %v1350 = vsub.s32 0, %v1349
    %v1351 = vrot.slane %v579, %v1350
    %v1360 = vunpack.c.l.b16 %v1340
    %v1361 = vunpack.c.l.b16 %v1341
    %v1362 = vunpack.c.l.b16 %v1342
    %v1363 = vunpack.c.l.b16 %v1343
    %v1364 = vunpack.c.l.b16 %v1344
    %v1365 = vunpack.c.l.b16 %v1345
    %v1366 = vunpack.c.l.b16 %v1346
    %v1367 = vunpack.c.l.b16 %v1347
    %v1368 = vpack.c.b16 %v1361, %v1360
    %v1369 = vpack.c.b16 %v1363, %v1362
    %v1370 = vpack.c.b16 %v1365, %v1364
    %v1371 = vpack.c.b16 %v1367, %v1366
    %v1377 = vsel %vm827, %v1339, 0
    %1379 = vmatprep.subr.bf16.mxu0 0
    %1380 = vmatpush1.bf16.msra.mxu0 0
    %1381 = vmatprep.subr.bf16.mxu0 0
    %1382 = vmatpush1.bf16.msra.mxu0 0
    %1383 = vmatprep.subr.bf16.mxu0 0
    %1384 = vmatpush1.bf16.msra.mxu0 0
    %1385 = vmatprep.subr.bf16.mxu0 0
    %1386 = vmatpush1.bf16.msra.mxu0 0
    %1387 = vmatprep.subr.bf16.mxu0 0
    %1388 = vmatpush1.bf16.msra.mxu0 %v1371
    %1389 = vmatprep.subr.bf16.mxu0 0
    %1390 = vmatpush1.bf16.msra.mxu0 %v1370
    %1391 = vmatprep.subr.bf16.mxu0 0
    %1392 = vmatpush1.bf16.msra.mxu0 %v1369
    %1393 = vmatprep.subr.bf16.mxu0 0
    %1394 = vmatpush1.bf16.msra.mxu0 %v1368
    %1395 = vmatprep.subr.bf16.mxu0 0
    %1396 = vmatpush2.bf16.msra.mxu0 0
    %1397 = vmatprep.subr.bf16.mxu0 0
    %1398 = vmatpush2.bf16.msra.mxu0 0
    %1399 = vmatprep.subr.bf16.mxu0 0
    %1400 = vmatpush2.bf16.msra.mxu0 0
    %1401 = vmatprep.subr.bf16.mxu0 0
    %1402 = vmatpush2.bf16.msra.mxu0 0
    %1403 = vmatprep.subr.bf16.mxu0 0
    %1404 = vmatpush2.bf16.msra.mxu0 0
    %1405 = vmatprep.subr.bf16.mxu0 0
    %1406 = vmatpush2.bf16.msra.mxu0 0
    %1407 = vmatprep.subr.bf16.mxu0 0
    %1408 = vmatpush2.bf16.msra.mxu0 0
    %1409 = vmatprep.subr.bf16.mxu0 0
    %1410 = vmatpush2.bf16.msra.mxu0 0
    %1411 = vmatprep.mubr.bf16.mxu0 0
    %1412 = vmatmul.mubr.bf16.gmra.mxu0 %v1377
    %v1413 = vpop.f32.mrf.mxu0
    %v1414 = vadd.f32 %v1351, %v1413
    %v1415 = vpop.f32.mrf.mxu0
    %v1416 = vpop.f32.mrf.mxu0
    %v1417 = vadd.f32 %v1351, %v1416
    %v1418 = vpop.f32.mrf.mxu0
    %1419 = vdwg.mxu0
    %v1420 = vadd.f32 %v1216, %v1414
    %v1421 = vadd.f32 %v1217, %v1417
    %v1422 = vld [vmem:[%s2 + $0x8] sm:$0x1]
    %v1423 = vld [vmem:[%s2 + $0x9] sm:$0x1]
    %v1424 = vld [vmem:[%s2 + $0xa] sm:$0x1]
    %v1425 = vld [vmem:[%s2 + $0xb] sm:$0x1]
    %v1426 = vld [vmem:[%s2 + $0xc] sm:$0x1]
    %v1427 = vld [vmem:[%s2 + $0xd] sm:$0x1]
    %v1428 = vld [vmem:[%s2 + $0xe] sm:$0x1]
    %v1429 = vld [vmem:[%s2 + $0xf] sm:$0x1]
    %v1430 = vsel %vm580, %v1420, 0.0
    %1431 = vadd.xlane.f32.xlu0 %v1430
    %v1432 = vpop.xlane.xlu0 %1431
    %v1433 = vsel %vm580, %v1421, 0.0
    %1434 = vadd.xlane.f32.xlu0 %v1433
    %v1435 = vpop.xlane.xlu0 %1434
    %v1436 = vmul.f32 %v1432, %v587
    %v1437 = vmul.f32 %v1435, %v587
    %v1438 = vsub.f32 %v1420, %v1436
    %v1439 = vsub.f32 %v1421, %v1437
    %v1440 = vmul.f32 %v1438, %v1438
    %v1441 = vmul.f32 %v1439, %v1439
    %v1442 = vsel %vm580, %v1440, 0.0
    %1443 = vadd.xlane.f32.xlu0 %v1442
    %v1444 = vpop.xlane.xlu0 %1443
    %v1445 = vsel %vm580, %v1441, 0.0
    %1446 = vadd.xlane.f32.xlu0 %v1445
    %v1447 = vpop.xlane.xlu0 %1446
    %v1448 = vmul.f32 %v1444, %v587
    %v1449 = vmul.f32 %v1447, %v587
    %v1450 = vadd.f32 %v1448, 1e-06
    %v1451 = vadd.f32 %v1449, 1e-06
    %v1452 = vrsqrt.pop %v1450
    %v1453 = vrsqrt.pop %v1451
    %v1454 = vmul.f32 %v1438, %v1452
    %v1455 = vmul.f32 %v1439, %v1453
    %v1456 = vlaneseq
    %v1457 = vshrl.u32 %v1456, 7
    %v1458 = vsub.s32 0, %v1457
    %v1459 = vrot.slane %v1422, %v1458
    %v1460 = vmul.f32 %v1454, %v1459
    %v1461 = vmul.f32 %v1455, %v1459
    %v1462 = vlaneseq
    %v1463 = vshrl.u32 %v1462, 7
    %v1464 = vsub.s32 0, %v1463
    %v1465 = vrot.slane %v1423, %v1464
    %v1466 = vadd.f32 %v1460, %v1465
    %v1467 = vadd.f32 %v1461, %v1465
    %v1468 = vpack.c.bf16 %v1467, %v1466
    %v1469 = vld [vmem:[%s1 + $0x1d0] sm:$0xf]
    %v1470 = vld [vmem:[%s1 + $0x1d4] sm:$0xf]
    %v1471 = vld [vmem:[%s1 + $0x1d8] sm:$0xf]
    %v1472 = vld [vmem:[%s1 + $0x1dc] sm:$0xf]
    %v1473 = vlaneseq
    %v1474 = vshrl.u32 %v1473, 7
    %v1475 = vsub.s32 0, %v1474
    %v1476 = vrot.slane %v1424, %v1475
    %v1481 = vunpack.c.l.b16 %v1469
    %v1482 = vunpack.c.l.b16 %v1470
    %v1483 = vunpack.c.l.b16 %v1471
    %v1484 = vunpack.c.l.b16 %v1472
    %v1485 = vpack.c.b16 %v1482, %v1481
    %v1486 = vpack.c.b16 %v1484, %v1483
    %v1490 = vsel %vm580, %v1468, 0
    %1492 = vmatprep.subr.bf16.mxu0 0
    %1493 = vmatpush1.bf16.msra.mxu0 0
    %1494 = vmatprep.subr.bf16.mxu0 0
    %1495 = vmatpush1.bf16.msra.mxu0 0
    %1496 = vmatprep.subr.bf16.mxu0 0
    %1497 = vmatpush1.bf16.msra.mxu0 0
    %1498 = vmatprep.subr.bf16.mxu0 0
    %1499 = vmatpush1.bf16.msra.mxu0 0
    %1500 = vmatprep.subr.bf16.mxu0 0
    %1501 = vmatpush1.bf16.msra.mxu0 0
    %1502 = vmatprep.subr.bf16.mxu0 0
    %1503 = vmatpush1.bf16.msra.mxu0 0
    %1504 = vmatprep.subr.bf16.mxu0 0
    %1505 = vmatpush1.bf16.msra.mxu0 %v1486
    %1506 = vmatprep.subr.bf16.mxu0 0
    %1507 = vmatpush1.bf16.msra.mxu0 %v1485
    %1508 = vmatprep.subr.bf16.mxu0 0
    %1509 = vmatpush2.bf16.msra.mxu0 0
    %1510 = vmatprep.subr.bf16.mxu0 0
    %1511 = vmatpush2.bf16.msra.mxu0 0
    %1512 = vmatprep.subr.bf16.mxu0 0
    %1513 = vmatpush2.bf16.msra.mxu0 0
    %1514 = vmatprep.subr.bf16.mxu0 0
    %1515 = vmatpush2.bf16.msra.mxu0 0
    %1516 = vmatprep.subr.bf16.mxu0 0
    %1517 = vmatpush2.bf16.msra.mxu0 0
    %1518 = vmatprep.subr.bf16.mxu0 0
    %1519 = vmatpush2.bf16.msra.mxu0 0
    %1520 = vmatprep.subr.bf16.mxu0 0
    %1521 = vmatpush2.bf16.msra.mxu0 0
    %1522 = vmatprep.subr.bf16.mxu0 0
    %1523 = vmatpush2.bf16.msra.mxu0 0
    %1524 = vmatprep.mubr.bf16.mxu0 0
    %1525 = vmatmul.mubr.bf16.gmra.mxu0 %v1490
    %v1526 = vpop.f32.mrf.mxu0
    %v1527 = vadd.f32 %v1476, %v1526
    %v1528 = vpop.f32.mrf.mxu0
    %v1529 = vpop.f32.mrf.mxu0
    %v1530 = vadd.f32 %v1476, %v1529
    %v1531 = vpop.f32.mrf.mxu0
    %1532 = vdwg.mxu0
    %1535 = vrot.lane.b32.xlu0 %v1527, 120
    %v1536 = vpop.permute.xlu0 %1535
    %1537 = vrot.lane.b32.xlu0 %v1530, 120
    %v1538 = vpop.permute.xlu0 %1537
    %1541 = vrot.lane.b32.xlu0 %v1527, 112
    %v1542 = vpop.permute.xlu0 %1541
    %1543 = vrot.lane.b32.xlu0 %v1530, 112
    %v1544 = vpop.permute.xlu0 %1543
    %1547 = vrot.lane.b32.xlu0 %v1527, 104
    %v1548 = vpop.permute.xlu0 %1547
    %1549 = vrot.lane.b32.xlu0 %v1530, 104
    %v1550 = vpop.permute.xlu0 %1549
    %v1553 = vpack.c.bf16 %v1530, %v1527
    %v1554 = vpack.c.bf16 %v1538, %v1536
    %v1555 = vpack.c.bf16 %v1544, %v1542
    %v1556 = vpack.c.bf16 %v1550, %v1548
    %1561 = vrot.lane.b32.xlu0 %v1553, 96
    %v1562 = vpop.permute.xlu0 %1561
    %1563 = vrot.lane.b32.xlu0 %v1554, 96
    %v1564 = vpop.permute.xlu0 %1563
    %1565 = vrot.lane.b32.xlu0 %v1555, 96
    %v1566 = vpop.permute.xlu0 %1565
    %1567 = vrot.lane.b32.xlu0 %v1556, 96
    %v1568 = vpop.permute.xlu0 %1567
    %v1570 = vsel %vm721, %v1553, 0
    %v1573 = vsel %vm721, %v1554, 0
    %v1576 = vsel %vm721, %v1555, 0
    %v1579 = vsel %vm721, %v1556, 0
    %v1582 = vsel %vm721, %v1562, 0
    %v1585 = vsel %vm721, %v1564, 0
    %v1588 = vsel %vm721, %v1566, 0
    %v1591 = vsel %vm721, %v1568, 0
    %1593 = vmatprep.subr.bf16.mxu0 0
    %1594 = vmatpush1.bf16.xpose.msra.mxu0 0
    %1595 = vmatprep.subr.bf16.mxu0 0
    %1596 = vmatpush1.bf16.xpose.msra.mxu0 0
    %1597 = vmatprep.subr.bf16.mxu0 0
    %1598 = vmatpush1.bf16.xpose.msra.mxu0 0
    %1599 = vmatprep.subr.bf16.mxu0 0
    %1600 = vmatpush1.bf16.xpose.msra.mxu0 0
    %1601 = vmatprep.subr.bf16.mxu0 0
    %1602 = vmatpush1.bf16.xpose.msra.mxu0 %v1591
    %1603 = vmatprep.subr.bf16.mxu0 0
    %1604 = vmatpush1.bf16.xpose.msra.mxu0 %v1588
    %1605 = vmatprep.subr.bf16.mxu0 0
    %1606 = vmatpush1.bf16.xpose.msra.mxu0 %v1585
    %1607 = vmatprep.subr.bf16.mxu0 0
    %1608 = vmatpush1.bf16.xpose.msra.mxu0 %v1582
    %1609 = vmatprep.subr.bf16.mxu0 0
    %1610 = vmatpush2.bf16.xpose.msra.mxu0 0
    %1611 = vmatprep.subr.bf16.mxu0 0
    %1612 = vmatpush2.bf16.xpose.msra.mxu0 0
    %1613 = vmatprep.subr.bf16.mxu0 0
    %1614 = vmatpush2.bf16.xpose.msra.mxu0 0
    %1615 = vmatprep.subr.bf16.mxu0 0
    %1616 = vmatpush2.bf16.xpose.msra.mxu0 0
    %1617 = vmatprep.subr.bf16.mxu0 0
    %1618 = vmatpush2.bf16.xpose.msra.mxu0 0
    %1619 = vmatprep.subr.bf16.mxu0 0
    %1620 = vmatpush2.bf16.xpose.msra.mxu0 0
    %1621 = vmatprep.subr.bf16.mxu0 0
    %1622 = vmatpush2.bf16.xpose.msra.mxu0 0
    %1623 = vmatprep.subr.bf16.mxu0 0
    %1624 = vmatpush2.bf16.xpose.msra.mxu0 0
    %1625 = vmatprep.mubr.bf16.mxu0 0
    %1626 = vmatmul.mubr.bf16.gmra.mxu0 %v1570
    %v1627 = vpop.f32.mrf.mxu0
    %v1628 = vadd.f32 0.0, %v1627
    %v1629 = vpop.f32.mrf.mxu0
    %v1630 = vpop.f32.mrf.mxu0
    %v1631 = vadd.f32 0.0, %v1630
    %v1632 = vpop.f32.mrf.mxu0
    %1633 = vmatprep.mubr.bf16.mxu0 0
    %1634 = vmatmul.mubr.bf16.gmra.mxu0 %v1573
    %v1635 = vpop.f32.mrf.mxu0
    %v1636 = vadd.f32 0.0, %v1635
    %v1637 = vpop.f32.mrf.mxu0
    %v1638 = vpop.f32.mrf.mxu0
    %v1639 = vadd.f32 0.0, %v1638
    %v1640 = vpop.f32.mrf.mxu0
    %1641 = vmatprep.mubr.bf16.mxu0 0
    %1642 = vmatmul.mubr.bf16.gmra.mxu0 %v1576
    %v1643 = vpop.f32.mrf.mxu0
    %v1644 = vadd.f32 0.0, %v1643
    %v1645 = vpop.f32.mrf.mxu0
    %v1646 = vpop.f32.mrf.mxu0
    %v1647 = vadd.f32 0.0, %v1646
    %v1648 = vpop.f32.mrf.mxu0
    %1649 = vmatprep.mubr.bf16.mxu0 0
    %1650 = vmatmul.mubr.bf16.gmra.mxu0 %v1579
    %v1651 = vpop.f32.mrf.mxu0
    %v1652 = vadd.f32 0.0, %v1651
    %v1653 = vpop.f32.mrf.mxu0
    %v1654 = vpop.f32.mrf.mxu0
    %v1655 = vadd.f32 0.0, %v1654
    %v1656 = vpop.f32.mrf.mxu0
    %1657 = vdwg.mxu0
    %v1658 = vmul.f32 %v1628, 0.35355338
    %v1659 = vmul.f32 %v1631, 0.35355338
    %v1660 = vmul.f32 %v1636, 0.35355338
    %v1661 = vmul.f32 %v1639, 0.35355338
    %v1662 = vmul.f32 %v1644, 0.35355338
    %v1663 = vmul.f32 %v1647, 0.35355338
    %v1664 = vmul.f32 %v1652, 0.35355338
    %v1665 = vmul.f32 %v1655, 0.35355338
    %v1666 = vadd.f32 %v1658, %v564
    %v1667 = vadd.f32 %v1659, %v565
    %v1668 = vadd.f32 %v1660, %v566
    %v1669 = vadd.f32 %v1661, %v567
    %v1670 = vadd.f32 %v1662, %v568
    %v1671 = vadd.f32 %v1663, %v569
    %v1672 = vadd.f32 %v1664, %v570
    %v1673 = vadd.f32 %v1665, %v571
    %v1674 = vsel %vm827, %v1666, -inf
    %1675 = vmax.xlane.f32.xlu0 %v1674
    %v1676 = vpop.xlane.xlu0 %1675
    %v1677 = vsel %vm827, %v1667, -inf
    %1678 = vmax.xlane.f32.xlu0 %v1677
    %v1679 = vpop.xlane.xlu0 %1678
    %v1680 = vsel %vm827, %v1668, -inf
    %1681 = vmax.xlane.f32.xlu0 %v1680
    %v1682 = vpop.xlane.xlu0 %1681
    %v1683 = vsel %vm827, %v1669, -inf
    %1684 = vmax.xlane.f32.xlu0 %v1683
    %v1685 = vpop.xlane.xlu0 %1684
    %v1686 = vsel %vm827, %v1670, -inf
    %1687 = vmax.xlane.f32.xlu0 %v1686
    %v1688 = vpop.xlane.xlu0 %1687
    %v1689 = vsel %vm827, %v1671, -inf
    %1690 = vmax.xlane.f32.xlu0 %v1689
    %v1691 = vpop.xlane.xlu0 %1690
    %v1692 = vsel %vm827, %v1672, -inf
    %1693 = vmax.xlane.f32.xlu0 %v1692
    %v1694 = vpop.xlane.xlu0 %1693
    %v1695 = vsel %vm827, %v1673, -inf
    %1696 = vmax.xlane.f32.xlu0 %v1695
    %v1697 = vpop.xlane.xlu0 %1696
    %v1698 = vsub.f32 %v1666, %v1676
    %v1699 = vsub.f32 %v1667, %v1679
    %v1700 = vsub.f32 %v1668, %v1682
    %v1701 = vsub.f32 %v1669, %v1685
    %v1702 = vsub.f32 %v1670, %v1688
    %v1703 = vsub.f32 %v1671, %v1691
    %v1704 = vsub.f32 %v1672, %v1694
    %v1705 = vsub.f32 %v1673, %v1697
    %v1706 = vmul.f32 %v1698, 1.442695
    %v1707 = vpow.pop %v1706
    %v1708 = vmul.f32 %v1699, 1.442695
    %v1709 = vpow.pop %v1708
    %v1710 = vmul.f32 %v1700, 1.442695
    %v1711 = vpow.pop %v1710
    %v1712 = vmul.f32 %v1701, 1.442695
    %v1713 = vpow.pop %v1712
    %v1714 = vmul.f32 %v1702, 1.442695
    %v1715 = vpow.pop %v1714
    %v1716 = vmul.f32 %v1703, 1.442695
    %v1717 = vpow.pop %v1716
    %v1718 = vmul.f32 %v1704, 1.442695
    %v1719 = vpow.pop %v1718
    %v1720 = vmul.f32 %v1705, 1.442695
    %v1721 = vpow.pop %v1720
    %v1722 = vsel %vm827, %v1707, 0.0
    %1723 = vadd.xlane.f32.xlu0 %v1722
    %v1724 = vpop.xlane.xlu0 %1723
    %v1725 = vsel %vm827, %v1709, 0.0
    %1726 = vadd.xlane.f32.xlu0 %v1725
    %v1727 = vpop.xlane.xlu0 %1726
    %v1728 = vsel %vm827, %v1711, 0.0
    %1729 = vadd.xlane.f32.xlu0 %v1728
    %v1730 = vpop.xlane.xlu0 %1729
    %v1731 = vsel %vm827, %v1713, 0.0
    %1732 = vadd.xlane.f32.xlu0 %v1731
    %v1733 = vpop.xlane.xlu0 %1732
    %v1734 = vsel %vm827, %v1715, 0.0
    %1735 = vadd.xlane.f32.xlu0 %v1734
    %v1736 = vpop.xlane.xlu0 %1735
    %v1737 = vsel %vm827, %v1717, 0.0
    %1738 = vadd.xlane.f32.xlu0 %v1737
    %v1739 = vpop.xlane.xlu0 %1738
    %v1740 = vsel %vm827, %v1719, 0.0
    %1741 = vadd.xlane.f32.xlu0 %v1740
    %v1742 = vpop.xlane.xlu0 %1741
    %v1743 = vsel %vm827, %v1721, 0.0
    %1744 = vadd.xlane.f32.xlu0 %v1743
    %v1745 = vpop.xlane.xlu0 %1744
    %v1746 = vrcp.pop %v1724
    %v1747 = vrcp.pop %v1727
    %v1748 = vrcp.pop %v1730
    %v1749 = vrcp.pop %v1733
    %v1750 = vrcp.pop %v1736
    %v1751 = vrcp.pop %v1739
    %v1752 = vrcp.pop %v1742
    %v1753 = vrcp.pop %v1745
    %v1754 = vmul.f32 %v1707, %v1746
    %v1755 = vmul.f32 %v1709, %v1747
    %v1756 = vmul.f32 %v1711, %v1748
    %v1757 = vmul.f32 %v1713, %v1749
    %v1758 = vmul.f32 %v1715, %v1750
    %v1759 = vmul.f32 %v1717, %v1751
    %v1760 = vmul.f32 %v1719, %v1752
    %v1761 = vmul.f32 %v1721, %v1753
    %v1762 = vpack.c.bf16 %v1755, %v1754
    %v1763 = vpack.c.bf16 %v1757, %v1756
    %v1764 = vpack.c.bf16 %v1759, %v1758
    %v1765 = vpack.c.bf16 %v1761, %v1760
    %1766 = vrot.lane.b32.xlu0 %v1553, 64
    %v1767 = vpop.permute.xlu0 %1766
    %1768 = vrot.lane.b32.xlu0 %v1554, 64
    %v1769 = vpop.permute.xlu0 %1768
    %1770 = vrot.lane.b32.xlu0 %v1555, 64
    %v1771 = vpop.permute.xlu0 %1770
    %1772 = vrot.lane.b32.xlu0 %v1556, 64
    %v1773 = vpop.permute.xlu0 %1772
    %v1779 = vsel %vm827, %v1762, 0
    %v1782 = vsel %vm827, %v1763, 0
    %v1785 = vsel %vm827, %v1764, 0
    %v1788 = vsel %vm827, %v1765, 0
    %1790 = vmatprep.subr.bf16.mxu0 0
    %1791 = vmatpush1.bf16.msra.mxu0 0
    %1792 = vmatprep.subr.bf16.mxu0 0
    %1793 = vmatpush1.bf16.msra.mxu0 0
    %1794 = vmatprep.subr.bf16.mxu0 0
    %1795 = vmatpush1.bf16.msra.mxu0 0
    %1796 = vmatprep.subr.bf16.mxu0 0
    %1797 = vmatpush1.bf16.msra.mxu0 0
    %1798 = vmatprep.subr.bf16.mxu0 0
    %1799 = vmatpush1.bf16.msra.mxu0 %v1773
    %1800 = vmatprep.subr.bf16.mxu0 0
    %1801 = vmatpush1.bf16.msra.mxu0 %v1771
    %1802 = vmatprep.subr.bf16.mxu0 0
    %1803 = vmatpush1.bf16.msra.mxu0 %v1769
    %1804 = vmatprep.subr.bf16.mxu0 0
    %1805 = vmatpush1.bf16.msra.mxu0 %v1767
    %1806 = vmatprep.subr.bf16.mxu0 0
    %1807 = vmatpush2.bf16.msra.mxu0 0
    %1808 = vmatprep.subr.bf16.mxu0 0
    %1809 = vmatpush2.bf16.msra.mxu0 0
    %1810 = vmatprep.subr.bf16.mxu0 0
    %1811 = vmatpush2.bf16.msra.mxu0 0
    %1812 = vmatprep.subr.bf16.mxu0 0
    %1813 = vmatpush2.bf16.msra.mxu0 0
    %1814 = vmatprep.subr.bf16.mxu0 0
    %1815 = vmatpush2.bf16.msra.mxu0 0
    %1816 = vmatprep.subr.bf16.mxu0 0
    %1817 = vmatpush2.bf16.msra.mxu0 0
    %1818 = vmatprep.subr.bf16.mxu0 0
    %1819 = vmatpush2.bf16.msra.mxu0 0
    %1820 = vmatprep.subr.bf16.mxu0 0
    %1821 = vmatpush2.bf16.msra.mxu0 0
    %1822 = vmatprep.mubr.bf16.mxu0 0
    %1823 = vmatmul.mubr.bf16.gmra.mxu0 %v1779
    %v1824 = vpop.f32.mrf.mxu0
    %v1825 = vadd.f32 0.0, %v1824
    %v1826 = vpop.f32.mrf.mxu0
    %v1827 = vpop.f32.mrf.mxu0
    %v1828 = vadd.f32 0.0, %v1827
    %v1829 = vpop.f32.mrf.mxu0
    %1830 = vmatprep.mubr.bf16.mxu0 0
    %1831 = vmatmul.mubr.bf16.gmra.mxu0 %v1782
    %v1832 = vpop.f32.mrf.mxu0
    %v1833 = vadd.f32 0.0, %v1832
    %v1834 = vpop.f32.mrf.mxu0
    %v1835 = vpop.f32.mrf.mxu0
    %v1836 = vadd.f32 0.0, %v1835
    %v1837 = vpop.f32.mrf.mxu0
    %1838 = vmatprep.mubr.bf16.mxu0 0
    %1839 = vmatmul.mubr.bf16.gmra.mxu0 %v1785
    %v1840 = vpop.f32.mrf.mxu0
    %v1841 = vadd.f32 0.0, %v1840
    %v1842 = vpop.f32.mrf.mxu0
    %v1843 = vpop.f32.mrf.mxu0
    %v1844 = vadd.f32 0.0, %v1843
    %v1845 = vpop.f32.mrf.mxu0
    %1846 = vmatprep.mubr.bf16.mxu0 0
    %1847 = vmatmul.mubr.bf16.gmra.mxu0 %v1788
    %v1848 = vpop.f32.mrf.mxu0
    %v1849 = vadd.f32 0.0, %v1848
    %v1850 = vpop.f32.mrf.mxu0
    %v1851 = vpop.f32.mrf.mxu0
    %v1852 = vadd.f32 0.0, %v1851
    %v1853 = vpop.f32.mrf.mxu0
    %1854 = vdwg.mxu0
    %v1855 = vld [vmem:[%s1 + $0x210] sm:$0xf]
    %v1856 = vpack.c.bf16 %v1828, %v1825
    %v1857 = vld [vmem:[%s1 + $0x214] sm:$0xf]
    %v1858 = vpack.c.bf16 %v1836, %v1833
    %v1860 = vsel %vm721, %v1858, 0
    %v1863 = vsel %vm1016, %v1857, 0
    %1865 = vmatprep.subr.bf16.mxu0 0
    %1866 = vmatpush1.bf16.msra.mxu0 0
    %1867 = vmatprep.subr.bf16.mxu0 0
    %1868 = vmatpush1.bf16.msra.mxu0 0
    %1869 = vmatprep.subr.bf16.mxu0 0
    %1870 = vmatpush1.bf16.msra.mxu0 0
    %1871 = vmatprep.subr.bf16.mxu0 0
    %1872 = vmatpush1.bf16.msra.mxu0 0
    %1873 = vmatprep.subr.bf16.mxu0 0
    %1874 = vmatpush1.bf16.msra.mxu0 0
    %1875 = vmatprep.subr.bf16.mxu0 0
    %1876 = vmatpush1.bf16.msra.mxu0 0
    %1877 = vmatprep.subr.bf16.mxu0 0
    %1878 = vmatpush1.bf16.msra.mxu0 0
    %1879 = vmatprep.subr.bf16.mxu0 0
    %1880 = vmatpush1.bf16.msra.mxu0 %v1863
    %1881 = vmatprep.subr.bf16.mxu0 0
    %1882 = vmatpush2.bf16.msra.mxu0 0
    %1883 = vmatprep.subr.bf16.mxu0 0
    %1884 = vmatpush2.bf16.msra.mxu0 0
    %1885 = vmatprep.subr.bf16.mxu0 0
    %1886 = vmatpush2.bf16.msra.mxu0 0
    %1887 = vmatprep.subr.bf16.mxu0 0
    %1888 = vmatpush2.bf16.msra.mxu0 0
    %1889 = vmatprep.subr.bf16.mxu0 0
    %1890 = vmatpush2.bf16.msra.mxu0 0
    %1891 = vmatprep.subr.bf16.mxu0 0
    %1892 = vmatpush2.bf16.msra.mxu0 0
    %1893 = vmatprep.subr.bf16.mxu0 0
    %1894 = vmatpush2.bf16.msra.mxu0 0
    %1895 = vmatprep.subr.bf16.mxu0 0
    %1896 = vmatpush2.bf16.msra.mxu0 0
    %1897 = vmatprep.mubr.bf16.mxu0 0
    %1898 = vmatmul.mubr.bf16.gmra.mxu0 %v1860
    %v1899 = vpop.f32.mrf.mxu0
    %v1900 = vadd.f32 0.0, %v1899
    %v1901 = vpop.f32.mrf.mxu0
    %v1902 = vpop.f32.mrf.mxu0
    %v1903 = vadd.f32 0.0, %v1902
    %v1904 = vpop.f32.mrf.mxu0
    %1905 = vdwg.mxu0
    %v1907 = vsel %vm721, %v1856, 0
    %v1910 = vsel %vm1016, %v1855, 0
    %1912 = vmatprep.subr.bf16.mxu0 0
    %1913 = vmatpush1.bf16.msra.mxu0 0
    %1914 = vmatprep.subr.bf16.mxu0 0
    %1915 = vmatpush1.bf16.msra.mxu0 0
    %1916 = vmatprep.subr.bf16.mxu0 0
    %1917 = vmatpush1.bf16.msra.mxu0 0
    %1918 = vmatprep.subr.bf16.mxu0 0
    %1919 = vmatpush1.bf16.msra.mxu0 0
    %1920 = vmatprep.subr.bf16.mxu0 0
    %1921 = vmatpush1.bf16.msra.mxu0 0
    %1922 = vmatprep.subr.bf16.mxu0 0
    %1923 = vmatpush1.bf16.msra.mxu0 0
    %1924 = vmatprep.subr.bf16.mxu0 0
    %1925 = vmatpush1.bf16.msra.mxu0 0
    %1926 = vmatprep.subr.bf16.mxu0 0
    %1927 = vmatpush1.bf16.msra.mxu0 %v1910
    %1928 = vmatprep.subr.bf16.mxu0 0
    %1929 = vmatpush2.bf16.msra.mxu0 0
    %1930 = vmatprep.subr.bf16.mxu0 0
    %1931 = vmatpush2.bf16.msra.mxu0 0
    %1932 = vmatprep.subr.bf16.mxu0 0
    %1933 = vmatpush2.bf16.msra.mxu0 0
    %1934 = vmatprep.subr.bf16.mxu0 0
    %1935 = vmatpush2.bf16.msra.mxu0 0
    %1936 = vmatprep.subr.bf16.mxu0 0
    %1937 = vmatpush2.bf16.msra.mxu0 0
    %1938 = vmatprep.subr.bf16.mxu0 0
    %1939 = vmatpush2.bf16.msra.mxu0 0
    %1940 = vmatprep.subr.bf16.mxu0 0
    %1941 = vmatpush2.bf16.msra.mxu0 0
    %1942 = vmatprep.subr.bf16.mxu0 0
    %1943 = vmatpush2.bf16.msra.mxu0 0
    %1944 = vmatprep.mubr.bf16.mxu0 0
    %1945 = vmatmul.mubr.bf16.gmra.mxu0 %v1907
    %v1946 = vpop.f32.mrf.mxu0
    %v1947 = vadd.f32 %v1900, %v1946
    %v1948 = vpop.f32.mrf.mxu0
    %v1949 = vpop.f32.mrf.mxu0
    %v1950 = vadd.f32 %v1903, %v1949
    %v1951 = vpop.f32.mrf.mxu0
    %1952 = vdwg.mxu0
    %v1953 = vld [vmem:[%s1 + $0x218] sm:$0xf]
    %v1954 = vpack.c.bf16 %v1844, %v1841
    %v1956 = vsel %vm721, %v1954, 0
    %v1959 = vsel %vm1016, %v1953, 0
    %1961 = vmatprep.subr.bf16.mxu0 0
    %1962 = vmatpush1.bf16.msra.mxu0 0
    %1963 = vmatprep.subr.bf16.mxu0 0
    %1964 = vmatpush1.bf16.msra.mxu0 0
    %1965 = vmatprep.subr.bf16.mxu0 0
    %1966 = vmatpush1.bf16.msra.mxu0 0
    %1967 = vmatprep.subr.bf16.mxu0 0
    %1968 = vmatpush1.bf16.msra.mxu0 0
    %1969 = vmatprep.subr.bf16.mxu0 0
    %1970 = vmatpush1.bf16.msra.mxu0 0
    %1971 = vmatprep.subr.bf16.mxu0 0
    %1972 = vmatpush1.bf16.msra.mxu0 0
    %1973 = vmatprep.subr.bf16.mxu0 0
    %1974 = vmatpush1.bf16.msra.mxu0 0
    %1975 = vmatprep.subr.bf16.mxu0 0
    %1976 = vmatpush1.bf16.msra.mxu0 %v1959
    %1977 = vmatprep.subr.bf16.mxu0 0
    %1978 = vmatpush2.bf16.msra.mxu0 0
    %1979 = vmatprep.subr.bf16.mxu0 0
    %1980 = vmatpush2.bf16.msra.mxu0 0
    %1981 = vmatprep.subr.bf16.mxu0 0
    %1982 = vmatpush2.bf16.msra.mxu0 0
    %1983 = vmatprep.subr.bf16.mxu0 0
    %1984 = vmatpush2.bf16.msra.mxu0 0
    %1985 = vmatprep.subr.bf16.mxu0 0
    %1986 = vmatpush2.bf16.msra.mxu0 0
    %1987 = vmatprep.subr.bf16.mxu0 0
    %1988 = vmatpush2.bf16.msra.mxu0 0
    %1989 = vmatprep.subr.bf16.mxu0 0
    %1990 = vmatpush2.bf16.msra.mxu0 0
    %1991 = vmatprep.subr.bf16.mxu0 0
    %1992 = vmatpush2.bf16.msra.mxu0 0
    %1993 = vmatprep.mubr.bf16.mxu0 0
    %1994 = vmatmul.mubr.bf16.gmra.mxu0 %v1956
    %v1995 = vpop.f32.mrf.mxu0
    %v1996 = vadd.f32 0.0, %v1995
    %v1997 = vpop.f32.mrf.mxu0
    %v1998 = vpop.f32.mrf.mxu0
    %v1999 = vadd.f32 0.0, %v1998
    %v2000 = vpop.f32.mrf.mxu0
    %2001 = vdwg.mxu0
    %v2002 = vadd.f32 %v1947, %v1996
    %v2003 = vadd.f32 %v1950, %v1999
    %v2004 = vld [vmem:[%s1 + $0x21c] sm:$0xf]
    %v2005 = vpack.c.bf16 %v1852, %v1849
    %v2007 = vsel %vm721, %v2005, 0
    %v2010 = vsel %vm1016, %v2004, 0
    %2012 = vmatprep.subr.bf16.mxu0 0
    %2013 = vmatpush1.bf16.msra.mxu0 0
    %2014 = vmatprep.subr.bf16.mxu0 0
    %2015 = vmatpush1.bf16.msra.mxu0 0
    %2016 = vmatprep.subr.bf16.mxu0 0
    %2017 = vmatpush1.bf16.msra.mxu0 0
    %2018 = vmatprep.subr.bf16.mxu0 0
    %2019 = vmatpush1.bf16.msra.mxu0 0
    %2020 = vmatprep.subr.bf16.mxu0 0
    %2021 = vmatpush1.bf16.msra.mxu0 0
    %2022 = vmatprep.subr.bf16.mxu0 0
    %2023 = vmatpush1.bf16.msra.mxu0 0
    %2024 = vmatprep.subr.bf16.mxu0 0
    %2025 = vmatpush1.bf16.msra.mxu0 0
    %2026 = vmatprep.subr.bf16.mxu0 0
    %2027 = vmatpush1.bf16.msra.mxu0 %v2010
    %2028 = vmatprep.subr.bf16.mxu0 0
    %2029 = vmatpush2.bf16.msra.mxu0 0
    %2030 = vmatprep.subr.bf16.mxu0 0
    %2031 = vmatpush2.bf16.msra.mxu0 0
    %2032 = vmatprep.subr.bf16.mxu0 0
    %2033 = vmatpush2.bf16.msra.mxu0 0
    %2034 = vmatprep.subr.bf16.mxu0 0
    %2035 = vmatpush2.bf16.msra.mxu0 0
    %2036 = vmatprep.subr.bf16.mxu0 0
    %2037 = vmatpush2.bf16.msra.mxu0 0
    %2038 = vmatprep.subr.bf16.mxu0 0
    %2039 = vmatpush2.bf16.msra.mxu0 0
    %2040 = vmatprep.subr.bf16.mxu0 0
    %2041 = vmatpush2.bf16.msra.mxu0 0
    %2042 = vmatprep.subr.bf16.mxu0 0
    %2043 = vmatpush2.bf16.msra.mxu0 0
    %2044 = vmatprep.mubr.bf16.mxu0 0
    %2045 = vmatmul.mubr.bf16.gmra.mxu0 %v2007
    %v2046 = vpop.f32.mrf.mxu0
    %v2047 = vadd.f32 0.0, %v2046
    %v2048 = vpop.f32.mrf.mxu0
    %v2049 = vpop.f32.mrf.mxu0
    %v2050 = vadd.f32 0.0, %v2049
    %v2051 = vpop.f32.mrf.mxu0
    %2052 = vdwg.mxu0
    %v2053 = vadd.f32 %v2002, %v2047
    %v2054 = vadd.f32 %v2003, %v2050
    %v2055 = vadd.f32 %v1420, %v2053
    %v2056 = vadd.f32 %v1421, %v2054
    %v2057 = vlaneseq
    %v2058 = vshrl.u32 %v2057, 7
    %v2059 = vsub.s32 0, %v2058
    %v2060 = vrot.slane %v1425, %v2059
    %v2061 = vadd.f32 %v2055, %v2060
    %v2062 = vadd.f32 %v2056, %v2060
    %v2063 = vsel %vm580, %v2061, 0.0
    %2064 = vadd.xlane.f32.xlu0 %v2063
    %v2065 = vpop.xlane.xlu0 %2064
    %v2066 = vsel %vm580, %v2062, 0.0
    %2067 = vadd.xlane.f32.xlu0 %v2066
    %v2068 = vpop.xlane.xlu0 %2067
    %v2069 = vmul.f32 %v2065, %v587
    %v2070 = vmul.f32 %v2068, %v587
    %v2071 = vsub.f32 %v2061, %v2069
    %v2072 = vsub.f32 %v2062, %v2070
    %v2073 = vmul.f32 %v2071, %v2071
    %v2074 = vmul.f32 %v2072, %v2072
    %v2075 = vsel %vm580, %v2073, 0.0
    %2076 = vadd.xlane.f32.xlu0 %v2075
    %v2077 = vpop.xlane.xlu0 %2076
    %v2078 = vsel %vm580, %v2074, 0.0
    %2079 = vadd.xlane.f32.xlu0 %v2078
    %v2080 = vpop.xlane.xlu0 %2079
    %v2081 = vmul.f32 %v2077, %v587
    %v2082 = vmul.f32 %v2080, %v587
    %v2083 = vadd.f32 %v2081, 1e-06
    %v2084 = vadd.f32 %v2082, 1e-06
    %v2085 = vrsqrt.pop %v2083
    %v2086 = vrsqrt.pop %v2084
    %v2087 = vmul.f32 %v2071, %v2085
    %v2088 = vmul.f32 %v2072, %v2086
    %v2089 = vlaneseq
    %v2090 = vshrl.u32 %v2089, 7
    %v2091 = vsub.s32 0, %v2090
    %v2092 = vrot.slane %v1426, %v2091
    %v2093 = vmul.f32 %v2087, %v2092
    %v2094 = vmul.f32 %v2088, %v2092
    %v2095 = vlaneseq
    %v2096 = vshrl.u32 %v2095, 7
    %v2097 = vsub.s32 0, %v2096
    %v2098 = vrot.slane %v1427, %v2097
    %v2099 = vadd.f32 %v2093, %v2098
    %v2100 = vadd.f32 %v2094, %v2098
    %v2101 = vpack.c.bf16 %v2100, %v2099
    %v2102 = vld [vmem:[%s1 + $0x1e0] sm:$0xf]
    %v2103 = vld [vmem:[%s1 + $0x1e4] sm:$0xf]
    %v2104 = vld [vmem:[%s1 + $0x1e8] sm:$0xf]
    %v2105 = vld [vmem:[%s1 + $0x1ec] sm:$0xf]
    %v2106 = vlaneseq
    %v2107 = vshrl.u32 %v2106, 7
    %v2108 = vsub.s32 0, %v2107
    %v2109 = vrot.slane %v1428, %v2108
    %v2114 = vunpack.c.l.b16 %v2102
    %v2115 = vunpack.c.l.b16 %v2103
    %v2116 = vunpack.c.l.b16 %v2104
    %v2117 = vunpack.c.l.b16 %v2105
    %v2118 = vpack.c.b16 %v2115, %v2114
    %v2119 = vpack.c.b16 %v2117, %v2116
    %v2123 = vsel %vm580, %v2101, 0
    %2125 = vmatprep.subr.bf16.mxu0 0
    %2126 = vmatpush1.bf16.msra.mxu0 0
    %2127 = vmatprep.subr.bf16.mxu0 0
    %2128 = vmatpush1.bf16.msra.mxu0 0
    %2129 = vmatprep.subr.bf16.mxu0 0
    %2130 = vmatpush1.bf16.msra.mxu0 0
    %2131 = vmatprep.subr.bf16.mxu0 0
    %2132 = vmatpush1.bf16.msra.mxu0 0
    %2133 = vmatprep.subr.bf16.mxu0 0
    %2134 = vmatpush1.bf16.msra.mxu0 0
    %2135 = vmatprep.subr.bf16.mxu0 0
    %2136 = vmatpush1.bf16.msra.mxu0 0
    %2137 = vmatprep.subr.bf16.mxu0 0
    %2138 = vmatpush1.bf16.msra.mxu0 %v2119
    %2139 = vmatprep.subr.bf16.mxu0 0
    %2140 = vmatpush1.bf16.msra.mxu0 %v2118
    %2141 = vmatprep.subr.bf16.mxu0 0
    %2142 = vmatpush2.bf16.msra.mxu0 0
    %2143 = vmatprep.subr.bf16.mxu0 0
    %2144 = vmatpush2.bf16.msra.mxu0 0
    %2145 = vmatprep.subr.bf16.mxu0 0
    %2146 = vmatpush2.bf16.msra.mxu0 0
    %2147 = vmatprep.subr.bf16.mxu0 0
    %2148 = vmatpush2.bf16.msra.mxu0 0
    %2149 = vmatprep.subr.bf16.mxu0 0
    %2150 = vmatpush2.bf16.msra.mxu0 0
    %2151 = vmatprep.subr.bf16.mxu0 0
    %2152 = vmatpush2.bf16.msra.mxu0 0
    %2153 = vmatprep.subr.bf16.mxu0 0
    %2154 = vmatpush2.bf16.msra.mxu0 0
    %2155 = vmatprep.subr.bf16.mxu0 0
    %2156 = vmatpush2.bf16.msra.mxu0 0
    %2157 = vmatprep.mubr.bf16.mxu0 0
    %2158 = vmatmul.mubr.bf16.gmra.mxu0 %v2123
    %v2159 = vpop.f32.mrf.mxu0
    %v2160 = vadd.f32 %v2109, %v2159
    %v2161 = vpop.f32.mrf.mxu0
    %v2162 = vpop.f32.mrf.mxu0
    %v2163 = vadd.f32 %v2109, %v2162
    %v2164 = vpop.f32.mrf.mxu0
    %2165 = vdwg.mxu0
    %v2166 = vmul.f32 %v2160, 0.5
    %v2167 = vmul.f32 %v2163, 0.5
    %v2168 = vmul.f32 %v2160, %v2160
    %v2169 = vmul.f32 %v2163, %v2163
    %v2170 = vmul.f32 %v2168, %v2160
    %v2171 = vmul.f32 %v2169, %v2163
    %v2172 = vmul.f32 %v2170, 0.044715
    %v2173 = vmul.f32 %v2171, 0.044715
    %v2174 = vadd.f32 %v2160, %v2172
    %v2175 = vadd.f32 %v2163, %v2173
    %v2176 = vmul.f32 %v2174, 0.7978846
    %v2177 = vmul.f32 %v2175, 0.7978846
    %v2178 = vtanh.pop %v2176
    %v2179 = vtanh.pop %v2177
    %v2180 = vadd.f32 %v2178, 1.0
    %v2181 = vadd.f32 %v2179, 1.0
    %v2182 = vmul.f32 %v2166, %v2180
    %v2183 = vmul.f32 %v2167, %v2181
    %v2184 = vpack.c.bf16 %v2183, %v2182
    %v2185 = vld [vmem:[%s1 + $0x1f0] sm:$0xf]
    %v2186 = vld [vmem:[%s1 + $0x1f4] sm:$0xf]
    %v2187 = vld [vmem:[%s1 + $0x1f8] sm:$0xf]
    %v2188 = vld [vmem:[%s1 + $0x1fc] sm:$0xf]
    %v2189 = vld [vmem:[%s1 + $0x200] sm:$0xf]
    %v2190 = vld [vmem:[%s1 + $0x204] sm:$0xf]
    %v2191 = vld [vmem:[%s1 + $0x208] sm:$0xf]
    %v2192 = vld [vmem:[%s1 + $0x20c] sm:$0xf]
    %v2193 = vlaneseq
    %v2194 = vshrl.u32 %v2193, 7
    %v2195 = vsub.s32 0, %v2194
    %v2196 = vrot.slane %v1429, %v2195
    %v2205 = vunpack.c.l.b16 %v2185
    %v2206 = vunpack.c.l.b16 %v2186
    %v2207 = vunpack.c.l.b16 %v2187
    %v2208 = vunpack.c.l.b16 %v2188
    %v2209 = vunpack.c.l.b16 %v2189
    %v2210 = vunpack.c.l.b16 %v2190
    %v2211 = vunpack.c.l.b16 %v2191
    %v2212 = vunpack.c.l.b16 %v2192
    %v2213 = vpack.c.b16 %v2206, %v2205
    %v2214 = vpack.c.b16 %v2208, %v2207
    %v2215 = vpack.c.b16 %v2210, %v2209
    %v2216 = vpack.c.b16 %v2212, %v2211
    %v2222 = vsel %vm827, %v2184, 0
    %2224 = vmatprep.subr.bf16.mxu0 0
    %2225 = vmatpush1.bf16.msra.mxu0 0
    %2226 = vmatprep.subr.bf16.mxu0 0
    %2227 = vmatpush1.bf16.msra.mxu0 0
    %2228 = vmatprep.subr.bf16.mxu0 0
    %2229 = vmatpush1.bf16.msra.mxu0 0
    %2230 = vmatprep.subr.bf16.mxu0 0
    %2231 = vmatpush1.bf16.msra.mxu0 0
    %2232 = vmatprep.subr.bf16.mxu0 0
    %2233 = vmatpush1.bf16.msra.mxu0 %v2216
    %2234 = vmatprep.subr.bf16.mxu0 0
    %2235 = vmatpush1.bf16.msra.mxu0 %v2215
    %2236 = vmatprep.subr.bf16.mxu0 0
    %2237 = vmatpush1.bf16.msra.mxu0 %v2214
    %2238 = vmatprep.subr.bf16.mxu0 0
    %2239 = vmatpush1.bf16.msra.mxu0 %v2213
    %2240 = vmatprep.subr.bf16.mxu0 0
    %2241 = vmatpush2.bf16.msra.mxu0 0
    %2242 = vmatprep.subr.bf16.mxu0 0
    %2243 = vmatpush2.bf16.msra.mxu0 0
    %2244 = vmatprep.subr.bf16.mxu0 0
    %2245 = vmatpush2.bf16.msra.mxu0 0
    %2246 = vmatprep.subr.bf16.mxu0 0
    %2247 = vmatpush2.bf16.msra.mxu0 0
    %2248 = vmatprep.subr.bf16.mxu0 0
    %2249 = vmatpush2.bf16.msra.mxu0 0
    %2250 = vmatprep.subr.bf16.mxu0 0
    %2251 = vmatpush2.bf16.msra.mxu0 0
    %2252 = vmatprep.subr.bf16.mxu0 0
    %2253 = vmatpush2.bf16.msra.mxu0 0
    %2254 = vmatprep.subr.bf16.mxu0 0
    %2255 = vmatpush2.bf16.msra.mxu0 0
    %2256 = vmatprep.mubr.bf16.mxu0 0
    %2257 = vmatmul.mubr.bf16.gmra.mxu0 %v2222
    %v2258 = vpop.f32.mrf.mxu0
    %v2259 = vadd.f32 %v2196, %v2258
    %v2260 = vpop.f32.mrf.mxu0
    %v2261 = vpop.f32.mrf.mxu0
    %v2262 = vadd.f32 %v2196, %v2261
    %v2263 = vpop.f32.mrf.mxu0
    %2264 = vdwg.mxu0
    %v2265 = vadd.f32 %v2061, %v2259
    %v2266 = vadd.f32 %v2062, %v2262
    %v2267 = vld [vmem:[%s2 + $0x10] sm:$0x1]
    %v2268 = vld [vmem:[%s2 + $0x11] sm:$0x1]
    %v2269 = vld [vmem:[%s2 + $0x12] sm:$0x1]
    %v2270 = vld [vmem:[%s2 + $0x13] sm:$0x1]
    %v2271 = vld [vmem:[%s2 + $0x14] sm:$0x1]
    %v2272 = vld [vmem:[%s1 + $0x220] sm:$0xf]
    %v2273 = vld [vmem:[%s1 + $0x224] sm:$0xf]
    %v2274 = vld [vmem:[%s1 + $0x228] sm:$0xf]
    %v2275 = vld [vmem:[%s1 + $0x22c] sm:$0xf]
    %vm2276 = vcmask 253952
    %v2277 = vsel %vm2276, %v2265, 0.0
    %2278 = vadd.xlane.f32.xlu0 %v2277
    %v2279 = vpop.xlane.xlu0 %2278
    %v2280 = vmul.f32 %v2279, %v587
    %v2281 = vsub.f32 %v2265, %v2280
    %v2282 = vmul.f32 %v2281, %v2281
    %v2283 = vsel %vm2276, %v2282, 0.0
    %2284 = vadd.xlane.f32.xlu0 %v2283
    %v2285 = vpop.xlane.xlu0 %2284
    %v2286 = vmul.f32 %v2285, %v587
    %v2287 = vadd.f32 %v2286, 1e-06
    %v2288 = vrsqrt.pop %v2287
    %v2289 = vmul.f32 %v2281, %v2288
    %v2290 = vmul.f32 %v2289, %v2267
    %v2291 = vadd.f32 %v2290, %v2268
    %v2292 = vsel %vm2276, %v2291, 0.0
    %2293 = vadd.xlane.f32.xlu0 %v2292
    %v2294 = vpop.xlane.xlu0 %2293
    %v2295 = vmul.f32 %v2294, %v587
    %v2296 = vsub.f32 %v2291, %v2295
    %v2297 = vmul.f32 %v2296, %v2296
    %v2298 = vsel %vm2276, %v2297, 0.0
    %2299 = vadd.xlane.f32.xlu0 %v2298
    %v2300 = vpop.xlane.xlu0 %2299
    %v2301 = vmul.f32 %v2300, %v587
    %v2302 = vadd.f32 %v2301, 1e-05
    %v2303 = vrsqrt.pop %v2302
    %v2304 = vmul.f32 %v2296, %v2303
    %v2305 = vmul.f32 %v2304, %v2269
    %v2306 = vadd.f32 %v2305, %v2270
    %v2307 = vpack.c.bf16 %v2306, %v2306
    %v2312 = vunpack.c.l.b16 %v2272
    %v2313 = vunpack.c.l.b16 %v2273
    %v2314 = vunpack.c.l.b16 %v2274
    %v2315 = vunpack.c.l.b16 %v2275
    %v2316 = vpack.c.b16 %v2313, %v2312
    %v2317 = vpack.c.b16 %v2315, %v2314
    %v2321 = vsel %vm580, %v2307, 0
    %2323 = vmatprep.subr.bf16.mxu0 0
    %2324 = vmatpush1.bf16.msra.mxu0 0
    %2325 = vmatprep.subr.bf16.mxu0 0
    %2326 = vmatpush1.bf16.msra.mxu0 0
    %2327 = vmatprep.subr.bf16.mxu0 0
    %2328 = vmatpush1.bf16.msra.mxu0 0
    %2329 = vmatprep.subr.bf16.mxu0 0
    %2330 = vmatpush1.bf16.msra.mxu0 0
    %2331 = vmatprep.subr.bf16.mxu0 0
    %2332 = vmatpush1.bf16.msra.mxu0 0
    %2333 = vmatprep.subr.bf16.mxu0 0
    %2334 = vmatpush1.bf16.msra.mxu0 0
    %2335 = vmatprep.subr.bf16.mxu0 0
    %2336 = vmatpush1.bf16.msra.mxu0 %v2317
    %2337 = vmatprep.subr.bf16.mxu0 0
    %2338 = vmatpush1.bf16.msra.mxu0 %v2316
    %2339 = vmatprep.subr.bf16.mxu0 0
    %2340 = vmatpush2.bf16.msra.mxu0 0
    %2341 = vmatprep.subr.bf16.mxu0 0
    %2342 = vmatpush2.bf16.msra.mxu0 0
    %2343 = vmatprep.subr.bf16.mxu0 0
    %2344 = vmatpush2.bf16.msra.mxu0 0
    %2345 = vmatprep.subr.bf16.mxu0 0
    %2346 = vmatpush2.bf16.msra.mxu0 0
    %2347 = vmatprep.subr.bf16.mxu0 0
    %2348 = vmatpush2.bf16.msra.mxu0 0
    %2349 = vmatprep.subr.bf16.mxu0 0
    %2350 = vmatpush2.bf16.msra.mxu0 0
    %2351 = vmatprep.subr.bf16.mxu0 0
    %2352 = vmatpush2.bf16.msra.mxu0 0
    %2353 = vmatprep.subr.bf16.mxu0 0
    %2354 = vmatpush2.bf16.msra.mxu0 0
    %2355 = vmatprep.mubr.bf16.mxu0 0
    %2356 = vmatmul.mubr.bf16.gmra.mxu0 %v2321
    %v2357 = vpop.f32.mrf.mxu0
    %v2358 = vadd.f32 %v2271, %v2357
    %v2359 = vpop.f32.mrf.mxu0
    %v2360 = vpop.f32.mrf.mxu0
    %v2361 = vpop.f32.mrf.mxu0
    %2362 = vdwg.mxu0
    %2363 = vst [vmem:[#allocation2] sm:$0x1] %v2358
    %v2364 = vsel %vm2276, %v2266, 0.0
    %2365 = vadd.xlane.f32.xlu0 %v2364
    %v2366 = vpop.xlane.xlu0 %2365
    %v2367 = vmul.f32 %v2366, %v587
    %v2368 = vsub.f32 %v2266, %v2367
    %v2369 = vmul.f32 %v2368, %v2368
    %v2370 = vsel %vm2276, %v2369, 0.0
    %2371 = vadd.xlane.f32.xlu0 %v2370
    %v2372 = vpop.xlane.xlu0 %2371
    %v2373 = vmul.f32 %v2372, %v587
    %v2374 = vadd.f32 %v2373, 1e-06
    %v2375 = vrsqrt.pop %v2374
    %v2376 = vmul.f32 %v2368, %v2375
    %v2377 = vmul.f32 %v2376, %v2267
    %v2378 = vadd.f32 %v2377, %v2268
    %v2379 = vsel %vm2276, %v2378, 0.0
    %2380 = vadd.xlane.f32.xlu0 %v2379
    %v2381 = vpop.xlane.xlu0 %2380
    %v2382 = vmul.f32 %v2381, %v587
    %v2383 = vsub.f32 %v2378, %v2382
    %v2384 = vmul.f32 %v2383, %v2383
    %v2385 = vsel %vm2276, %v2384, 0.0
    %2386 = vadd.xlane.f32.xlu0 %v2385
    %v2387 = vpop.xlane.xlu0 %2386
    %v2388 = vmul.f32 %v2387, %v587
    %v2389 = vadd.f32 %v2388, 1e-05
    %v2390 = vrsqrt.pop %v2389
    %v2391 = vmul.f32 %v2383, %v2390
    %v2392 = vmul.f32 %v2391, %v2269
    %v2393 = vadd.f32 %v2392, %v2270
    %v2394 = vpack.c.bf16 %v2393, %v2393
    %v2396 = vsel %vm580, %v2394, 0
    %2398 = vmatprep.subr.bf16.mxu0 0
    %2399 = vmatpush1.bf16.msra.mxu0 0
    %2400 = vmatprep.subr.bf16.mxu0 0
    %2401 = vmatpush1.bf16.msra.mxu0 0
    %2402 = vmatprep.subr.bf16.mxu0 0
    %2403 = vmatpush1.bf16.msra.mxu0 0
    %2404 = vmatprep.subr.bf16.mxu0 0
    %2405 = vmatpush1.bf16.msra.mxu0 0
    %2406 = vmatprep.subr.bf16.mxu0 0
    %2407 = vmatpush1.bf16.msra.mxu0 0
    %2408 = vmatprep.subr.bf16.mxu0 0
    %2409 = vmatpush1.bf16.msra.mxu0 0
    %2410 = vmatprep.subr.bf16.mxu0 0
    %2411 = vmatpush1.bf16.msra.mxu0 %v2317
    %2412 = vmatprep.subr.bf16.mxu0 0
    %2413 = vmatpush1.bf16.msra.mxu0 %v2316
    %2414 = vmatprep.subr.bf16.mxu0 0
    %2415 = vmatpush2.bf16.msra.mxu0 0
    %2416 = vmatprep.subr.bf16.mxu0 0
    %2417 = vmatpush2.bf16.msra.mxu0 0
    %2418 = vmatprep.subr.bf16.mxu0 0
    %2419 = vmatpush2.bf16.msra.mxu0 0
    %2420 = vmatprep.subr.bf16.mxu0 0
    %2421 = vmatpush2.bf16.msra.mxu0 0
    %2422 = vmatprep.subr.bf16.mxu0 0
    %2423 = vmatpush2.bf16.msra.mxu0 0
    %2424 = vmatprep.subr.bf16.mxu0 0
    %2425 = vmatpush2.bf16.msra.mxu0 0
    %2426 = vmatprep.subr.bf16.mxu0 0
    %2427 = vmatpush2.bf16.msra.mxu0 0
    %2428 = vmatprep.subr.bf16.mxu0 0
    %2429 = vmatpush2.bf16.msra.mxu0 0
    %2430 = vmatprep.mubr.bf16.mxu0 0
    %2431 = vmatmul.mubr.bf16.gmra.mxu0 %v2396
    %v2432 = vpop.f32.mrf.mxu0
    %v2433 = vadd.f32 %v2271, %v2432
    %v2434 = vpop.f32.mrf.mxu0
    %v2435 = vpop.f32.mrf.mxu0
    %v2436 = vpop.f32.mrf.mxu0
    %2437 = vdwg.mxu0
    %2438 = vst [vmem:[#allocation2 + $0x1] sm:$0x1] %v2433
    // Predicated region
    $region18: #{vit_forward.1} parent=1 // pred_check
      _
    $region19: #{vit_forward.1} parent=1 // pred_check_branch
      %2440 = sbr.rel (0) target = $region21
    $region20: #{vit_forward.1} parent=1 // pred_region
      %s2442 = ssub.s32 32, 32
      %2443 = vsyncadd [#allocation3], %s2442
      %s2445 = sshll.u32 [#allocation2], 4
      %s2446 = int_to_ptr.vmem [resolvable:$true] %s2445
      %2448 = dma.vmem_to_hbm [thread:$0]  %s2446, 32, %s4, [#allocation3]
    $region21: #{vit_forward.1} parent=1 // pred_fallthru
      _
    // Predicated region
    $region22: #{vit_forward.1} parent=1 // pred_check
      _
    $region23: #{vit_forward.1} parent=1 // pred_check_branch
      %2450 = sbr.rel (0) target = $region25
    $region24: #{vit_forward.1} parent=1 // pred_region
      %2451 = dma.done [#allocation3], 32
    $region25: #{vit_forward.1} parent=1 // pred_fallthru
      _
    %2452 = vsyncpa [#allocation3], 1

</llo_original>
